<compile_context>
chip_gen: v7x
topology: tpu7x:2x2x1
jax: 0.10.0
libtpu: 0.0.40
codegen_flags: <defaults>
</compile_context>

<pallas_src>
import math

import jax
import jax.numpy as jnp
from jax import lax
from jax.experimental import pallas as pl
from jax.experimental.pallas import tpu as pltpu

block_size = 32
n_embd = 128
n_head = 4
head_size = n_embd // n_head          # 32
D = n_head * head_size                # 128
HALF = head_size // 2                 # 16


def mha_kernel(x_ref, w_all_ref, wp_ref, bp_ref, cos_ref, sin_ref, bias_ref, out_ref):
    # x_ref:    (bb, T, C) bf16        w_all_ref: (C, 5*D) bf16     wp_ref: (D, C) bf16
    # bp_ref:   (1, C) f32             cos/sin_ref: (bb*T, D) f32   bias_ref: (bb*T, bb*T) f32
    # out_ref:  (bb, T, C)
    Bb, T, C = x_ref.shape
    M = Bb * T

    x2 = x_ref[...].reshape(M, C)                                  # bf16, pre-cast in wrapper

    # Single wide projection: one MXU fill/stream/drain for q, q_swapped, k, k_swapped, v.
    proj = jnp.dot(x2, w_all_ref[...], preferred_element_type=jnp.float32)   # (M, 5*D) f32

    cosM = cos_ref[...]                                            # (M, D) f32, sign-folded
    sinM = sin_ref[...]

    # Full-width RoPE: pure (M, 128) f32 FMAs on 128-lane-aligned slices, no lane shuffles.
    # Each projection pair is consumed immediately to keep vreg liveness low.
    q_rot = (proj[:, 0 * D:1 * D] * cosM + proj[:, 1 * D:2 * D] * sinM).astype(jnp.bfloat16)
    k_rot = (proj[:, 2 * D:3 * D] * cosM + proj[:, 3 * D:4 * D] * sinM).astype(jnp.bfloat16)
    v = proj[:, 4 * D:5 * D].astype(jnp.bfloat16)

    # Per-head attention with deferred softmax normalization and accumulated output
    # projection (no head concat, no (M, D) bf16 round trip).
    acc = jnp.zeros((M, C), jnp.float32)
    for h in range(n_head):                                        # static, tiny loop
        lo = h * head_size
        qh = q_rot[:, lo:lo + head_size]                           # (M, 32) bf16
        kh = k_rot[:, lo:lo + head_size]
        vh = v[:, lo:lo + head_size]

        # scores: contract last dims directly (no explicit transpose); bias read from ref.
        s = lax.dot_general(qh, kh, (((1,), (1,)), ((), ())),
                            preferred_element_type=jnp.float32) + bias_ref[...]   # (M, M)
        m = jnp.max(s, axis=-1, keepdims=True)
        p = jnp.exp(s - m)                                         # unnormalized, f32
        denom = jnp.sum(p, axis=-1, keepdims=True)                 # (M, 1)

        oh = jnp.dot(p.astype(jnp.bfloat16), vh,
                     preferred_element_type=jnp.float32)           # (M, 32) f32
        oh = oh * pl.reciprocal(denom, approx=True)                # deferred normalization

        # Accumulated output projection: (M, 32) @ (32, C) added into the f32 accumulator.
        acc = acc + jnp.dot(oh.astype(jnp.bfloat16),
                            wp_ref[pl.ds(lo, head_size), :],
                            preferred_element_type=jnp.float32)

    out = acc + bp_ref[...]
    out_ref[...] = out.reshape(Bb, T, C).astype(out_ref.dtype)


def _rope_cos_sin(T):
    freqs = 1.0 / (10000.0 ** (jnp.arange(0, head_size, 2, dtype=jnp.float32) / head_size))
    t = jnp.arange(T, dtype=jnp.float32)
    ang = jnp.outer(t, freqs)                                      # (T, HALF)
    return jnp.cos(ang), jnp.sin(ang)


def _split_perms():
    # Per head: interleaved [r0,i0,r1,i1,...] ->
    #   fwd : [r0,r1,...,i0,i1,...]      (split layout)
    #   swp : [i0,i1,...,r0,r1,...]      (split layout with halves swapped)
    fwd, swp = [], []
    for h in range(n_head):
        base = h * head_size
        evens = [base + 2 * i for i in range(HALF)]
        odds = [base + 2 * i + 1 for i in range(HALF)]
        fwd += evens + odds
        swp += odds + evens
    return jnp.asarray(fwd, jnp.int32), jnp.asarray(swp, jnp.int32)


def mha_forward(x, wq, wk, wv, wp, bp):
    B, T, C = x.shape
    assert C == n_embd and T <= block_size

    # Batch block: target ~128 rows per grid step (fills an MXU tile, amortizes per-step
    # overhead) without growing further (masked-score waste grows as 1 - 1/bb).
    bb = math.gcd(B, max(1, 128 // T))
    if B >= 2 and B // bb < 2:
        # v7x has 2 TensorCores: keep at least 2 "parallel" grid steps.
        bb = math.gcd(B, max(1, bb // 2))
    M = bb * T

    perm, perm_sw = _split_perms()
    scale = head_size ** -0.5
    # One wide (C, 5*D) projection matrix: [Wq_split*scale | Wq_swapped*scale | Wk_split |
    # Wk_swapped | Wv].  Slices land at 128-lane-aligned offsets inside the kernel.
    w_all = jnp.concatenate([
        wq[:, perm] * scale,
        wq[:, perm_sw] * scale,
        wk[:, perm],
        wk[:, perm_sw],
        wv,
    ], axis=1).astype(jnp.bfloat16)                                # (C, 5*D)

    wp_b = wp.astype(jnp.bfloat16)
    bp2 = bp.reshape(1, C).astype(jnp.float32)

    # cos/sin broadcast to the full (M, D) split layout with the RoPE sign pattern folded in.
    cos, sin = _rope_cos_sin(T)                                    # (T, HALF)
    cos_h = jnp.concatenate([cos, cos], axis=1)                    # (T, head_size)
    sin_h = jnp.concatenate([-sin, sin], axis=1)                   # (T, head_size)
    cosM = jnp.tile(jnp.tile(cos_h, (1, n_head)), (bb, 1))         # (M, D)
    sinM = jnp.tile(jnp.tile(sin_h, (1, n_head)), (bb, 1))         # (M, D)

    # (same-batch-block AND causal) additive bias, built once in the wrapper.
    rows = jnp.arange(M, dtype=jnp.int32)[:, None]
    cols = jnp.arange(M, dtype=jnp.int32)[None, :]
    valid = ((rows // T) == (cols // T)) & ((rows % T) >= (cols % T))
    bias = jnp.where(valid, 0.0, -1e30).astype(jnp.float32)        # (M, M)

    x_bf = x.astype(jnp.bfloat16)

    return pl.pallas_call(
        mha_kernel,
        out_shape=jax.ShapeDtypeStruct((B, T, C), x.dtype),
        grid=(B // bb,),
        in_specs=[
            pl.BlockSpec((bb, T, C), lambda b: (b, 0, 0)),
            pl.BlockSpec((C, 5 * D), lambda b: (0, 0)),
            pl.BlockSpec((D, C), lambda b: (0, 0)),
            pl.BlockSpec((1, C), lambda b: (0, 0)),
            pl.BlockSpec((M, D), lambda b: (0, 0)),
            pl.BlockSpec((M, D), lambda b: (0, 0)),
            pl.BlockSpec((M, M), lambda b: (0, 0)),
        ],
        out_specs=pl.BlockSpec((bb, T, C), lambda b: (b, 0, 0)),
        compiler_params=pltpu.CompilerParams(dimension_semantics=("parallel",)),
    )(x_bf, w_all, wp_b, bp2, cosM, sinM, bias)


def mha_reference(x, wq, wk, wv, wp, bp):
    """Pure-JAX (f32) mirror of the PyTorch forward (eval mode) for verification."""
    B, T, C = x.shape

    def heads(w):
        return (x @ w).reshape(B, T, n_head, head_size).transpose(0, 2, 1, 3)

    q, k, v = heads(wq), heads(wk), heads(wv)

    cos, sin = _rope_cos_sin(T)

    def rope(z):
        zr, zi = z[..., 0::2], z[..., 1::2]
        outr = zr * cos - zi * sin
        outi = zr * sin + zi * cos
        return jnp.stack([outr, outi], axis=-1).reshape(z.shape)

    qr, kr = rope(q), rope(k)

    s = (qr @ jnp.swapaxes(kr, -1, -2)) * head_size ** -0.5
    mask = jnp.tril(jnp.ones((T, T), dtype=bool))
    s = jnp.where(mask, s, -jnp.inf)
    w = jax.nn.softmax(s, axis=-1)
    o = (w @ v).transpose(0, 2, 1, 3).reshape(B, T, D)
    return o @ wp + bp.reshape(1, C)


if __name__ == "__main__":
    key = jax.random.PRNGKey(0)
    kx, kq, kk, kv, kp, kb = jax.random.split(key, 6)

    B, T = 8, block_size
    x = jax.random.normal(kx, (B, T, n_embd), dtype=jnp.float32)

    # deterministic synthetic parameters (shapes implied by the module's __init__)
    wq = jax.random.normal(kq, (n_embd, D), dtype=jnp.float32) * 0.02
    wk = jax.random.normal(kk, (n_embd, D), dtype=jnp.float32) * 0.02
    wv = jax.random.normal(kv, (n_embd, D), dtype=jnp.float32) * 0.02
    wp = jax.random.normal(kp, (D, n_embd), dtype=jnp.float32) * 0.02
    bp = jax.random.normal(kb, (n_embd,), dtype=jnp.float32) * 0.02

    out = jax.block_until_ready(mha_forward(x, wq, wk, wv, wp, bp))
    ref = mha_reference(x, wq, wk, wv, wp, bp)

    # bf16 MXU operands + approximate reciprocal -> relaxed tolerance vs f32 reference.
    if not jnp.allclose(out, ref, atol=2e-2, rtol=2e-2):
        err = float(jnp.max(jnp.abs(out - ref)))
        raise AssertionError(f"Pallas MHA output does not match JAX reference (max abs err {err})")

    print("KERNEL_OK")
</pallas_src>

<mosaic_0001>
module attributes {stable_mosaic.version = 11 : i64} {
  func.func @mha_kernel(%arg0: i32, %arg1: memref<4x32x128xbf16, #tpu.memory_space<vmem>>, %arg2: memref<128x640xbf16, #tpu.memory_space<vmem>>, %arg3: memref<128x128xbf16, #tpu.memory_space<vmem>>, %arg4: memref<1x128xf32, #tpu.memory_space<vmem>>, %arg5: memref<128x128xf32, #tpu.memory_space<vmem>>, %arg6: memref<128x128xf32, #tpu.memory_space<vmem>>, %arg7: memref<128x128xf32, #tpu.memory_space<vmem>>, %arg8: memref<4x32x128xf32, #tpu.memory_space<vmem>>) attributes {dimension_semantics = [#tpu.dimension_semantics<parallel>], iteration_bounds = array<i64: 2>, scalar_prefetch = 0 : i64, scratch_operands = 0 : i64, tpu.core_type = #tpu.core_type<tc>, window_params = [{transform_indices = @transform_0, window_bounds = array<i64: 4, 32, 128>}, {pipeline_mode = #tpu.pipeline_mode<synchronous>, transform_indices = @transform_1, window_bounds = array<i64: 128, 640>}, {pipeline_mode = #tpu.pipeline_mode<synchronous>, transform_indices = @transform_2, window_bounds = array<i64: 128, 128>}, {pipeline_mode = #tpu.pipeline_mode<synchronous>, transform_indices = @transform_3, window_bounds = array<i64: 1, 128>}, {pipeline_mode = #tpu.pipeline_mode<synchronous>, transform_indices = @transform_4, window_bounds = array<i64: 128, 128>}, {pipeline_mode = #tpu.pipeline_mode<synchronous>, transform_indices = @transform_5, window_bounds = array<i64: 128, 128>}, {pipeline_mode = #tpu.pipeline_mode<synchronous>, transform_indices = @transform_6, window_bounds = array<i64: 128, 128>}, {transform_indices = @transform_7, window_bounds = array<i64: 4, 32, 128>}]} {
    %c0 = arith.constant 0 : index
    %c0_0 = arith.constant 0 : index
    %c0_1 = arith.constant 0 : index
    %0 = vector.load %arg1[%c0, %c0_0, %c0_1] : memref<4x32x128xbf16, #tpu.memory_space<vmem>>, vector<4x32x128xbf16>
    %1 = vector.shape_cast %0 : vector<4x32x128xbf16> to vector<128x128xbf16>
    %c0_2 = arith.constant 0 : index
    %c0_3 = arith.constant 0 : index
    %2 = vector.load %arg2[%c0_2, %c0_3] : memref<128x640xbf16, #tpu.memory_space<vmem>>, vector<128x640xbf16>
    %cst = arith.constant dense<0.000000e+00> : vector<128x640xf32>
    %3 = tpu.matmul %1, %2, %cst {dimension_numbers = #tpu.dot_dimension_numbers<[1], [0], [0], [1], [0, 0, 1, 1], [], []>} : vector<128x128xbf16>, vector<128x640xbf16>, vector<128x640xf32> -> vector<128x640xf32>
    %c0_4 = arith.constant 0 : index
    %c0_5 = arith.constant 0 : index
    %4 = vector.load %arg5[%c0_4, %c0_5] : memref<128x128xf32, #tpu.memory_space<vmem>>, vector<128x128xf32>
    %c0_6 = arith.constant 0 : index
    %c0_7 = arith.constant 0 : index
    %5 = vector.load %arg6[%c0_6, %c0_7] : memref<128x128xf32, #tpu.memory_space<vmem>>, vector<128x128xf32>
    %6 = vector.extract_strided_slice %3 {offsets = [0, 0], sizes = [128, 128], strides = [1, 1]} : vector<128x640xf32> to vector<128x128xf32>
    %7 = arith.mulf %6, %4 : vector<128x128xf32>
    %8 = vector.extract_strided_slice %3 {offsets = [0, 128], sizes = [128, 128], strides = [1, 1]} : vector<128x640xf32> to vector<128x128xf32>
    %9 = arith.mulf %8, %5 : vector<128x128xf32>
    %10 = arith.addf %7, %9 : vector<128x128xf32>
    %11 = arith.truncf %10 : vector<128x128xf32> to vector<128x128xbf16>
    %12 = vector.extract_strided_slice %3 {offsets = [0, 256], sizes = [128, 128], strides = [1, 1]} : vector<128x640xf32> to vector<128x128xf32>
    %13 = arith.mulf %12, %4 : vector<128x128xf32>
    %14 = vector.extract_strided_slice %3 {offsets = [0, 384], sizes = [128, 128], strides = [1, 1]} : vector<128x640xf32> to vector<128x128xf32>
    %15 = arith.mulf %14, %5 : vector<128x128xf32>
    %16 = arith.addf %13, %15 : vector<128x128xf32>
    %17 = arith.truncf %16 : vector<128x128xf32> to vector<128x128xbf16>
    %18 = vector.extract_strided_slice %3 {offsets = [0, 512], sizes = [128, 128], strides = [1, 1]} : vector<128x640xf32> to vector<128x128xf32>
    %19 = arith.truncf %18 : vector<128x128xf32> to vector<128x128xbf16>
    %cst_8 = arith.constant 0.000000e+00 : f32
    %20 = vector.broadcast %cst_8 : f32 to vector<128x128xf32>
    %21 = vector.extract_strided_slice %11 {offsets = [0, 0], sizes = [128, 32], strides = [1, 1]} : vector<128x128xbf16> to vector<128x32xbf16>
    %22 = vector.extract_strided_slice %17 {offsets = [0, 0], sizes = [128, 32], strides = [1, 1]} : vector<128x128xbf16> to vector<128x32xbf16>
    %23 = vector.extract_strided_slice %19 {offsets = [0, 0], sizes = [128, 32], strides = [1, 1]} : vector<128x128xbf16> to vector<128x32xbf16>
    %cst_9 = arith.constant dense<0.000000e+00> : vector<128x128xf32>
    %24 = tpu.matmul %21, %22, %cst_9 {dimension_numbers = #tpu.dot_dimension_numbers<[1], [1], [0], [0], [0, 0, 1, 0], [], []>} : vector<128x32xbf16>, vector<128x32xbf16>, vector<128x128xf32> -> vector<128x128xf32>
    %c0_10 = arith.constant 0 : index
    %c0_11 = arith.constant 0 : index
    %25 = vector.load %arg7[%c0_10, %c0_11] : memref<128x128xf32, #tpu.memory_space<vmem>>, vector<128x128xf32>
    %26 = arith.addf %24, %25 : vector<128x128xf32>
    %cst_12 = arith.constant dense<0xFF800000> : vector<128xf32>
    %27 = vector.multi_reduction <maximumf>, %26, %cst_12 [1] : vector<128x128xf32> to vector<128xf32>
    %28 = vector.shape_cast %27 : vector<128xf32> to vector<128x1xf32>
    %29 = vector.broadcast %28 : vector<128x1xf32> to vector<128x128xf32>
    %30 = arith.subf %26, %29 : vector<128x128xf32>
    %31 = math.exp %30 : vector<128x128xf32>
    %cst_13 = arith.constant dense<0.000000e+00> : vector<128xf32>
    %32 = vector.multi_reduction <add>, %31, %cst_13 [1] : vector<128x128xf32> to vector<128xf32>
    %33 = vector.shape_cast %32 : vector<128xf32> to vector<128x1xf32>
    %34 = arith.truncf %31 : vector<128x128xf32> to vector<128x128xbf16>
    %cst_14 = arith.constant dense<0.000000e+00> : vector<128x32xf32>
    %35 = tpu.matmul %34, %23, %cst_14 {dimension_numbers = #tpu.dot_dimension_numbers<[1], [0], [0], [1], [0, 0, 1, 1], [], []>} : vector<128x128xbf16>, vector<128x32xbf16>, vector<128x32xf32> -> vector<128x32xf32>
    %36 = tpu.reciprocal %33 {approx = true} : vector<128x1xf32> -> vector<128x1xf32>
    %37 = vector.broadcast %36 : vector<128x1xf32> to vector<128x32xf32>
    %38 = arith.mulf %35, %37 : vector<128x32xf32>
    %39 = arith.truncf %38 : vector<128x32xf32> to vector<128x32xbf16>
    %c0_15 = arith.constant 0 : index
    %c0_16 = arith.constant 0 : index
    %40 = vector.load %arg3[%c0_15, %c0_16] : memref<128x128xbf16, #tpu.memory_space<vmem>>, vector<32x128xbf16>
    %cst_17 = arith.constant dense<0.000000e+00> : vector<128x128xf32>
    %41 = tpu.matmul %39, %40, %cst_17 {dimension_numbers = #tpu.dot_dimension_numbers<[1], [0], [0], [1], [0, 0, 1, 1], [], []>} : vector<128x32xbf16>, vector<32x128xbf16>, vector<128x128xf32> -> vector<128x128xf32>
    %42 = arith.addf %20, %41 : vector<128x128xf32>
    %43 = vector.extract_strided_slice %11 {offsets = [0, 32], sizes = [128, 32], strides = [1, 1]} : vector<128x128xbf16> to vector<128x32xbf16>
    %44 = vector.extract_strided_slice %17 {offsets = [0, 32], sizes = [128, 32], strides = [1, 1]} : vector<128x128xbf16> to vector<128x32xbf16>
    %45 = vector.extract_strided_slice %19 {offsets = [0, 32], sizes = [128, 32], strides = [1, 1]} : vector<128x128xbf16> to vector<128x32xbf16>
    %cst_18 = arith.constant dense<0.000000e+00> : vector<128x128xf32>
    %46 = tpu.matmul %43, %44, %cst_18 {dimension_numbers = #tpu.dot_dimension_numbers<[1], [1], [0], [0], [0, 0, 1, 0], [], []>} : vector<128x32xbf16>, vector<128x32xbf16>, vector<128x128xf32> -> vector<128x128xf32>
    %c0_19 = arith.constant 0 : index
    %c0_20 = arith.constant 0 : index
    %47 = vector.load %arg7[%c0_19, %c0_20] : memref<128x128xf32, #tpu.memory_space<vmem>>, vector<128x128xf32>
    %48 = arith.addf %46, %47 : vector<128x128xf32>
    %cst_21 = arith.constant dense<0xFF800000> : vector<128xf32>
    %49 = vector.multi_reduction <maximumf>, %48, %cst_21 [1] : vector<128x128xf32> to vector<128xf32>
    %50 = vector.shape_cast %49 : vector<128xf32> to vector<128x1xf32>
    %51 = vector.broadcast %50 : vector<128x1xf32> to vector<128x128xf32>
    %52 = arith.subf %48, %51 : vector<128x128xf32>
    %53 = math.exp %52 : vector<128x128xf32>
    %cst_22 = arith.constant dense<0.000000e+00> : vector<128xf32>
    %54 = vector.multi_reduction <add>, %53, %cst_22 [1] : vector<128x128xf32> to vector<128xf32>
    %55 = vector.shape_cast %54 : vector<128xf32> to vector<128x1xf32>
    %56 = arith.truncf %53 : vector<128x128xf32> to vector<128x128xbf16>
    %cst_23 = arith.constant dense<0.000000e+00> : vector<128x32xf32>
    %57 = tpu.matmul %56, %45, %cst_23 {dimension_numbers = #tpu.dot_dimension_numbers<[1], [0], [0], [1], [0, 0, 1, 1], [], []>} : vector<128x128xbf16>, vector<128x32xbf16>, vector<128x32xf32> -> vector<128x32xf32>
    %58 = tpu.reciprocal %55 {approx = true} : vector<128x1xf32> -> vector<128x1xf32>
    %59 = vector.broadcast %58 : vector<128x1xf32> to vector<128x32xf32>
    %60 = arith.mulf %57, %59 : vector<128x32xf32>
    %61 = arith.truncf %60 : vector<128x32xf32> to vector<128x32xbf16>
    %c32 = arith.constant 32 : index
    %c0_24 = arith.constant 0 : index
    %62 = vector.load %arg3[%c32, %c0_24] : memref<128x128xbf16, #tpu.memory_space<vmem>>, vector<32x128xbf16>
    %cst_25 = arith.constant dense<0.000000e+00> : vector<128x128xf32>
    %63 = tpu.matmul %61, %62, %cst_25 {dimension_numbers = #tpu.dot_dimension_numbers<[1], [0], [0], [1], [0, 0, 1, 1], [], []>} : vector<128x32xbf16>, vector<32x128xbf16>, vector<128x128xf32> -> vector<128x128xf32>
    %64 = arith.addf %42, %63 : vector<128x128xf32>
    %65 = vector.extract_strided_slice %11 {offsets = [0, 64], sizes = [128, 32], strides = [1, 1]} : vector<128x128xbf16> to vector<128x32xbf16>
    %66 = vector.extract_strided_slice %17 {offsets = [0, 64], sizes = [128, 32], strides = [1, 1]} : vector<128x128xbf16> to vector<128x32xbf16>
    %67 = vector.extract_strided_slice %19 {offsets = [0, 64], sizes = [128, 32], strides = [1, 1]} : vector<128x128xbf16> to vector<128x32xbf16>
    %cst_26 = arith.constant dense<0.000000e+00> : vector<128x128xf32>
    %68 = tpu.matmul %65, %66, %cst_26 {dimension_numbers = #tpu.dot_dimension_numbers<[1], [1], [0], [0], [0, 0, 1, 0], [], []>} : vector<128x32xbf16>, vector<128x32xbf16>, vector<128x128xf32> -> vector<128x128xf32>
    %c0_27 = arith.constant 0 : index
    %c0_28 = arith.constant 0 : index
    %69 = vector.load %arg7[%c0_27, %c0_28] : memref<128x128xf32, #tpu.memory_space<vmem>>, vector<128x128xf32>
    %70 = arith.addf %68, %69 : vector<128x128xf32>
    %cst_29 = arith.constant dense<0xFF800000> : vector<128xf32>
    %71 = vector.multi_reduction <maximumf>, %70, %cst_29 [1] : vector<128x128xf32> to vector<128xf32>
    %72 = vector.shape_cast %71 : vector<128xf32> to vector<128x1xf32>
    %73 = vector.broadcast %72 : vector<128x1xf32> to vector<128x128xf32>
    %74 = arith.subf %70, %73 : vector<128x128xf32>
    %75 = math.exp %74 : vector<128x128xf32>
    %cst_30 = arith.constant dense<0.000000e+00> : vector<128xf32>
    %76 = vector.multi_reduction <add>, %75, %cst_30 [1] : vector<128x128xf32> to vector<128xf32>
    %77 = vector.shape_cast %76 : vector<128xf32> to vector<128x1xf32>
    %78 = arith.truncf %75 : vector<128x128xf32> to vector<128x128xbf16>
    %cst_31 = arith.constant dense<0.000000e+00> : vector<128x32xf32>
    %79 = tpu.matmul %78, %67, %cst_31 {dimension_numbers = #tpu.dot_dimension_numbers<[1], [0], [0], [1], [0, 0, 1, 1], [], []>} : vector<128x128xbf16>, vector<128x32xbf16>, vector<128x32xf32> -> vector<128x32xf32>
    %80 = tpu.reciprocal %77 {approx = true} : vector<128x1xf32> -> vector<128x1xf32>
    %81 = vector.broadcast %80 : vector<128x1xf32> to vector<128x32xf32>
    %82 = arith.mulf %79, %81 : vector<128x32xf32>
    %83 = arith.truncf %82 : vector<128x32xf32> to vector<128x32xbf16>
    %c64 = arith.constant 64 : index
    %c0_32 = arith.constant 0 : index
    %84 = vector.load %arg3[%c64, %c0_32] : memref<128x128xbf16, #tpu.memory_space<vmem>>, vector<32x128xbf16>
    %cst_33 = arith.constant dense<0.000000e+00> : vector<128x128xf32>
    %85 = tpu.matmul %83, %84, %cst_33 {dimension_numbers = #tpu.dot_dimension_numbers<[1], [0], [0], [1], [0, 0, 1, 1], [], []>} : vector<128x32xbf16>, vector<32x128xbf16>, vector<128x128xf32> -> vector<128x128xf32>
    %86 = arith.addf %64, %85 : vector<128x128xf32>
    %87 = vector.extract_strided_slice %11 {offsets = [0, 96], sizes = [128, 32], strides = [1, 1]} : vector<128x128xbf16> to vector<128x32xbf16>
    %88 = vector.extract_strided_slice %17 {offsets = [0, 96], sizes = [128, 32], strides = [1, 1]} : vector<128x128xbf16> to vector<128x32xbf16>
    %89 = vector.extract_strided_slice %19 {offsets = [0, 96], sizes = [128, 32], strides = [1, 1]} : vector<128x128xbf16> to vector<128x32xbf16>
    %cst_34 = arith.constant dense<0.000000e+00> : vector<128x128xf32>
    %90 = tpu.matmul %87, %88, %cst_34 {dimension_numbers = #tpu.dot_dimension_numbers<[1], [1], [0], [0], [0, 0, 1, 0], [], []>} : vector<128x32xbf16>, vector<128x32xbf16>, vector<128x128xf32> -> vector<128x128xf32>
    %c0_35 = arith.constant 0 : index
    %c0_36 = arith.constant 0 : index
    %91 = vector.load %arg7[%c0_35, %c0_36] : memref<128x128xf32, #tpu.memory_space<vmem>>, vector<128x128xf32>
    %92 = arith.addf %90, %91 : vector<128x128xf32>
    %cst_37 = arith.constant dense<0xFF800000> : vector<128xf32>
    %93 = vector.multi_reduction <maximumf>, %92, %cst_37 [1] : vector<128x128xf32> to vector<128xf32>
    %94 = vector.shape_cast %93 : vector<128xf32> to vector<128x1xf32>
    %95 = vector.broadcast %94 : vector<128x1xf32> to vector<128x128xf32>
    %96 = arith.subf %92, %95 : vector<128x128xf32>
    %97 = math.exp %96 : vector<128x128xf32>
    %cst_38 = arith.constant dense<0.000000e+00> : vector<128xf32>
    %98 = vector.multi_reduction <add>, %97, %cst_38 [1] : vector<128x128xf32> to vector<128xf32>
    %99 = vector.shape_cast %98 : vector<128xf32> to vector<128x1xf32>
    %100 = arith.truncf %97 : vector<128x128xf32> to vector<128x128xbf16>
    %cst_39 = arith.constant dense<0.000000e+00> : vector<128x32xf32>
    %101 = tpu.matmul %100, %89, %cst_39 {dimension_numbers = #tpu.dot_dimension_numbers<[1], [0], [0], [1], [0, 0, 1, 1], [], []>} : vector<128x128xbf16>, vector<128x32xbf16>, vector<128x32xf32> -> vector<128x32xf32>
    %102 = tpu.reciprocal %99 {approx = true} : vector<128x1xf32> -> vector<128x1xf32>
    %103 = vector.broadcast %102 : vector<128x1xf32> to vector<128x32xf32>
    %104 = arith.mulf %101, %103 : vector<128x32xf32>
    %105 = arith.truncf %104 : vector<128x32xf32> to vector<128x32xbf16>
    %c96 = arith.constant 96 : index
    %c0_40 = arith.constant 0 : index
    %106 = vector.load %arg3[%c96, %c0_40] : memref<128x128xbf16, #tpu.memory_space<vmem>>, vector<32x128xbf16>
    %cst_41 = arith.constant dense<0.000000e+00> : vector<128x128xf32>
    %107 = tpu.matmul %105, %106, %cst_41 {dimension_numbers = #tpu.dot_dimension_numbers<[1], [0], [0], [1], [0, 0, 1, 1], [], []>} : vector<128x32xbf16>, vector<32x128xbf16>, vector<128x128xf32> -> vector<128x128xf32>
    %108 = arith.addf %86, %107 : vector<128x128xf32>
    %c0_42 = arith.constant 0 : index
    %c0_43 = arith.constant 0 : index
    %109 = vector.load %arg4[%c0_42, %c0_43] : memref<1x128xf32, #tpu.memory_space<vmem>>, vector<1x128xf32>
    %110 = vector.broadcast %109 : vector<1x128xf32> to vector<128x128xf32>
    %111 = arith.addf %108, %110 : vector<128x128xf32>
    %112 = vector.shape_cast %111 : vector<128x128xf32> to vector<4x32x128xf32>
    %c0_44 = arith.constant 0 : index
    %c0_45 = arith.constant 0 : index
    %c0_46 = arith.constant 0 : index
    %113 = vector.load %arg8[%c0_44, %c0_45, %c0_46] : memref<4x32x128xf32, #tpu.memory_space<vmem>>, vector<4x32x128xf32>
    tpu.vector_store %arg8[%c0_44, %c0_45, %c0_46], %112 {strides = array<i32>} : memref<4x32x128xf32, #tpu.memory_space<vmem>>, vector<4x32x128xf32>,
    return
  }
  func.func @transform_0(%arg0: i32) -> (i32, i32, i32) {
    %c0_i32 = arith.constant 0 : i32
    %c0_i32_0 = arith.constant 0 : i32
    %c0_i32_1 = arith.constant 0 : i32
    return %arg0, %c0_i32, %c0_i32_0 : i32, i32, i32
  }
  func.func @transform_1(%arg0: i32) -> (i32, i32) {
    %c0_i32 = arith.constant 0 : i32
    %c0_i32_0 = arith.constant 0 : i32
    %c0_i32_1 = arith.constant 0 : i32
    return %c0_i32, %c0_i32_0 : i32, i32
  }
  func.func @transform_2(%arg0: i32) -> (i32, i32) {
    %c0_i32 = arith.constant 0 : i32
    %c0_i32_0 = arith.constant 0 : i32
    %c0_i32_1 = arith.constant 0 : i32
    return %c0_i32, %c0_i32_0 : i32, i32
  }
  func.func @transform_3(%arg0: i32) -> (i32, i32) {
    %c0_i32 = arith.constant 0 : i32
    %c0_i32_0 = arith.constant 0 : i32
    %c0_i32_1 = arith.constant 0 : i32
    return %c0_i32, %c0_i32_0 : i32, i32
  }
  func.func @transform_4(%arg0: i32) -> (i32, i32) {
    %c0_i32 = arith.constant 0 : i32
    %c0_i32_0 = arith.constant 0 : i32
    %c0_i32_1 = arith.constant 0 : i32
    return %c0_i32, %c0_i32_0 : i32, i32
  }
  func.func @transform_5(%arg0: i32) -> (i32, i32) {
    %c0_i32 = arith.constant 0 : i32
    %c0_i32_0 = arith.constant 0 : i32
    %c0_i32_1 = arith.constant 0 : i32
    return %c0_i32, %c0_i32_0 : i32, i32
  }
  func.func @transform_6(%arg0: i32) -> (i32, i32) {
    %c0_i32 = arith.constant 0 : i32
    %c0_i32_0 = arith.constant 0 : i32
    %c0_i32_1 = arith.constant 0 : i32
    return %c0_i32, %c0_i32_0 : i32, i32
  }
  func.func @transform_7(%arg0: i32) -> (i32, i32, i32) {
    %c0_i32 = arith.constant 0 : i32
    %c0_i32_0 = arith.constant 0 : i32
    %c0_i32_1 = arith.constant 0 : i32
    return %arg0, %c0_i32, %c0_i32_0 : i32, i32, i32
  }
}

</mosaic_0001>

<llo_original>
// kernel: tpu_custom_call.1
$region0: #{tpu_custom_call.1}
  #allocation0 [shape = 'u32[]', space=smem, size = 0x4, offset = 0x4, fixed_abs, tag = 'smem constant byte address 0x4 - core index']
  #allocation1 [shape = 'u32[144,128]{1,0:T(1,128)}', space=vmem, size = 0x12000, scoped, tag = 'internal scratch']
  %s0 = inlined_call_operand.hbm [shape: bf16[8,32,128], index: 0, kind: input, shape index: {}]
  %s1 = inlined_call_operand.hbm [shape: bf16[128,640], index: 1, kind: input, shape index: {}]
  %s2 = inlined_call_operand.hbm [shape: bf16[128,128], index: 2, kind: input, shape index: {}]
  %s3 = inlined_call_operand.vmem [shape: f32[1,128], index: 3, kind: input, shape index: {}]
  %s4 = inlined_call_operand.hbm [shape: f32[128,128], index: 4, kind: input, shape index: {}]
  %s5 = inlined_call_operand.hbm [shape: f32[128,128], index: 5, kind: input, shape index: {}]
  %s6 = inlined_call_operand.hbm [shape: f32[128,128], index: 6, kind: input, shape index: {}]
  %s7 = inlined_call_operand.hbm [shape: f32[8,32,128], index: 7, kind: output, shape index: {}]
  %s8 = sld [smem:[#allocation0]]
  $region85: #{tpu_custom_call.1} parent=0
    _
  %s10 = ssub.s32 1, %s8
  %s11 = scalar_select 0, %s10, %s8
  $region1: #{tpu_custom_call.1} parent=0
    #allocation2 [shape = 'u8[65536]{0}', space=vmem, size = 0x10000, scoped, tag = 'input window, operand 0']
    #allocation3 [shape = 's32[2]{0}', space=sflag, size = 0x8, scoped, tag = 'scoped memory for tpu_custom_call.1']
    #allocation4 [shape = 's32[2]{0}', space=sflag, size = 0x8, scoped, tag = 'scoped memory for tpu_custom_call.1']
    #allocation5 [shape = 'u8[163840]{0}', space=vmem, size = 0x28000, scoped, tag = 'input window, operand 1, single buffered']
    #allocation6 [shape = 's32[1]{0}', space=sflag, size = 0x4, scoped, tag = 'scoped memory for tpu_custom_call.1']
    #allocation7 [shape = 'u8[32768]{0}', space=vmem, size = 0x8000, scoped, tag = 'input window, operand 2, single buffered']
    #allocation8 [shape = 'u8[65536]{0}', space=vmem, size = 0x10000, scoped, tag = 'input window, operand 4, single buffered']
    #allocation9 [shape = 's32[1]{0}', space=sflag, size = 0x4, scoped, tag = 'scoped memory for tpu_custom_call.1']
    #allocation10 [shape = 'u8[65536]{0}', space=vmem, size = 0x10000, scoped, tag = 'input window, operand 5, single buffered']
    #allocation11 [shape = 'u8[65536]{0}', space=vmem, size = 0x10000, scoped, tag = 'input window, operand 6, single buffered']
    #allocation12 [shape = 's32[1]{0}', space=sflag, size = 0x4, scoped, tag = 'scoped memory for tpu_custom_call.1']
    #allocation13 [shape = 'u8[131072]{0}', space=vmem, size = 0x20000, scoped, tag = 'output window, operand 0']
    %12 = vsyncpa [#allocation3], 0
    %s13 = scalar_lea.sflag [#allocation3], 1
    %14 = vsyncpa %s13, 0
    %15 = vsyncpa [#allocation6], 0
    %16 = vsyncpa [#allocation9], 0
    %17 = vsyncpa [#allocation12], 0
    %18 = vsyncpa [#allocation4], 0
    %s19 = scalar_lea.sflag [#allocation4], 1
    %20 = vsyncpa %s19, 0
    loop: start=0, step=1, limit=4
    $region2: #{tpu_custom_call.1} parent=1 // loop_pre_header
      _
    $region3: #{tpu_custom_call.1} parent=1 // loop_header
      %s22 = sphi 0, %s26
      %p23 = scmp.ge.s32.totalorder %s22, 4
      %s32 = sphi 0, %s34
      %s35 = sphi 0, %s32
      %s36 = sphi 0, %s35
      %s52 = sphi 0, %s36
      %s56 = sphi 0, %s56
      %s58 = sphi 0, %s56
      %s59 = sphi 0, %s58
      %s73 = sphi 0, %s59
      %s77 = sphi 0, %s77
      %s79 = sphi 0, %s77
      %s80 = sphi 0, %s79
      %s94 = sphi 0, %s80
      %s98 = sphi 0, %s98
      %s100 = sphi 0, %s98
      %s101 = sphi 0, %s100
      %s115 = sphi 0, %s101
      %s119 = sphi 0, %s119
      %s121 = sphi 0, %s119
      %s122 = sphi 0, %s121
      %s136 = sphi 0, %s122
      %s140 = sphi 0, %s140
      %s142 = sphi 0, %s140
      %s143 = sphi 0, %s142
      %s157 = sphi 0, %s143
      %s161 = sphi 0, %s161
      %s163 = sphi 0, %s161
      %s164 = sphi 0, %s163
      %s178 = sphi 0, %s164
      %s184 = sphi 0, %s186
      %s187 = sphi 0, %s184
      %s188 = sphi 0, %s187
      %s204 = sphi 0, %s188
    $region4: #{tpu_custom_call.1} parent=1 // loop_header_branch
      %25 = sbr.rel (%p23) target = $region8
    $region5: #{tpu_custom_call.1} parent=1 // loop_body
      %s27 = ssub.s32 %s22, 1
      %s28 = ssub.s32 %s22, 2
      %s29 = sadd.s32 %s22, 1
      %s30 = ssub.s32 %s22, %s29
      %p31 = scmp.eq.s32.totalorder %s30, 0
      %s33 = sadd.s32 %s32, 1
      %s34 = scalar_select %p31, %s32, %s33
      %p37 = pneg %p31
      %p38 = scmp.eq.s32.totalorder %s22, 1
      %p39 = por %p37, %p38
      %p40 = scmp.ne.s32.totalorder %s32, %s35
      %p41 = scmp.eq.s32.totalorder %s22, 0
      %p42 = por %p40, %p41
      %p43 = scmp.ne.s32.totalorder %s32, %s35
      %p44 = scmp.eq.s32.totalorder %s27, 1
      %p45 = por %p43, %p44
      %p46 = scmp.ne.s32.totalorder %s35, %s36
      %p47 = scmp.eq.s32.totalorder %s27, 0
      %p48 = por %p46, %p47
      %p49 = scmp.ne.s32.totalorder %s35, %s36
      %p50 = scmp.eq.s32.totalorder %s28, 1
      %p51 = por %p49, %p50
      %p53 = scmp.ne.s32.totalorder %s36, %s52
      %p54 = scmp.eq.s32.totalorder %s28, 0
      %p55 = por %p53, %p54
      %s57 = sadd.s32 %s56, 1
      %p60 = scmp.eq.s32.totalorder %s22, 1
      %p61 = scmp.ne.s32.totalorder %s56, %s58
      %p62 = scmp.eq.s32.totalorder %s22, 0
      %p63 = por %p61, %p62
      %p64 = scmp.ne.s32.totalorder %s56, %s58
      %p65 = scmp.eq.s32.totalorder %s27, 1
      %p66 = por %p64, %p65
      %p67 = scmp.ne.s32.totalorder %s58, %s59
      %p68 = scmp.eq.s32.totalorder %s27, 0
      %p69 = por %p67, %p68
      %p70 = scmp.ne.s32.totalorder %s58, %s59
      %p71 = scmp.eq.s32.totalorder %s28, 1
      %p72 = por %p70, %p71
      %p74 = scmp.ne.s32.totalorder %s59, %s73
      %p75 = scmp.eq.s32.totalorder %s28, 0
      %p76 = por %p74, %p75
      %s78 = sadd.s32 %s77, 1
      %p81 = scmp.eq.s32.totalorder %s22, 1
      %p82 = scmp.ne.s32.totalorder %s77, %s79
      %p83 = scmp.eq.s32.totalorder %s22, 0
      %p84 = por %p82, %p83
      %p85 = scmp.ne.s32.totalorder %s77, %s79
      %p86 = scmp.eq.s32.totalorder %s27, 1
      %p87 = por %p85, %p86
      %p88 = scmp.ne.s32.totalorder %s79, %s80
      %p89 = scmp.eq.s32.totalorder %s27, 0
      %p90 = por %p88, %p89
      %p91 = scmp.ne.s32.totalorder %s79, %s80
      %p92 = scmp.eq.s32.totalorder %s28, 1
      %p93 = por %p91, %p92
      %p95 = scmp.ne.s32.totalorder %s80, %s94
      %p96 = scmp.eq.s32.totalorder %s28, 0
      %p97 = por %p95, %p96
      %s99 = sadd.s32 %s98, 1
      %p102 = scmp.eq.s32.totalorder %s22, 1
      %p103 = scmp.ne.s32.totalorder %s98, %s100
      %p104 = scmp.eq.s32.totalorder %s22, 0
      %p105 = por %p103, %p104
      %p106 = scmp.ne.s32.totalorder %s98, %s100
      %p107 = scmp.eq.s32.totalorder %s27, 1
      %p108 = por %p106, %p107
      %p109 = scmp.ne.s32.totalorder %s100, %s101
      %p110 = scmp.eq.s32.totalorder %s27, 0
      %p111 = por %p109, %p110
      %p112 = scmp.ne.s32.totalorder %s100, %s101
      %p113 = scmp.eq.s32.totalorder %s28, 1
      %p114 = por %p112, %p113
      %p116 = scmp.ne.s32.totalorder %s101, %s115
      %p117 = scmp.eq.s32.totalorder %s28, 0
      %p118 = por %p116, %p117
      %s120 = sadd.s32 %s119, 1
      %p123 = scmp.eq.s32.totalorder %s22, 1
      %p124 = scmp.ne.s32.totalorder %s119, %s121
      %p125 = scmp.eq.s32.totalorder %s22, 0
      %p126 = por %p124, %p125
      %p127 = scmp.ne.s32.totalorder %s119, %s121
      %p128 = scmp.eq.s32.totalorder %s27, 1
      %p129 = por %p127, %p128
      %p130 = scmp.ne.s32.totalorder %s121, %s122
      %p131 = scmp.eq.s32.totalorder %s27, 0
      %p132 = por %p130, %p131
      %p133 = scmp.ne.s32.totalorder %s121, %s122
      %p134 = scmp.eq.s32.totalorder %s28, 1
      %p135 = por %p133, %p134
      %p137 = scmp.ne.s32.totalorder %s122, %s136
      %p138 = scmp.eq.s32.totalorder %s28, 0
      %p139 = por %p137, %p138
      %s141 = sadd.s32 %s140, 1
      %p144 = scmp.eq.s32.totalorder %s22, 1
      %p145 = scmp.ne.s32.totalorder %s140, %s142
      %p146 = scmp.eq.s32.totalorder %s22, 0
      %p147 = por %p145, %p146
      %p148 = scmp.ne.s32.totalorder %s140, %s142
      %p149 = scmp.eq.s32.totalorder %s27, 1
      %p150 = por %p148, %p149
      %p151 = scmp.ne.s32.totalorder %s142, %s143
      %p152 = scmp.eq.s32.totalorder %s27, 0
      %p153 = por %p151, %p152
      %p154 = scmp.ne.s32.totalorder %s142, %s143
      %p155 = scmp.eq.s32.totalorder %s28, 1
      %p156 = por %p154, %p155
      %p158 = scmp.ne.s32.totalorder %s143, %s157
      %p159 = scmp.eq.s32.totalorder %s28, 0
      %p160 = por %p158, %p159
      %s162 = sadd.s32 %s161, 1
      %p165 = scmp.eq.s32.totalorder %s22, 1
      %p166 = scmp.ne.s32.totalorder %s161, %s163
      %p167 = scmp.eq.s32.totalorder %s22, 0
      %p168 = por %p166, %p167
      %p169 = scmp.ne.s32.totalorder %s161, %s163
      %p170 = scmp.eq.s32.totalorder %s27, 1
      %p171 = por %p169, %p170
      %p172 = scmp.ne.s32.totalorder %s163, %s164
      %p173 = scmp.eq.s32.totalorder %s27, 0
      %p174 = por %p172, %p173
      %p175 = scmp.ne.s32.totalorder %s163, %s164
      %p176 = scmp.eq.s32.totalorder %s28, 1
      %p177 = por %p175, %p176
      %p179 = scmp.ne.s32.totalorder %s164, %s178
      %p180 = scmp.eq.s32.totalorder %s28, 0
      %p181 = por %p179, %p180
      %s182 = ssub.s32 %s22, %s29
      %p183 = scmp.eq.s32.totalorder %s182, 0
      %s185 = sadd.s32 %s184, 1
      %s186 = scalar_select %p183, %s184, %s185
      %p189 = pneg %p183
      %p190 = scmp.eq.s32.totalorder %s22, 1
      %p191 = por %p189, %p190
      %p192 = scmp.ne.s32.totalorder %s184, %s187
      %p193 = scmp.eq.s32.totalorder %s22, 0
      %p194 = por %p192, %p193
      %p195 = scmp.ne.s32.totalorder %s184, %s187
      %p196 = scmp.eq.s32.totalorder %s27, 1
      %p197 = por %p195, %p196
      %p198 = scmp.ne.s32.totalorder %s187, %s188
      %p199 = scmp.eq.s32.totalorder %s27, 0
      %p200 = por %p198, %p199
      %p201 = scmp.ne.s32.totalorder %s187, %s188
      %p202 = scmp.eq.s32.totalorder %s28, 1
      %p203 = por %p201, %p202
      %p205 = scmp.ne.s32.totalorder %s188, %s204
      %p206 = scmp.eq.s32.totalorder %s28, 0
      %p207 = por %p205, %p206
      %p208 = scmp.le.s32.totalorder 1, %s22
      %p209 = scmp.lt.s32.totalorder %s22, 3
      %p210 = pnand %p208, %p209
      %p211 = pneg %p210
      // Predicated region
      $region9: #{tpu_custom_call.1} parent=5 // pred_check
        _
      $region10: #{tpu_custom_call.1} parent=5 // pred_check_branch
        %213 = sbr.rel (%p210) target = $region12
      $region11: #{tpu_custom_call.1} parent=5 // pred_region
        %s214 = ssub.s32 %s22, 1
        // Predicated region
        $region13: #{tpu_custom_call.1} parent=11 // pred_check
          %p215 = pneg %p69
        $region14: #{tpu_custom_call.1} parent=11 // pred_check_branch
          %217 = sbr.rel (%p215) target = $region16
        $region15: #{tpu_custom_call.1} parent=11 // pred_region
          %s219 = ssub.s32 5120, 5120
          %220 = vsyncadd [#allocation6], %s219
          %s221 = sshll.u32 [#allocation5], 4
          %s222 = int_to_ptr.vmem [resolvable:$true] %s221
          %227 = dma.hbm_to_vmem [thread:$0]  %s1, 5120, %s222, [#allocation6], 320, 320, 20
        $region16: #{tpu_custom_call.1} parent=11 // pred_fallthru
          _
        // Predicated region
        $region17: #{tpu_custom_call.1} parent=11 // pred_check
          %p228 = pneg %p90
        $region18: #{tpu_custom_call.1} parent=11 // pred_check_branch
          %230 = sbr.rel (%p228) target = $region20
        $region19: #{tpu_custom_call.1} parent=11 // pred_region
          %s232 = ssub.s32 1024, 1024
          %233 = vsyncadd [#allocation6], %s232
          %s234 = sshll.u32 [#allocation7], 4
          %s235 = int_to_ptr.vmem [resolvable:$true] %s234
          %240 = dma.hbm_to_vmem [thread:$0]  %s2, 1024, %s235, [#allocation6], 64, 64, 4
        $region20: #{tpu_custom_call.1} parent=11 // pred_fallthru
          _
        // Predicated region
        $region21: #{tpu_custom_call.1} parent=11 // pred_check
          %p241 = pneg %p111
        $region22: #{tpu_custom_call.1} parent=11 // pred_check_branch
          %243 = sbr.rel (%p241) target = $region24
        $region23: #{tpu_custom_call.1} parent=11 // pred_region
          _
        $region24: #{tpu_custom_call.1} parent=11 // pred_fallthru
          _
        // Predicated region
        $region25: #{tpu_custom_call.1} parent=11 // pred_check
          %p244 = pneg %p132
        $region26: #{tpu_custom_call.1} parent=11 // pred_check_branch
          %246 = sbr.rel (%p244) target = $region28
        $region27: #{tpu_custom_call.1} parent=11 // pred_region
          %s248 = ssub.s32 2048, 2048
          %249 = vsyncadd [#allocation9], %s248
          %s250 = sshll.u32 [#allocation8], 4
          %s251 = int_to_ptr.vmem [resolvable:$true] %s250
          %256 = dma.hbm_to_vmem [thread:$0]  %s4, 2048, %s251, [#allocation9], 128, 128, 8
        $region28: #{tpu_custom_call.1} parent=11 // pred_fallthru
          _
        // Predicated region
        $region29: #{tpu_custom_call.1} parent=11 // pred_check
          %p257 = pneg %p153
        $region30: #{tpu_custom_call.1} parent=11 // pred_check_branch
          %259 = sbr.rel (%p257) target = $region32
        $region31: #{tpu_custom_call.1} parent=11 // pred_region
          %s261 = ssub.s32 2048, 2048
          %262 = vsyncadd [#allocation9], %s261
          %s263 = sshll.u32 [#allocation10], 4
          %s264 = int_to_ptr.vmem [resolvable:$true] %s263
          %269 = dma.hbm_to_vmem [thread:$0]  %s5, 2048, %s264, [#allocation9], 128, 128, 8
        $region32: #{tpu_custom_call.1} parent=11 // pred_fallthru
          _
        // Predicated region
        $region33: #{tpu_custom_call.1} parent=11 // pred_check
          %p270 = pneg %p174
        $region34: #{tpu_custom_call.1} parent=11 // pred_check_branch
          %272 = sbr.rel (%p270) target = $region36
        $region35: #{tpu_custom_call.1} parent=11 // pred_region
          %s274 = ssub.s32 2048, 2048
          %275 = vsyncadd [#allocation12], %s274
          %s276 = sshll.u32 [#allocation11], 4
          %s277 = int_to_ptr.vmem [resolvable:$true] %s276
          %282 = dma.hbm_to_vmem [thread:$0]  %s6, 2048, %s277, [#allocation12], 128, 128, 8
        $region36: #{tpu_custom_call.1} parent=11 // pred_fallthru
          _
      $region12: #{tpu_custom_call.1} parent=5 // pred_fallthru
        _
      %p283 = scmp.lt.s32.totalorder %s22, 2
      // Predicated region
      $region37: #{tpu_custom_call.1} parent=5 // pred_check
        %p284 = pneg %p283
      $region38: #{tpu_custom_call.1} parent=5 // pred_check_branch
        %286 = sbr.rel (%p284) target = $region40
      $region39: #{tpu_custom_call.1} parent=5 // pred_region
        // Predicated region
        $region41: #{tpu_custom_call.1} parent=39 // pred_check
          %p287 = pneg %p42
        $region42: #{tpu_custom_call.1} parent=39 // pred_check_branch
          %289 = sbr.rel (%p287) target = $region44
        $region43: #{tpu_custom_call.1} parent=39 // pred_region
          %s290 = sand.u32 %s32, 1
          %s291 = scalar_lea.sflag [#allocation3], %s290
          %s292 = sand.u32 %s32, 1
          %s293 = smul.addr %s292, 64
          %s294 = scalar_lea.vmem [#allocation2], %s293
          %s295 = smul.u32 4, %s22
          %s297 = ssub.s32 1024, 1024
          %298 = vsyncadd %s291, %s297
          %s299 = smul.addr %s295, 4
          %s300 = smul.addr %s299, 64
          %s301 = scalar_lea.hbm %s0, %s300
          %s302 = sshll.u32 %s294, 4
          %s303 = int_to_ptr.vmem [resolvable:$true] %s302
          %308 = dma.hbm_to_vmem [thread:$0]  %s301, 1024, %s303, %s291, 64, 64, 4
        $region44: #{tpu_custom_call.1} parent=39 // pred_fallthru
          _
      $region40: #{tpu_custom_call.1} parent=5 // pred_fallthru
        _
      %p309 = scmp.le.s32.totalorder 1, %s22
      %p310 = scmp.lt.s32.totalorder %s22, 3
      %p311 = pnand %p309, %p310
      %p312 = pneg %p311
      // Predicated region
      $region45: #{tpu_custom_call.1} parent=5 // pred_check
        _
      $region46: #{tpu_custom_call.1} parent=5 // pred_check_branch
        %314 = sbr.rel (%p311) target = $region48
      $region47: #{tpu_custom_call.1} parent=5 // pred_region
        %s315 = ssub.s32 %s22, 1
        %s316 = sand.u32 %s35, 1
        %s317 = scalar_lea.sflag [#allocation3], %s316
        %s318 = sand.u32 %s35, 1
        %s319 = smul.addr %s318, 64
        %s320 = scalar_lea.vmem [#allocation2], %s319
        // Predicated region
        $region49: #{tpu_custom_call.1} parent=47 // pred_check
          %p321 = pneg %p48
        $region50: #{tpu_custom_call.1} parent=47 // pred_check_branch
          %323 = sbr.rel (%p321) target = $region52
        $region51: #{tpu_custom_call.1} parent=47 // pred_region
          %324 = dma.done %s317, 1024
        $region52: #{tpu_custom_call.1} parent=47 // pred_fallthru
          _
        // Predicated region
        $region53: #{tpu_custom_call.1} parent=47 // pred_check
          %p325 = pneg %p69
        $region54: #{tpu_custom_call.1} parent=47 // pred_check_branch
          %327 = sbr.rel (%p325) target = $region56
        $region55: #{tpu_custom_call.1} parent=47 // pred_region
          %328 = dma.done [#allocation6], 5120
        $region56: #{tpu_custom_call.1} parent=47 // pred_fallthru
          _
        // Predicated region
        $region57: #{tpu_custom_call.1} parent=47 // pred_check
          %p329 = pneg %p90
        $region58: #{tpu_custom_call.1} parent=47 // pred_check_branch
          %331 = sbr.rel (%p329) target = $region60
        $region59: #{tpu_custom_call.1} parent=47 // pred_region
          %332 = dma.done [#allocation6], 1024
        $region60: #{tpu_custom_call.1} parent=47 // pred_fallthru
          _
        // Predicated region
        $region61: #{tpu_custom_call.1} parent=47 // pred_check
          %p333 = pneg %p132
        $region62: #{tpu_custom_call.1} parent=47 // pred_check_branch
          %335 = sbr.rel (%p333) target = $region64
        $region63: #{tpu_custom_call.1} parent=47 // pred_region
          %336 = dma.done [#allocation9], 2048
        $region64: #{tpu_custom_call.1} parent=47 // pred_fallthru
          _
        // Predicated region
        $region65: #{tpu_custom_call.1} parent=47 // pred_check
          %p337 = pneg %p153
        $region66: #{tpu_custom_call.1} parent=47 // pred_check_branch
          %339 = sbr.rel (%p337) target = $region68
        $region67: #{tpu_custom_call.1} parent=47 // pred_region
          %340 = dma.done [#allocation9], 2048
        $region68: #{tpu_custom_call.1} parent=47 // pred_fallthru
          _
        // Predicated region
        $region69: #{tpu_custom_call.1} parent=47 // pred_check
          %p341 = pneg %p174
        $region70: #{tpu_custom_call.1} parent=47 // pred_check_branch
          %343 = sbr.rel (%p341) target = $region72
        $region71: #{tpu_custom_call.1} parent=47 // pred_region
          %344 = dma.done [#allocation12], 2048
        $region72: #{tpu_custom_call.1} parent=47 // pred_fallthru
          _
        %s345 = sand.u32 %s35, 1
        %s346 = scalar_lea.sflag [#allocation3], %s345
        %s347 = sand.u32 %s35, 1
        %s348 = smul.addr %s347, 64
        %s349 = scalar_lea.vmem [#allocation2], %s348
        %p350 = pneg %p48
        %p351 = pneg %p45
        %p352 = pneg %p69
        %p353 = pneg %p66
        %p354 = pneg %p90
        %p355 = pneg %p87
        %p356 = pneg %p111
        %p357 = pneg %p108
        %p358 = pneg %p132
        %p359 = pneg %p129
        %p360 = pneg %p153
        %p361 = pneg %p150
        %p362 = pneg %p174
        %p363 = pneg %p171
        %p364 = pneg %p200
        %p365 = pneg %p197
        %s366 = sand.u32 %s187, 1
        %s367 = scalar_lea.sflag [#allocation4], %s366
        %s368 = sand.u32 %s187, 1
        %s369 = smul.addr %s368, 128
        %s370 = scalar_lea.vmem [#allocation13], %s369
        %s371 = smul.u32 4, %s27
        %s372 = smul.u32 4, %s27
        %v374 = vld [vmem:[%s320] sm:$0xf]
        %v375 = vld [vmem:[%s320 + $0x4] sm:$0xf]
        %v376 = vld [vmem:[%s320 + $0x8] sm:$0xf]
        %v377 = vld [vmem:[%s320 + $0xc] sm:$0xf]
        %v378 = vld [vmem:[%s320 + $0x10] sm:$0xf]
        %v379 = vld [vmem:[%s320 + $0x14] sm:$0xf]
        %v380 = vld [vmem:[%s320 + $0x18] sm:$0xf]
        %v381 = vld [vmem:[%s320 + $0x1c] sm:$0xf]
        %v382 = vld [vmem:[%s320 + $0x20] sm:$0xf]
        %v383 = vld [vmem:[%s320 + $0x24] sm:$0xf]
        %v384 = vld [vmem:[%s320 + $0x28] sm:$0xf]
        %v385 = vld [vmem:[%s320 + $0x2c] sm:$0xf]
        %v386 = vld [vmem:[%s320 + $0x30] sm:$0xf]
        %v387 = vld [vmem:[%s320 + $0x34] sm:$0xf]
        %v388 = vld [vmem:[%s320 + $0x38] sm:$0xf]
        %v389 = vld [vmem:[%s320 + $0x3c] sm:$0xf]
        %v390 = vld [vmem:[#allocation5] sm:$0xff]
        %v391 = vld [vmem:[#allocation5 + $0x8] sm:$0xff]
        %v392 = vld [vmem:[#allocation5 + $0x10] sm:$0xf]
        %v393 = vld [vmem:[#allocation5 + $0x14] sm:$0xff]
        %v394 = vld [vmem:[#allocation5 + $0x1c] sm:$0xff]
        %v395 = vld [vmem:[#allocation5 + $0x24] sm:$0xf]
        %v396 = vld [vmem:[#allocation5 + $0x28] sm:$0xff]
        %v397 = vld [vmem:[#allocation5 + $0x30] sm:$0xff]
        %v398 = vld [vmem:[#allocation5 + $0x38] sm:$0xf]
        %v399 = vld [vmem:[#allocation5 + $0x3c] sm:$0xff]
        %v400 = vld [vmem:[#allocation5 + $0x44] sm:$0xff]
        %v401 = vld [vmem:[#allocation5 + $0x4c] sm:$0xf]
        %v402 = vld [vmem:[#allocation5 + $0x50] sm:$0xff]
        %v403 = vld [vmem:[#allocation5 + $0x58] sm:$0xff]
        %v404 = vld [vmem:[#allocation5 + $0x60] sm:$0xf]
        %v405 = vld [vmem:[#allocation5 + $0x64] sm:$0xff]
        %v406 = vld [vmem:[#allocation5 + $0x6c] sm:$0xff]
        %v407 = vld [vmem:[#allocation5 + $0x74] sm:$0xf]
        %v408 = vld [vmem:[#allocation5 + $0x78] sm:$0xff]
        %v409 = vld [vmem:[#allocation5 + $0x80] sm:$0xff]
        %v410 = vld [vmem:[#allocation5 + $0x88] sm:$0xf]
        %v411 = vld [vmem:[#allocation5 + $0x8c] sm:$0xff]
        %v412 = vld [vmem:[#allocation5 + $0x94] sm:$0xff]
        %v413 = vld [vmem:[#allocation5 + $0x9c] sm:$0xf]
        %v414 = vld [vmem:[#allocation5 + $0xa0] sm:$0xff]
        %v415 = vld [vmem:[#allocation5 + $0xa8] sm:$0xff]
        %v416 = vld [vmem:[#allocation5 + $0xb0] sm:$0xf]
        %v417 = vld [vmem:[#allocation5 + $0xb4] sm:$0xff]
        %v418 = vld [vmem:[#allocation5 + $0xbc] sm:$0xff]
        %v419 = vld [vmem:[#allocation5 + $0xc4] sm:$0xf]
        %v420 = vld [vmem:[#allocation5 + $0xc8] sm:$0xff]
        %v421 = vld [vmem:[#allocation5 + $0xd0] sm:$0xff]
        %v422 = vld [vmem:[#allocation5 + $0xd8] sm:$0xf]
        %v423 = vld [vmem:[#allocation5 + $0xdc] sm:$0xff]
        %v424 = vld [vmem:[#allocation5 + $0xe4] sm:$0xff]
        %v425 = vld [vmem:[#allocation5 + $0xec] sm:$0xf]
        %v426 = vld [vmem:[#allocation5 + $0xf0] sm:$0xff]
        %v427 = vld [vmem:[#allocation5 + $0xf8] sm:$0xff]
        %v428 = vld [vmem:[#allocation5 + $0x100] sm:$0xf]
        %v429 = vld [vmem:[#allocation5 + $0x104] sm:$0xff]
        %v430 = vld [vmem:[#allocation5 + $0x10c] sm:$0xff]
        %v431 = vld [vmem:[#allocation5 + $0x114] sm:$0xf]
        %v432 = vld [vmem:[#allocation5 + $0x118] sm:$0xff]
        %v433 = vld [vmem:[#allocation5 + $0x120] sm:$0xff]
        %v434 = vld [vmem:[#allocation5 + $0x128] sm:$0xf]
        %v435 = vld [vmem:[#allocation5 + $0x12c] sm:$0xff]
        %v436 = vld [vmem:[#allocation5 + $0x134] sm:$0xff]
        %v437 = vld [vmem:[#allocation5 + $0x13c] sm:$0xf]
        %v454 = vunpack.c.l.b16 %v374
        %v455 = vunpack.c.l.b16 %v375
        %v456 = vunpack.c.l.b16 %v376
        %v457 = vunpack.c.l.b16 %v377
        %v458 = vunpack.c.l.b16 %v378
        %v459 = vunpack.c.l.b16 %v379
        %v460 = vunpack.c.l.b16 %v380
        %v461 = vunpack.c.l.b16 %v381
        %v462 = vunpack.c.l.b16 %v382
        %v463 = vunpack.c.l.b16 %v383
        %v464 = vunpack.c.l.b16 %v384
        %v465 = vunpack.c.l.b16 %v385
        %v466 = vunpack.c.l.b16 %v386
        %v467 = vunpack.c.l.b16 %v387
        %v468 = vunpack.c.l.b16 %v388
        %v469 = vunpack.c.l.b16 %v389
        %v470 = vpack.c.b16 %v455, %v454
        %v471 = vpack.c.b16 %v457, %v456
        %v472 = vpack.c.b16 %v459, %v458
        %v473 = vpack.c.b16 %v461, %v460
        %v474 = vpack.c.b16 %v463, %v462
        %v475 = vpack.c.b16 %v465, %v464
        %v476 = vpack.c.b16 %v467, %v466
        %v477 = vpack.c.b16 %v469, %v468
        %v534 = vunpack.c.l.b16 %v390
        %v535 = vunpack.c.h.b16 %v390
        %v536 = vunpack.c.l.b16 %v391
        %v537 = vunpack.c.h.b16 %v391
        %v538 = vunpack.c.l.b16 %v392
        %v539 = vunpack.c.l.b16 %v393
        %v540 = vunpack.c.h.b16 %v393
        %v541 = vunpack.c.l.b16 %v394
        %v542 = vunpack.c.h.b16 %v394
        %v543 = vunpack.c.l.b16 %v395
        %v544 = vunpack.c.l.b16 %v396
        %v545 = vunpack.c.h.b16 %v396
        %v546 = vunpack.c.l.b16 %v397
        %v547 = vunpack.c.h.b16 %v397
        %v548 = vunpack.c.l.b16 %v398
        %v549 = vunpack.c.l.b16 %v399
        %v550 = vunpack.c.h.b16 %v399
        %v551 = vunpack.c.l.b16 %v400
        %v552 = vunpack.c.h.b16 %v400
        %v553 = vunpack.c.l.b16 %v401
        %v554 = vunpack.c.l.b16 %v402
        %v555 = vunpack.c.h.b16 %v402
        %v556 = vunpack.c.l.b16 %v403
        %v557 = vunpack.c.h.b16 %v403
        %v558 = vunpack.c.l.b16 %v404
        %v559 = vunpack.c.l.b16 %v405
        %v560 = vunpack.c.h.b16 %v405
        %v561 = vunpack.c.l.b16 %v406
        %v562 = vunpack.c.h.b16 %v406
        %v563 = vunpack.c.l.b16 %v407
        %v564 = vunpack.c.l.b16 %v408
        %v565 = vunpack.c.h.b16 %v408
        %v566 = vunpack.c.l.b16 %v409
        %v567 = vunpack.c.h.b16 %v409
        %v568 = vunpack.c.l.b16 %v410
        %v569 = vunpack.c.l.b16 %v411
        %v570 = vunpack.c.h.b16 %v411
        %v571 = vunpack.c.l.b16 %v412
        %v572 = vunpack.c.h.b16 %v412
        %v573 = vunpack.c.l.b16 %v413
        %v574 = vunpack.c.l.b16 %v414
        %v575 = vunpack.c.h.b16 %v414
        %v576 = vunpack.c.l.b16 %v415
        %v577 = vunpack.c.h.b16 %v415
        %v578 = vunpack.c.l.b16 %v416
        %v579 = vunpack.c.l.b16 %v417
        %v580 = vunpack.c.h.b16 %v417
        %v581 = vunpack.c.l.b16 %v418
        %v582 = vunpack.c.h.b16 %v418
        %v583 = vunpack.c.l.b16 %v419
        %v584 = vunpack.c.l.b16 %v420
        %v585 = vunpack.c.h.b16 %v420
        %v586 = vunpack.c.l.b16 %v421
        %v587 = vunpack.c.h.b16 %v421
        %v588 = vunpack.c.l.b16 %v422
        %v589 = vunpack.c.l.b16 %v423
        %v590 = vunpack.c.h.b16 %v423
        %v591 = vunpack.c.l.b16 %v424
        %v592 = vunpack.c.h.b16 %v424
        %v593 = vunpack.c.l.b16 %v425
        %v594 = vunpack.c.l.b16 %v426
        %v595 = vunpack.c.h.b16 %v426
        %v596 = vunpack.c.l.b16 %v427
        %v597 = vunpack.c.h.b16 %v427
        %v598 = vunpack.c.l.b16 %v428
        %v599 = vunpack.c.l.b16 %v429
        %v600 = vunpack.c.h.b16 %v429
        %v601 = vunpack.c.l.b16 %v430
        %v602 = vunpack.c.h.b16 %v430
        %v603 = vunpack.c.l.b16 %v431
        %v604 = vunpack.c.l.b16 %v432
        %v605 = vunpack.c.h.b16 %v432
        %v606 = vunpack.c.l.b16 %v433
        %v607 = vunpack.c.h.b16 %v433
        %v608 = vunpack.c.l.b16 %v434
        %v609 = vunpack.c.l.b16 %v435
        %v610 = vunpack.c.h.b16 %v435
        %v611 = vunpack.c.l.b16 %v436
        %v612 = vunpack.c.h.b16 %v436
        %v613 = vunpack.c.l.b16 %v437
        %v614 = vpack.c.b16 %v539, %v534
        %v615 = vpack.c.b16 %v540, %v535
        %v616 = vpack.c.b16 %v541, %v536
        %v617 = vpack.c.b16 %v542, %v537
        %v618 = vpack.c.b16 %v543, %v538
        %v619 = vpack.c.b16 %v549, %v544
        %v620 = vpack.c.b16 %v550, %v545
        %v621 = vpack.c.b16 %v551, %v546
        %v622 = vpack.c.b16 %v552, %v547
        %v623 = vpack.c.b16 %v553, %v548
        %v624 = vpack.c.b16 %v559, %v554
        %v625 = vpack.c.b16 %v560, %v555
        %v626 = vpack.c.b16 %v561, %v556
        %v627 = vpack.c.b16 %v562, %v557
        %v628 = vpack.c.b16 %v563, %v558
        %v629 = vpack.c.b16 %v569, %v564
        %v630 = vpack.c.b16 %v570, %v565
        %v631 = vpack.c.b16 %v571, %v566
        %v632 = vpack.c.b16 %v572, %v567
        %v633 = vpack.c.b16 %v573, %v568
        %v634 = vpack.c.b16 %v579, %v574
        %v635 = vpack.c.b16 %v580, %v575
        %v636 = vpack.c.b16 %v581, %v576
        %v637 = vpack.c.b16 %v582, %v577
        %v638 = vpack.c.b16 %v583, %v578
        %v639 = vpack.c.b16 %v589, %v584
        %v640 = vpack.c.b16 %v590, %v585
        %v641 = vpack.c.b16 %v591, %v586
        %v642 = vpack.c.b16 %v592, %v587
        %v643 = vpack.c.b16 %v593, %v588
        %v644 = vpack.c.b16 %v599, %v594
        %v645 = vpack.c.b16 %v600, %v595
        %v646 = vpack.c.b16 %v601, %v596
        %v647 = vpack.c.b16 %v602, %v597
        %v648 = vpack.c.b16 %v603, %v598
        %v649 = vpack.c.b16 %v609, %v604
        %v650 = vpack.c.b16 %v610, %v605
        %v651 = vpack.c.b16 %v611, %v606
        %v652 = vpack.c.b16 %v612, %v607
        %v653 = vpack.c.b16 %v613, %v608
        %694 = vmatprep.subr.bf16.mxu0 %v615
        %695 = vmatpush1.bf16.msra.mxu0 %v614
        %696 = vmatprep.subr.bf16.mxu0 %v620
        %697 = vmatpush1.bf16.msra.mxu0 %v619
        %698 = vmatprep.subr.bf16.mxu0 %v625
        %699 = vmatpush1.bf16.msra.mxu0 %v624
        %700 = vmatprep.subr.bf16.mxu0 %v630
        %701 = vmatpush1.bf16.msra.mxu0 %v629
        %702 = vmatprep.subr.bf16.mxu0 %v635
        %703 = vmatpush1.bf16.msra.mxu0 %v634
        %704 = vmatprep.subr.bf16.mxu0 %v640
        %705 = vmatpush1.bf16.msra.mxu0 %v639
        %706 = vmatprep.subr.bf16.mxu0 %v645
        %707 = vmatpush1.bf16.msra.mxu0 %v644
        %708 = vmatprep.subr.bf16.mxu0 %v650
        %709 = vmatpush1.bf16.msra.mxu0 %v649
        %710 = vmatprep.subr.bf16.mxu0 0
        %711 = vmatpush1.bf16.msra.mxu0 0
        %712 = vmatprep.subr.bf16.mxu0 0
        %713 = vmatpush1.bf16.msra.mxu0 0
        %714 = vmatprep.subr.bf16.mxu0 0
        %715 = vmatpush1.bf16.msra.mxu0 0
        %716 = vmatprep.subr.bf16.mxu0 0
        %717 = vmatpush1.bf16.msra.mxu0 0
        %718 = vmatprep.subr.bf16.mxu0 0
        %719 = vmatpush1.bf16.msra.mxu0 0
        %720 = vmatprep.subr.bf16.mxu0 0
        %721 = vmatpush1.bf16.msra.mxu0 0
        %722 = vmatprep.subr.bf16.mxu0 0
        %723 = vmatpush1.bf16.msra.mxu0 0
        %724 = vmatprep.subr.bf16.mxu0 0
        %725 = vmatpush1.bf16.msra.mxu0 0
        %726 = vmatprep.mubr.bf16.mxu0 0
        %727 = vmatmul.mubr.bf16.gmra.mrb[0].mxu0 %v470
        %v728 = vpop.f32.mrb[0].mxu0
        %v729 = vadd.f32 0.0, %v728
        %v730 = vpop.f32.mrb[0].mxu0
        %v731 = vadd.f32 0.0, %v730
        %v732 = vpop.f32.mrb[0].mxu0
        %v733 = vadd.f32 0.0, %v732
        %v734 = vpop.f32.mrb[0].mxu0
        %v735 = vadd.f32 0.0, %v734
        %736 = vmatprep.mubr.bf16.mxu0 0
        %737 = vmatmul.mubr.bf16.gmra.mrb[0].mxu0 %v471
        %v738 = vpop.f32.mrb[0].mxu0
        %v739 = vadd.f32 0.0, %v738
        %v740 = vpop.f32.mrb[0].mxu0
        %v741 = vadd.f32 0.0, %v740
        %v742 = vpop.f32.mrb[0].mxu0
        %v743 = vadd.f32 0.0, %v742
        %v744 = vpop.f32.mrb[0].mxu0
        %v745 = vadd.f32 0.0, %v744
        %746 = vmatprep.mubr.bf16.mxu0 0
        %747 = vmatmul.mubr.bf16.gmra.mrb[0].mxu0 %v472
        %v748 = vpop.f32.mrb[0].mxu0
        %v749 = vadd.f32 0.0, %v748
        %v750 = vpop.f32.mrb[0].mxu0
        %v751 = vadd.f32 0.0, %v750
        %v752 = vpop.f32.mrb[0].mxu0
        %v753 = vadd.f32 0.0, %v752
        %v754 = vpop.f32.mrb[0].mxu0
        %v755 = vadd.f32 0.0, %v754
        %756 = vmatprep.mubr.bf16.mxu0 0
        %757 = vmatmul.mubr.bf16.gmra.mrb[0].mxu0 %v473
        %v758 = vpop.f32.mrb[0].mxu0
        %v759 = vadd.f32 0.0, %v758
        %v760 = vpop.f32.mrb[0].mxu0
        %v761 = vadd.f32 0.0, %v760
        %v762 = vpop.f32.mrb[0].mxu0
        %v763 = vadd.f32 0.0, %v762
        %v764 = vpop.f32.mrb[0].mxu0
        %v765 = vadd.f32 0.0, %v764
        %766 = vmatprep.mubr.bf16.mxu0 0
        %767 = vmatmul.mubr.bf16.gmra.mrb[0].mxu0 %v474
        %v768 = vpop.f32.mrb[0].mxu0
        %v769 = vadd.f32 0.0, %v768
        %v770 = vpop.f32.mrb[0].mxu0
        %v771 = vadd.f32 0.0, %v770
        %v772 = vpop.f32.mrb[0].mxu0
        %v773 = vadd.f32 0.0, %v772
        %v774 = vpop.f32.mrb[0].mxu0
        %v775 = vadd.f32 0.0, %v774
        %776 = vmatprep.mubr.bf16.mxu0 0
        %777 = vmatmul.mubr.bf16.gmra.mrb[0].mxu0 %v475
        %v778 = vpop.f32.mrb[0].mxu0
        %v779 = vadd.f32 0.0, %v778
        %v780 = vpop.f32.mrb[0].mxu0
        %v781 = vadd.f32 0.0, %v780
        %v782 = vpop.f32.mrb[0].mxu0
        %v783 = vadd.f32 0.0, %v782
        %v784 = vpop.f32.mrb[0].mxu0
        %v785 = vadd.f32 0.0, %v784
        %786 = vmatprep.mubr.bf16.mxu0 0
        %787 = vmatmul.mubr.bf16.gmra.mrb[0].mxu0 %v476
        %v788 = vpop.f32.mrb[0].mxu0
        %v789 = vadd.f32 0.0, %v788
        %v790 = vpop.f32.mrb[0].mxu0
        %v791 = vadd.f32 0.0, %v790
        %v792 = vpop.f32.mrb[0].mxu0
        %v793 = vadd.f32 0.0, %v792
        %v794 = vpop.f32.mrb[0].mxu0
        %v795 = vadd.f32 0.0, %v794
        %796 = vmatprep.mubr.bf16.mxu0 0
        %797 = vmatmul.mubr.bf16.gmra.mrb[0].mxu0 %v477
        %v798 = vpop.f32.mrb[0].mxu0
        %v799 = vadd.f32 0.0, %v798
        %v800 = vpop.f32.mrb[0].mxu0
        %v801 = vadd.f32 0.0, %v800
        %v802 = vpop.f32.mrb[0].mxu0
        %v803 = vadd.f32 0.0, %v802
        %v804 = vpop.f32.mrb[0].mxu0
        %v805 = vadd.f32 0.0, %v804
        %806 = vdwg.mxu0
        %807 = vmatprep.subr.bf16.mxu0 %v617
        %808 = vmatpush1.bf16.msra.mxu0 %v616
        %809 = vmatprep.subr.bf16.mxu0 %v622
        %810 = vmatpush1.bf16.msra.mxu0 %v621
        %811 = vmatprep.subr.bf16.mxu0 %v627
        %812 = vmatpush1.bf16.msra.mxu0 %v626
        %813 = vmatprep.subr.bf16.mxu0 %v632
        %814 = vmatpush1.bf16.msra.mxu0 %v631
        %815 = vmatprep.subr.bf16.mxu0 %v637
        %816 = vmatpush1.bf16.msra.mxu0 %v636
        %817 = vmatprep.subr.bf16.mxu0 %v642
        %818 = vmatpush1.bf16.msra.mxu0 %v641
        %819 = vmatprep.subr.bf16.mxu0 %v647
        %820 = vmatpush1.bf16.msra.mxu0 %v646
        %821 = vmatprep.subr.bf16.mxu0 %v652
        %822 = vmatpush1.bf16.msra.mxu0 %v651
        %823 = vmatprep.subr.bf16.mxu0 0
        %824 = vmatpush1.bf16.msra.mxu0 0
        %825 = vmatprep.subr.bf16.mxu0 0
        %826 = vmatpush1.bf16.msra.mxu0 0
        %827 = vmatprep.subr.bf16.mxu0 0
        %828 = vmatpush1.bf16.msra.mxu0 0
        %829 = vmatprep.subr.bf16.mxu0 0
        %830 = vmatpush1.bf16.msra.mxu0 0
        %831 = vmatprep.subr.bf16.mxu0 0
        %832 = vmatpush1.bf16.msra.mxu0 0
        %833 = vmatprep.subr.bf16.mxu0 0
        %834 = vmatpush1.bf16.msra.mxu0 0
        %835 = vmatprep.subr.bf16.mxu0 0
        %836 = vmatpush1.bf16.msra.mxu0 0
        %837 = vmatprep.subr.bf16.mxu0 0
        %838 = vmatpush1.bf16.msra.mxu0 0
        %839 = vmatprep.mubr.bf16.mxu0 0
        %840 = vmatmul.mubr.bf16.gmra.mrb[0].mxu0 %v470
        %v841 = vpop.f32.mrb[0].mxu0
        %v842 = vadd.f32 0.0, %v841
        %v843 = vpop.f32.mrb[0].mxu0
        %v844 = vadd.f32 0.0, %v843
        %v845 = vpop.f32.mrb[0].mxu0
        %v846 = vadd.f32 0.0, %v845
        %v847 = vpop.f32.mrb[0].mxu0
        %v848 = vadd.f32 0.0, %v847
        %849 = vmatprep.mubr.bf16.mxu0 0
        %850 = vmatmul.mubr.bf16.gmra.mrb[0].mxu0 %v471
        %v851 = vpop.f32.mrb[0].mxu0
        %v852 = vadd.f32 0.0, %v851
        %v853 = vpop.f32.mrb[0].mxu0
        %v854 = vadd.f32 0.0, %v853
        %v855 = vpop.f32.mrb[0].mxu0
        %v856 = vadd.f32 0.0, %v855
        %v857 = vpop.f32.mrb[0].mxu0
        %v858 = vadd.f32 0.0, %v857
        %859 = vmatprep.mubr.bf16.mxu0 0
        %860 = vmatmul.mubr.bf16.gmra.mrb[0].mxu0 %v472
        %v861 = vpop.f32.mrb[0].mxu0
        %v862 = vadd.f32 0.0, %v861
        %v863 = vpop.f32.mrb[0].mxu0
        %v864 = vadd.f32 0.0, %v863
        %v865 = vpop.f32.mrb[0].mxu0
        %v866 = vadd.f32 0.0, %v865
        %v867 = vpop.f32.mrb[0].mxu0
        %v868 = vadd.f32 0.0, %v867
        %869 = vmatprep.mubr.bf16.mxu0 0
        %870 = vmatmul.mubr.bf16.gmra.mrb[0].mxu0 %v473
        %v871 = vpop.f32.mrb[0].mxu0
        %v872 = vadd.f32 0.0, %v871
        %v873 = vpop.f32.mrb[0].mxu0
        %v874 = vadd.f32 0.0, %v873
        %v875 = vpop.f32.mrb[0].mxu0
        %v876 = vadd.f32 0.0, %v875
        %v877 = vpop.f32.mrb[0].mxu0
        %v878 = vadd.f32 0.0, %v877
        %879 = vmatprep.mubr.bf16.mxu0 0
        %880 = vmatmul.mubr.bf16.gmra.mrb[0].mxu0 %v474
        %v881 = vpop.f32.mrb[0].mxu0
        %v882 = vadd.f32 0.0, %v881
        %v883 = vpop.f32.mrb[0].mxu0
        %v884 = vadd.f32 0.0, %v883
        %v885 = vpop.f32.mrb[0].mxu0
        %v886 = vadd.f32 0.0, %v885
        %v887 = vpop.f32.mrb[0].mxu0
        %v888 = vadd.f32 0.0, %v887
        %889 = vmatprep.mubr.bf16.mxu0 0
        %890 = vmatmul.mubr.bf16.gmra.mrb[0].mxu0 %v475
        %v891 = vpop.f32.mrb[0].mxu0
        %v892 = vadd.f32 0.0, %v891
        %v893 = vpop.f32.mrb[0].mxu0
        %v894 = vadd.f32 0.0, %v893
        %v895 = vpop.f32.mrb[0].mxu0
        %v896 = vadd.f32 0.0, %v895
        %v897 = vpop.f32.mrb[0].mxu0
        %v898 = vadd.f32 0.0, %v897
        %899 = vmatprep.mubr.bf16.mxu0 0
        %900 = vmatmul.mubr.bf16.gmra.mrb[0].mxu0 %v476
        %v901 = vpop.f32.mrb[0].mxu0
        %v902 = vadd.f32 0.0, %v901
        %v903 = vpop.f32.mrb[0].mxu0
        %v904 = vadd.f32 0.0, %v903
        %v905 = vpop.f32.mrb[0].mxu0
        %v906 = vadd.f32 0.0, %v905
        %v907 = vpop.f32.mrb[0].mxu0
        %v908 = vadd.f32 0.0, %v907
        %909 = vmatprep.mubr.bf16.mxu0 0
        %910 = vmatmul.mubr.bf16.gmra.mrb[0].mxu0 %v477
        %v911 = vpop.f32.mrb[0].mxu0
        %v912 = vadd.f32 0.0, %v911
        %v913 = vpop.f32.mrb[0].mxu0
        %v914 = vadd.f32 0.0, %v913
        %v915 = vpop.f32.mrb[0].mxu0
        %v916 = vadd.f32 0.0, %v915
        %v917 = vpop.f32.mrb[0].mxu0
        %v918 = vadd.f32 0.0, %v917
        %919 = vdwg.mxu0
        %920 = vmatprep.subr.bf16.mxu0 0
        %921 = vmatpush1.bf16.msra.mxu0 %v618
        %922 = vmatprep.subr.bf16.mxu0 0
        %923 = vmatpush1.bf16.msra.mxu0 %v623
        %924 = vmatprep.subr.bf16.mxu0 0
        %925 = vmatpush1.bf16.msra.mxu0 %v628
        %926 = vmatprep.subr.bf16.mxu0 0
        %927 = vmatpush1.bf16.msra.mxu0 %v633
        %928 = vmatprep.subr.bf16.mxu0 0
        %929 = vmatpush1.bf16.msra.mxu0 %v638
        %930 = vmatprep.subr.bf16.mxu0 0
        %931 = vmatpush1.bf16.msra.mxu0 %v643
        %932 = vmatprep.subr.bf16.mxu0 0
        %933 = vmatpush1.bf16.msra.mxu0 %v648
        %934 = vmatprep.subr.bf16.mxu0 0
        %935 = vmatpush1.bf16.msra.mxu0 %v653
        %936 = vmatprep.subr.bf16.mxu0 0
        %937 = vmatpush1.bf16.msra.mxu0 0
        %938 = vmatprep.subr.bf16.mxu0 0
        %939 = vmatpush1.bf16.msra.mxu0 0
        %940 = vmatprep.subr.bf16.mxu0 0
        %941 = vmatpush1.bf16.msra.mxu0 0
        %942 = vmatprep.subr.bf16.mxu0 0
        %943 = vmatpush1.bf16.msra.mxu0 0
        %944 = vmatprep.subr.bf16.mxu0 0
        %945 = vmatpush1.bf16.msra.mxu0 0
        %946 = vmatprep.subr.bf16.mxu0 0
        %947 = vmatpush1.bf16.msra.mxu0 0
        %948 = vmatprep.subr.bf16.mxu0 0
        %949 = vmatpush1.bf16.msra.mxu0 0
        %950 = vmatprep.subr.bf16.mxu0 0
        %951 = vmatpush1.bf16.msra.mxu0 0
        %952 = vmatprep.mubr.bf16.mxu0 0
        %953 = vmatmul.mubr.bf16.gmra.mrb[0].mxu0 %v470
        %v954 = vpop.f32.mrb[0].mxu0
        %v955 = vadd.f32 0.0, %v954
        %v956 = vpop.f32.mrb[0].mxu0
        %v957 = vpop.f32.mrb[0].mxu0
        %v958 = vadd.f32 0.0, %v957
        %v959 = vpop.f32.mrb[0].mxu0
        %960 = vmatprep.mubr.bf16.mxu0 0
        %961 = vmatmul.mubr.bf16.gmra.mrb[0].mxu0 %v471
        %v962 = vpop.f32.mrb[0].mxu0
        %v963 = vadd.f32 0.0, %v962
        %v964 = vpop.f32.mrb[0].mxu0
        %v965 = vpop.f32.mrb[0].mxu0
        %v966 = vadd.f32 0.0, %v965
        %v967 = vpop.f32.mrb[0].mxu0
        %968 = vmatprep.mubr.bf16.mxu0 0
        %969 = vmatmul.mubr.bf16.gmra.mrb[0].mxu0 %v472
        %v970 = vpop.f32.mrb[0].mxu0
        %v971 = vadd.f32 0.0, %v970
        %v972 = vpop.f32.mrb[0].mxu0
        %v973 = vpop.f32.mrb[0].mxu0
        %v974 = vadd.f32 0.0, %v973
        %v975 = vpop.f32.mrb[0].mxu0
        %976 = vmatprep.mubr.bf16.mxu0 0
        %977 = vmatmul.mubr.bf16.gmra.mrb[0].mxu0 %v473
        %v978 = vpop.f32.mrb[0].mxu0
        %v979 = vadd.f32 0.0, %v978
        %v980 = vpop.f32.mrb[0].mxu0
        %v981 = vpop.f32.mrb[0].mxu0
        %v982 = vadd.f32 0.0, %v981
        %v983 = vpop.f32.mrb[0].mxu0
        %984 = vmatprep.mubr.bf16.mxu0 0
        %985 = vmatmul.mubr.bf16.gmra.mrb[0].mxu0 %v474
        %v986 = vpop.f32.mrb[0].mxu0
        %v987 = vadd.f32 0.0, %v986
        %v988 = vpop.f32.mrb[0].mxu0
        %v989 = vpop.f32.mrb[0].mxu0
        %v990 = vadd.f32 0.0, %v989
        %v991 = vpop.f32.mrb[0].mxu0
        %992 = vmatprep.mubr.bf16.mxu0 0
        %993 = vmatmul.mubr.bf16.gmra.mrb[0].mxu0 %v475
        %v994 = vpop.f32.mrb[0].mxu0
        %v995 = vadd.f32 0.0, %v994
        %v996 = vpop.f32.mrb[0].mxu0
        %v997 = vpop.f32.mrb[0].mxu0
        %v998 = vadd.f32 0.0, %v997
        %v999 = vpop.f32.mrb[0].mxu0
        %1000 = vmatprep.mubr.bf16.mxu0 0
        %1001 = vmatmul.mubr.bf16.gmra.mrb[0].mxu0 %v476
        %v1002 = vpop.f32.mrb[0].mxu0
        %v1003 = vadd.f32 0.0, %v1002
        %v1004 = vpop.f32.mrb[0].mxu0
        %v1005 = vpop.f32.mrb[0].mxu0
        %v1006 = vadd.f32 0.0, %v1005
        %v1007 = vpop.f32.mrb[0].mxu0
        %1008 = vmatprep.mubr.bf16.mxu0 0
        %1009 = vmatmul.mubr.bf16.gmra.mrb[0].mxu0 %v477
        %v1010 = vpop.f32.mrb[0].mxu0
        %v1011 = vadd.f32 0.0, %v1010
        %v1012 = vpop.f32.mrb[0].mxu0
        %v1013 = vpop.f32.mrb[0].mxu0
        %v1014 = vadd.f32 0.0, %v1013
        %v1015 = vpop.f32.mrb[0].mxu0
        %1016 = vdwg.mxu0
        %v1017 = vld [vmem:[#allocation8] sm:$0xff]
        %v1018 = vld [vmem:[#allocation8 + $0x8] sm:$0xff]
        %v1019 = vld [vmem:[#allocation8 + $0x10] sm:$0xff]
        %v1020 = vld [vmem:[#allocation8 + $0x18] sm:$0xff]
        %v1021 = vld [vmem:[#allocation8 + $0x20] sm:$0xff]
        %v1022 = vld [vmem:[#allocation8 + $0x28] sm:$0xff]
        %v1023 = vld [vmem:[#allocation8 + $0x30] sm:$0xff]
        %v1024 = vld [vmem:[#allocation8 + $0x38] sm:$0xff]
        %v1025 = vld [vmem:[#allocation8 + $0x40] sm:$0xff]
        %v1026 = vld [vmem:[#allocation8 + $0x48] sm:$0xff]
        %v1027 = vld [vmem:[#allocation8 + $0x50] sm:$0xff]
        %v1028 = vld [vmem:[#allocation8 + $0x58] sm:$0xff]
        %v1029 = vld [vmem:[#allocation8 + $0x60] sm:$0xff]
        %v1030 = vld [vmem:[#allocation8 + $0x68] sm:$0xff]
        %v1031 = vld [vmem:[#allocation8 + $0x70] sm:$0xff]
        %v1032 = vld [vmem:[#allocation8 + $0x78] sm:$0xff]
        %v1033 = vld [vmem:[#allocation10] sm:$0xff]
        %v1034 = vld [vmem:[#allocation10 + $0x8] sm:$0xff]
        %v1035 = vld [vmem:[#allocation10 + $0x10] sm:$0xff]
        %v1036 = vld [vmem:[#allocation10 + $0x18] sm:$0xff]
        %v1037 = vld [vmem:[#allocation10 + $0x20] sm:$0xff]
        %v1038 = vld [vmem:[#allocation10 + $0x28] sm:$0xff]
        %v1039 = vld [vmem:[#allocation10 + $0x30] sm:$0xff]
        %v1040 = vld [vmem:[#allocation10 + $0x38] sm:$0xff]
        %v1041 = vld [vmem:[#allocation10 + $0x40] sm:$0xff]
        %v1042 = vld [vmem:[#allocation10 + $0x48] sm:$0xff]
        %v1043 = vld [vmem:[#allocation10 + $0x50] sm:$0xff]
        %v1044 = vld [vmem:[#allocation10 + $0x58] sm:$0xff]
        %v1045 = vld [vmem:[#allocation10 + $0x60] sm:$0xff]
        %v1046 = vld [vmem:[#allocation10 + $0x68] sm:$0xff]
        %v1047 = vld [vmem:[#allocation10 + $0x70] sm:$0xff]
        %v1048 = vld [vmem:[#allocation10 + $0x78] sm:$0xff]
        %v1049 = vmul.f32 %v729, %v1017
        %v1050 = vmul.f32 %v733, %v1018
        %v1051 = vmul.f32 %v739, %v1019
        %v1052 = vmul.f32 %v743, %v1020
        %v1053 = vmul.f32 %v749, %v1021
        %v1054 = vmul.f32 %v753, %v1022
        %v1055 = vmul.f32 %v759, %v1023
        %v1056 = vmul.f32 %v763, %v1024
        %v1057 = vmul.f32 %v769, %v1025
        %v1058 = vmul.f32 %v773, %v1026
        %v1059 = vmul.f32 %v779, %v1027
        %v1060 = vmul.f32 %v783, %v1028
        %v1061 = vmul.f32 %v789, %v1029
        %v1062 = vmul.f32 %v793, %v1030
        %v1063 = vmul.f32 %v799, %v1031
        %v1064 = vmul.f32 %v803, %v1032
        %v1065 = vmul.f32 %v731, %v1033
        %v1066 = vmul.f32 %v735, %v1034
        %v1067 = vmul.f32 %v741, %v1035
        %v1068 = vmul.f32 %v745, %v1036
        %v1069 = vmul.f32 %v751, %v1037
        %v1070 = vmul.f32 %v755, %v1038
        %v1071 = vmul.f32 %v761, %v1039
        %v1072 = vmul.f32 %v765, %v1040
        %v1073 = vmul.f32 %v771, %v1041
        %v1074 = vmul.f32 %v775, %v1042
        %v1075 = vmul.f32 %v781, %v1043
        %v1076 = vmul.f32 %v785, %v1044
        %v1077 = vmul.f32 %v791, %v1045
        %v1078 = vmul.f32 %v795, %v1046
        %v1079 = vmul.f32 %v801, %v1047
        %v1080 = vmul.f32 %v805, %v1048
        %v1081 = vadd.f32 %v1049, %v1065
        %v1082 = vadd.f32 %v1050, %v1066
        %v1083 = vadd.f32 %v1051, %v1067
        %v1084 = vadd.f32 %v1052, %v1068
        %v1085 = vadd.f32 %v1053, %v1069
        %v1086 = vadd.f32 %v1054, %v1070
        %v1087 = vadd.f32 %v1055, %v1071
        %v1088 = vadd.f32 %v1056, %v1072
        %v1089 = vadd.f32 %v1057, %v1073
        %v1090 = vadd.f32 %v1058, %v1074
        %v1091 = vadd.f32 %v1059, %v1075
        %v1092 = vadd.f32 %v1060, %v1076
        %v1093 = vadd.f32 %v1061, %v1077
        %v1094 = vadd.f32 %v1062, %v1078
        %v1095 = vadd.f32 %v1063, %v1079
        %v1096 = vadd.f32 %v1064, %v1080
        %v1097 = vpack.c.bf16 %v1082, %v1081
        %v1098 = vpack.c.bf16 %v1084, %v1083
        %v1099 = vpack.c.bf16 %v1086, %v1085
        %v1100 = vpack.c.bf16 %v1088, %v1087
        %v1101 = vpack.c.bf16 %v1090, %v1089
        %v1102 = vpack.c.bf16 %v1092, %v1091
        %v1103 = vpack.c.bf16 %v1094, %v1093
        %v1104 = vpack.c.bf16 %v1096, %v1095
        %v1105 = vmul.f32 %v842, %v1017
        %v1106 = vmul.f32 %v846, %v1018
        %v1107 = vmul.f32 %v852, %v1019
        %v1108 = vmul.f32 %v856, %v1020
        %v1109 = vmul.f32 %v862, %v1021
        %v1110 = vmul.f32 %v866, %v1022
        %v1111 = vmul.f32 %v872, %v1023
        %v1112 = vmul.f32 %v876, %v1024
        %v1113 = vmul.f32 %v882, %v1025
        %v1114 = vmul.f32 %v886, %v1026
        %v1115 = vmul.f32 %v892, %v1027
        %v1116 = vmul.f32 %v896, %v1028
        %v1117 = vmul.f32 %v902, %v1029
        %v1118 = vmul.f32 %v906, %v1030
        %v1119 = vmul.f32 %v912, %v1031
        %v1120 = vmul.f32 %v916, %v1032
        %v1121 = vmul.f32 %v844, %v1033
        %v1122 = vmul.f32 %v848, %v1034
        %v1123 = vmul.f32 %v854, %v1035
        %v1124 = vmul.f32 %v858, %v1036
        %v1125 = vmul.f32 %v864, %v1037
        %v1126 = vmul.f32 %v868, %v1038
        %v1127 = vmul.f32 %v874, %v1039
        %v1128 = vmul.f32 %v878, %v1040
        %v1129 = vmul.f32 %v884, %v1041
        %v1130 = vmul.f32 %v888, %v1042
        %v1131 = vmul.f32 %v894, %v1043
        %v1132 = vmul.f32 %v898, %v1044
        %v1133 = vmul.f32 %v904, %v1045
        %v1134 = vmul.f32 %v908, %v1046
        %v1135 = vmul.f32 %v914, %v1047
        %v1136 = vmul.f32 %v918, %v1048
        %v1137 = vadd.f32 %v1105, %v1121
        %v1138 = vadd.f32 %v1106, %v1122
        %v1139 = vadd.f32 %v1107, %v1123
        %v1140 = vadd.f32 %v1108, %v1124
        %v1141 = vadd.f32 %v1109, %v1125
        %v1142 = vadd.f32 %v1110, %v1126
        %v1143 = vadd.f32 %v1111, %v1127
        %v1144 = vadd.f32 %v1112, %v1128
        %v1145 = vadd.f32 %v1113, %v1129
        %v1146 = vadd.f32 %v1114, %v1130
        %v1147 = vadd.f32 %v1115, %v1131
        %v1148 = vadd.f32 %v1116, %v1132
        %v1149 = vadd.f32 %v1117, %v1133
        %v1150 = vadd.f32 %v1118, %v1134
        %v1151 = vadd.f32 %v1119, %v1135
        %v1152 = vadd.f32 %v1120, %v1136
        %v1153 = vpack.c.bf16 %v1138, %v1137
        %v1154 = vpack.c.bf16 %v1140, %v1139
        %v1155 = vpack.c.bf16 %v1142, %v1141
        %v1156 = vpack.c.bf16 %v1144, %v1143
        %v1157 = vpack.c.bf16 %v1146, %v1145
        %v1158 = vpack.c.bf16 %v1148, %v1147
        %v1159 = vpack.c.bf16 %v1150, %v1149
        %v1160 = vpack.c.bf16 %v1152, %v1151
        %v1161 = vpack.c.bf16 %v958, %v955
        %v1162 = vpack.c.bf16 %v966, %v963
        %v1163 = vpack.c.bf16 %v974, %v971
        %v1164 = vpack.c.bf16 %v982, %v979
        %v1165 = vpack.c.bf16 %v990, %v987
        %v1166 = vpack.c.bf16 %v998, %v995
        %v1167 = vpack.c.bf16 %v1006, %v1003
        %v1168 = vpack.c.bf16 %v1014, %v1011
        %v1169 = vld [vmem:[#allocation11] sm:$0xff]
        %v1170 = vld [vmem:[#allocation11 + $0x8] sm:$0xff]
        %v1171 = vld [vmem:[#allocation11 + $0x10] sm:$0xff]
        %v1172 = vld [vmem:[#allocation11 + $0x18] sm:$0xff]
        %v1173 = vld [vmem:[#allocation11 + $0x20] sm:$0xff]
        %v1174 = vld [vmem:[#allocation11 + $0x28] sm:$0xff]
        %v1175 = vld [vmem:[#allocation11 + $0x30] sm:$0xff]
        %v1176 = vld [vmem:[#allocation11 + $0x38] sm:$0xff]
        %v1177 = vld [vmem:[#allocation11 + $0x40] sm:$0xff]
        %v1178 = vld [vmem:[#allocation11 + $0x48] sm:$0xff]
        %v1179 = vld [vmem:[#allocation11 + $0x50] sm:$0xff]
        %v1180 = vld [vmem:[#allocation11 + $0x58] sm:$0xff]
        %v1181 = vld [vmem:[#allocation11 + $0x60] sm:$0xff]
        %v1182 = vld [vmem:[#allocation11 + $0x68] sm:$0xff]
        %v1183 = vld [vmem:[#allocation11 + $0x70] sm:$0xff]
        %v1184 = vld [vmem:[#allocation11 + $0x78] sm:$0xff]
        %vm1185 = vcmask 261120
        %v1187 = vsel %vm1185, %v1097, 0
        %v1190 = vsel %vm1185, %v1098, 0
        %v1193 = vsel %vm1185, %v1099, 0
        %v1196 = vsel %vm1185, %v1100, 0
        %v1199 = vsel %vm1185, %v1101, 0
        %v1202 = vsel %vm1185, %v1102, 0
        %v1205 = vsel %vm1185, %v1103, 0
        %v1208 = vsel %vm1185, %v1104, 0
        %v1211 = vsel %vm1185, %v1153, 0
        %v1214 = vsel %vm1185, %v1154, 0
        %v1217 = vsel %vm1185, %v1155, 0
        %v1220 = vsel %vm1185, %v1156, 0
        %v1223 = vsel %vm1185, %v1157, 0
        %v1226 = vsel %vm1185, %v1158, 0
        %v1229 = vsel %vm1185, %v1159, 0
        %v1232 = vsel %vm1185, %v1160, 0
        %1234 = vmatprep.subr.bf16.mxu0 0
        %1235 = vmatpush1.bf16.xpose.msra.mxu0 %v1211
        %1236 = vmatprep.subr.bf16.mxu0 0
        %1237 = vmatpush1.bf16.xpose.msra.mxu0 %v1214
        %1238 = vmatprep.subr.bf16.mxu0 0
        %1239 = vmatpush1.bf16.xpose.msra.mxu0 %v1217
        %1240 = vmatprep.subr.bf16.mxu0 0
        %1241 = vmatpush1.bf16.xpose.msra.mxu0 %v1220
        %1242 = vmatprep.subr.bf16.mxu0 0
        %1243 = vmatpush1.bf16.xpose.msra.mxu0 %v1223
        %1244 = vmatprep.subr.bf16.mxu0 0
        %1245 = vmatpush1.bf16.xpose.msra.mxu0 %v1226
        %1246 = vmatprep.subr.bf16.mxu0 0
        %1247 = vmatpush1.bf16.xpose.msra.mxu0 %v1229
        %1248 = vmatprep.subr.bf16.mxu0 0
        %1249 = vmatpush1.bf16.xpose.msra.mxu0 %v1232
        %1250 = vmatprep.subr.bf16.mxu0 0
        %1251 = vmatpush1.bf16.xpose.msra.mxu0 0
        %1252 = vmatprep.subr.bf16.mxu0 0
        %1253 = vmatpush1.bf16.xpose.msra.mxu0 0
        %1254 = vmatprep.subr.bf16.mxu0 0
        %1255 = vmatpush1.bf16.xpose.msra.mxu0 0
        %1256 = vmatprep.subr.bf16.mxu0 0
        %1257 = vmatpush1.bf16.xpose.msra.mxu0 0
        %1258 = vmatprep.subr.bf16.mxu0 0
        %1259 = vmatpush1.bf16.xpose.msra.mxu0 0
        %1260 = vmatprep.subr.bf16.mxu0 0
        %1261 = vmatpush1.bf16.xpose.msra.mxu0 0
        %1262 = vmatprep.subr.bf16.mxu0 0
        %1263 = vmatpush1.bf16.xpose.msra.mxu0 0
        %1264 = vmatprep.subr.bf16.mxu0 0
        %1265 = vmatpush1.bf16.xpose.msra.mxu0 0
        %1266 = vmatprep.mubr.bf16.mxu0 0
        %1267 = vmatmul.mubr.bf16.gmra.mrb[0].mxu0 %v1187
        %v1268 = vpop.f32.mrb[0].mxu0
        %v1269 = vadd.f32 %v1169, %v1268
        %v1270 = vpop.f32.mrb[0].mxu0
        %v1271 = vpop.f32.mrb[0].mxu0
        %v1272 = vadd.f32 %v1170, %v1271
        %v1273 = vpop.f32.mrb[0].mxu0
        %1274 = vmatprep.mubr.bf16.mxu0 0
        %1275 = vmatmul.mubr.bf16.gmra.mrb[0].mxu0 %v1190
        %v1276 = vpop.f32.mrb[0].mxu0
        %v1277 = vadd.f32 %v1171, %v1276
        %v1278 = vpop.f32.mrb[0].mxu0
        %v1279 = vpop.f32.mrb[0].mxu0
        %v1280 = vadd.f32 %v1172, %v1279
        %v1281 = vpop.f32.mrb[0].mxu0
        %1282 = vmatprep.mubr.bf16.mxu0 0
        %1283 = vmatmul.mubr.bf16.gmra.mrb[0].mxu0 %v1193
        %v1284 = vpop.f32.mrb[0].mxu0
        %v1285 = vadd.f32 %v1173, %v1284
        %v1286 = vpop.f32.mrb[0].mxu0
        %v1287 = vpop.f32.mrb[0].mxu0
        %v1288 = vadd.f32 %v1174, %v1287
        %v1289 = vpop.f32.mrb[0].mxu0
        %1290 = vmatprep.mubr.bf16.mxu0 0
        %1291 = vmatmul.mubr.bf16.gmra.mrb[0].mxu0 %v1196
        %v1292 = vpop.f32.mrb[0].mxu0
        %v1293 = vadd.f32 %v1175, %v1292
        %v1294 = vpop.f32.mrb[0].mxu0
        %v1295 = vpop.f32.mrb[0].mxu0
        %v1296 = vadd.f32 %v1176, %v1295
        %v1297 = vpop.f32.mrb[0].mxu0
        %1298 = vmatprep.mubr.bf16.mxu0 0
        %1299 = vmatmul.mubr.bf16.gmra.mrb[0].mxu0 %v1199
        %v1300 = vpop.f32.mrb[0].mxu0
        %v1301 = vadd.f32 %v1177, %v1300
        %v1302 = vpop.f32.mrb[0].mxu0
        %v1303 = vpop.f32.mrb[0].mxu0
        %v1304 = vadd.f32 %v1178, %v1303
        %v1305 = vpop.f32.mrb[0].mxu0
        %1306 = vmatprep.mubr.bf16.mxu0 0
        %1307 = vmatmul.mubr.bf16.gmra.mrb[0].mxu0 %v1202
        %v1308 = vpop.f32.mrb[0].mxu0
        %v1309 = vadd.f32 %v1179, %v1308
        %v1310 = vpop.f32.mrb[0].mxu0
        %v1311 = vpop.f32.mrb[0].mxu0
        %v1312 = vadd.f32 %v1180, %v1311
        %v1313 = vpop.f32.mrb[0].mxu0
        %1314 = vmatprep.mubr.bf16.mxu0 0
        %1315 = vmatmul.mubr.bf16.gmra.mrb[0].mxu0 %v1205
        %v1316 = vpop.f32.mrb[0].mxu0
        %v1317 = vadd.f32 %v1181, %v1316
        %v1318 = vpop.f32.mrb[0].mxu0
        %v1319 = vpop.f32.mrb[0].mxu0
        %v1320 = vadd.f32 %v1182, %v1319
        %v1321 = vpop.f32.mrb[0].mxu0
        %1322 = vmatprep.mubr.bf16.mxu0 0
        %1323 = vmatmul.mubr.bf16.gmra.mrb[0].mxu0 %v1208
        %v1324 = vpop.f32.mrb[0].mxu0
        %v1325 = vadd.f32 %v1183, %v1324
        %v1326 = vpop.f32.mrb[0].mxu0
        %v1327 = vpop.f32.mrb[0].mxu0
        %v1328 = vadd.f32 %v1184, %v1327
        %v1329 = vpop.f32.mrb[0].mxu0
        %1330 = vdwg.mxu0
        %1331 = vmax.xlane.f32.xlu0 %v1269
        %v1332 = vpop.xlane.xlu0 %1331
        %1333 = vmax.xlane.f32.xlu0 %v1272
        %v1334 = vpop.xlane.xlu0 %1333
        %1335 = vmax.xlane.f32.xlu0 %v1277
        %v1336 = vpop.xlane.xlu0 %1335
        %1337 = vmax.xlane.f32.xlu0 %v1280
        %v1338 = vpop.xlane.xlu0 %1337
        %1339 = vmax.xlane.f32.xlu0 %v1285
        %v1340 = vpop.xlane.xlu0 %1339
        %1341 = vmax.xlane.f32.xlu0 %v1288
        %v1342 = vpop.xlane.xlu0 %1341
        %1343 = vmax.xlane.f32.xlu0 %v1293
        %v1344 = vpop.xlane.xlu0 %1343
        %1345 = vmax.xlane.f32.xlu0 %v1296
        %v1346 = vpop.xlane.xlu0 %1345
        %1347 = vmax.xlane.f32.xlu0 %v1301
        %v1348 = vpop.xlane.xlu0 %1347
        %1349 = vmax.xlane.f32.xlu0 %v1304
        %v1350 = vpop.xlane.xlu0 %1349
        %1351 = vmax.xlane.f32.xlu0 %v1309
        %v1352 = vpop.xlane.xlu0 %1351
        %1353 = vmax.xlane.f32.xlu0 %v1312
        %v1354 = vpop.xlane.xlu0 %1353
        %1355 = vmax.xlane.f32.xlu0 %v1317
        %v1356 = vpop.xlane.xlu0 %1355
        %1357 = vmax.xlane.f32.xlu0 %v1320
        %v1358 = vpop.xlane.xlu0 %1357
        %1359 = vmax.xlane.f32.xlu0 %v1325
        %v1360 = vpop.xlane.xlu0 %1359
        %1361 = vmax.xlane.f32.xlu0 %v1328
        %v1362 = vpop.xlane.xlu0 %1361
        %v1363 = vsub.f32 %v1269, %v1332
        %v1364 = vsub.f32 %v1272, %v1334
        %v1365 = vsub.f32 %v1277, %v1336
        %v1366 = vsub.f32 %v1280, %v1338
        %v1367 = vsub.f32 %v1285, %v1340
        %v1368 = vsub.f32 %v1288, %v1342
        %v1369 = vsub.f32 %v1293, %v1344
        %v1370 = vsub.f32 %v1296, %v1346
        %v1371 = vsub.f32 %v1301, %v1348
        %v1372 = vsub.f32 %v1304, %v1350
        %v1373 = vsub.f32 %v1309, %v1352
        %v1374 = vsub.f32 %v1312, %v1354
        %v1375 = vsub.f32 %v1317, %v1356
        %v1376 = vsub.f32 %v1320, %v1358
        %v1377 = vsub.f32 %v1325, %v1360
        %v1378 = vsub.f32 %v1328, %v1362
        %v1379 = vmul.f32 %v1363, 1.442695
        %v1380 = vpow.pop %v1379
        %v1381 = vmul.f32 %v1364, 1.442695
        %v1382 = vpow.pop %v1381
        %v1383 = vmul.f32 %v1365, 1.442695
        %v1384 = vpow.pop %v1383
        %v1385 = vmul.f32 %v1366, 1.442695
        %v1386 = vpow.pop %v1385
        %v1387 = vmul.f32 %v1367, 1.442695
        %v1388 = vpow.pop %v1387
        %v1389 = vmul.f32 %v1368, 1.442695
        %v1390 = vpow.pop %v1389
        %v1391 = vmul.f32 %v1369, 1.442695
        %v1392 = vpow.pop %v1391
        %v1393 = vmul.f32 %v1370, 1.442695
        %v1394 = vpow.pop %v1393
        %v1395 = vmul.f32 %v1371, 1.442695
        %v1396 = vpow.pop %v1395
        %v1397 = vmul.f32 %v1372, 1.442695
        %v1398 = vpow.pop %v1397
        %v1399 = vmul.f32 %v1373, 1.442695
        %v1400 = vpow.pop %v1399
        %v1401 = vmul.f32 %v1374, 1.442695
        %v1402 = vpow.pop %v1401
        %v1403 = vmul.f32 %v1375, 1.442695
        %v1404 = vpow.pop %v1403
        %v1405 = vmul.f32 %v1376, 1.442695
        %v1406 = vpow.pop %v1405
        %v1407 = vmul.f32 %v1377, 1.442695
        %v1408 = vpow.pop %v1407
        %v1409 = vmul.f32 %v1378, 1.442695
        %v1410 = vpow.pop %v1409
        %1411 = vadd.xlane.f32.xlu0 %v1380
        %v1412 = vpop.xlane.xlu0 %1411
        %1413 = vadd.xlane.f32.xlu0 %v1382
        %v1414 = vpop.xlane.xlu0 %1413
        %1415 = vadd.xlane.f32.xlu0 %v1384
        %v1416 = vpop.xlane.xlu0 %1415
        %1417 = vadd.xlane.f32.xlu0 %v1386
        %v1418 = vpop.xlane.xlu0 %1417
        %1419 = vadd.xlane.f32.xlu0 %v1388
        %v1420 = vpop.xlane.xlu0 %1419
        %1421 = vadd.xlane.f32.xlu0 %v1390
        %v1422 = vpop.xlane.xlu0 %1421
        %1423 = vadd.xlane.f32.xlu0 %v1392
        %v1424 = vpop.xlane.xlu0 %1423
        %1425 = vadd.xlane.f32.xlu0 %v1394
        %v1426 = vpop.xlane.xlu0 %1425
        %1427 = vadd.xlane.f32.xlu0 %v1396
        %v1428 = vpop.xlane.xlu0 %1427
        %1429 = vadd.xlane.f32.xlu0 %v1398
        %v1430 = vpop.xlane.xlu0 %1429
        %1431 = vadd.xlane.f32.xlu0 %v1400
        %v1432 = vpop.xlane.xlu0 %1431
        %1433 = vadd.xlane.f32.xlu0 %v1402
        %v1434 = vpop.xlane.xlu0 %1433
        %1435 = vadd.xlane.f32.xlu0 %v1404
        %v1436 = vpop.xlane.xlu0 %1435
        %1437 = vadd.xlane.f32.xlu0 %v1406
        %v1438 = vpop.xlane.xlu0 %1437
        %1439 = vadd.xlane.f32.xlu0 %v1408
        %v1440 = vpop.xlane.xlu0 %1439
        %1441 = vadd.xlane.f32.xlu0 %v1410
        %v1442 = vpop.xlane.xlu0 %1441
        %v1443 = vpack.c.bf16 %v1382, %v1380
        %v1444 = vpack.c.bf16 %v1386, %v1384
        %v1445 = vpack.c.bf16 %v1390, %v1388
        %v1446 = vpack.c.bf16 %v1394, %v1392
        %v1447 = vpack.c.bf16 %v1398, %v1396
        %v1448 = vpack.c.bf16 %v1402, %v1400
        %v1449 = vpack.c.bf16 %v1406, %v1404
        %v1450 = vpack.c.bf16 %v1410, %v1408
        %1451 = vmatprep.subr.bf16.mxu0 0
        %1452 = vmatpush1.bf16.msra.mxu0 %v1161
        %1453 = vmatprep.subr.bf16.mxu0 0
        %1454 = vmatpush1.bf16.msra.mxu0 %v1162
        %1455 = vmatprep.subr.bf16.mxu0 0
        %1456 = vmatpush1.bf16.msra.mxu0 %v1163
        %1457 = vmatprep.subr.bf16.mxu0 0
        %1458 = vmatpush1.bf16.msra.mxu0 %v1164
        %1459 = vmatprep.subr.bf16.mxu0 0
        %1460 = vmatpush1.bf16.msra.mxu0 %v1165
        %1461 = vmatprep.subr.bf16.mxu0 0
        %1462 = vmatpush1.bf16.msra.mxu0 %v1166
        %1463 = vmatprep.subr.bf16.mxu0 0
        %1464 = vmatpush1.bf16.msra.mxu0 %v1167
        %1465 = vmatprep.subr.bf16.mxu0 0
        %1466 = vmatpush1.bf16.msra.mxu0 %v1168
        %1467 = vmatprep.subr.bf16.mxu0 0
        %1468 = vmatpush1.bf16.msra.mxu0 0
        %1469 = vmatprep.subr.bf16.mxu0 0
        %1470 = vmatpush1.bf16.msra.mxu0 0
        %1471 = vmatprep.subr.bf16.mxu0 0
        %1472 = vmatpush1.bf16.msra.mxu0 0
        %1473 = vmatprep.subr.bf16.mxu0 0
        %1474 = vmatpush1.bf16.msra.mxu0 0
        %1475 = vmatprep.subr.bf16.mxu0 0
        %1476 = vmatpush1.bf16.msra.mxu0 0
        %1477 = vmatprep.subr.bf16.mxu0 0
        %1478 = vmatpush1.bf16.msra.mxu0 0
        %1479 = vmatprep.subr.bf16.mxu0 0
        %1480 = vmatpush1.bf16.msra.mxu0 0
        %1481 = vmatprep.subr.bf16.mxu0 0
        %1482 = vmatpush1.bf16.msra.mxu0 0
        %1483 = vmatprep.mubr.bf16.mxu0 0
        %1484 = vmatmul.mubr.bf16.gmra.mrb[0].mxu0 %v1443
        %v1485 = vpop.f32.mrb[0].mxu0
        %v1486 = vadd.f32 0.0, %v1485
        %v1487 = vpop.f32.mrb[0].mxu0
        %v1488 = vpop.f32.mrb[0].mxu0
        %v1489 = vadd.f32 0.0, %v1488
        %v1490 = vpop.f32.mrb[0].mxu0
        %1491 = vmatprep.mubr.bf16.mxu0 0
        %1492 = vmatmul.mubr.bf16.gmra.mrb[0].mxu0 %v1444
        %v1493 = vpop.f32.mrb[0].mxu0
        %v1494 = vadd.f32 0.0, %v1493
        %v1495 = vpop.f32.mrb[0].mxu0
        %v1496 = vpop.f32.mrb[0].mxu0
        %v1497 = vadd.f32 0.0, %v1496
        %v1498 = vpop.f32.mrb[0].mxu0
        %1499 = vmatprep.mubr.bf16.mxu0 0
        %1500 = vmatmul.mubr.bf16.gmra.mrb[0].mxu0 %v1445
        %v1501 = vpop.f32.mrb[0].mxu0
        %v1502 = vadd.f32 0.0, %v1501
        %v1503 = vpop.f32.mrb[0].mxu0
        %v1504 = vpop.f32.mrb[0].mxu0
        %v1505 = vadd.f32 0.0, %v1504
        %v1506 = vpop.f32.mrb[0].mxu0
        %1507 = vmatprep.mubr.bf16.mxu0 0
        %1508 = vmatmul.mubr.bf16.gmra.mrb[0].mxu0 %v1446
        %v1509 = vpop.f32.mrb[0].mxu0
        %v1510 = vadd.f32 0.0, %v1509
        %v1511 = vpop.f32.mrb[0].mxu0
        %v1512 = vpop.f32.mrb[0].mxu0
        %v1513 = vadd.f32 0.0, %v1512
        %v1514 = vpop.f32.mrb[0].mxu0
        %1515 = vmatprep.mubr.bf16.mxu0 0
        %1516 = vmatmul.mubr.bf16.gmra.mrb[0].mxu0 %v1447
        %v1517 = vpop.f32.mrb[0].mxu0
        %v1518 = vadd.f32 0.0, %v1517
        %v1519 = vpop.f32.mrb[0].mxu0
        %v1520 = vpop.f32.mrb[0].mxu0
        %v1521 = vadd.f32 0.0, %v1520
        %v1522 = vpop.f32.mrb[0].mxu0
        %1523 = vmatprep.mubr.bf16.mxu0 0
        %1524 = vmatmul.mubr.bf16.gmra.mrb[0].mxu0 %v1448
        %v1525 = vpop.f32.mrb[0].mxu0
        %v1526 = vadd.f32 0.0, %v1525
        %v1527 = vpop.f32.mrb[0].mxu0
        %v1528 = vpop.f32.mrb[0].mxu0
        %v1529 = vadd.f32 0.0, %v1528
        %v1530 = vpop.f32.mrb[0].mxu0
        %1531 = vmatprep.mubr.bf16.mxu0 0
        %1532 = vmatmul.mubr.bf16.gmra.mrb[0].mxu0 %v1449
        %v1533 = vpop.f32.mrb[0].mxu0
        %v1534 = vadd.f32 0.0, %v1533
        %v1535 = vpop.f32.mrb[0].mxu0
        %v1536 = vpop.f32.mrb[0].mxu0
        %v1537 = vadd.f32 0.0, %v1536
        %v1538 = vpop.f32.mrb[0].mxu0
        %1539 = vmatprep.mubr.bf16.mxu0 0
        %1540 = vmatmul.mubr.bf16.gmra.mrb[0].mxu0 %v1450
        %v1541 = vpop.f32.mrb[0].mxu0
        %v1542 = vadd.f32 0.0, %v1541
        %v1543 = vpop.f32.mrb[0].mxu0
        %v1544 = vpop.f32.mrb[0].mxu0
        %v1545 = vadd.f32 0.0, %v1544
        %v1546 = vpop.f32.mrb[0].mxu0
        %1547 = vdwg.mxu0
        %v1548 = vrcp.pop %v1412
        %v1549 = vrcp.pop %v1414
        %v1550 = vrcp.pop %v1416
        %v1551 = vrcp.pop %v1418
        %v1552 = vrcp.pop %v1420
        %v1553 = vrcp.pop %v1422
        %v1554 = vrcp.pop %v1424
        %v1555 = vrcp.pop %v1426
        %v1556 = vrcp.pop %v1428
        %v1557 = vrcp.pop %v1430
        %v1558 = vrcp.pop %v1432
        %v1559 = vrcp.pop %v1434
        %v1560 = vrcp.pop %v1436
        %v1561 = vrcp.pop %v1438
        %v1562 = vrcp.pop %v1440
        %v1563 = vrcp.pop %v1442
        %v1564 = vmul.f32 %v1486, %v1548
        %v1565 = vmul.f32 %v1489, %v1549
        %v1566 = vmul.f32 %v1494, %v1550
        %v1567 = vmul.f32 %v1497, %v1551
        %v1568 = vmul.f32 %v1502, %v1552
        %v1569 = vmul.f32 %v1505, %v1553
        %v1570 = vmul.f32 %v1510, %v1554
        %v1571 = vmul.f32 %v1513, %v1555
        %v1572 = vmul.f32 %v1518, %v1556
        %v1573 = vmul.f32 %v1521, %v1557
        %v1574 = vmul.f32 %v1526, %v1558
        %v1575 = vmul.f32 %v1529, %v1559
        %v1576 = vmul.f32 %v1534, %v1560
        %v1577 = vmul.f32 %v1537, %v1561
        %v1578 = vmul.f32 %v1542, %v1562
        %v1579 = vmul.f32 %v1545, %v1563
        %v1580 = vpack.c.bf16 %v1565, %v1564
        %v1581 = vpack.c.bf16 %v1567, %v1566
        %v1582 = vpack.c.bf16 %v1569, %v1568
        %v1583 = vpack.c.bf16 %v1571, %v1570
        %v1584 = vpack.c.bf16 %v1573, %v1572
        %v1585 = vpack.c.bf16 %v1575, %v1574
        %v1586 = vpack.c.bf16 %v1577, %v1576
        %v1587 = vpack.c.bf16 %v1579, %v1578
        %v1588 = vld [vmem:[#allocation7] sm:$0xf]
        %v1589 = vld [vmem:[#allocation7 + $0x4] sm:$0xf]
        %v1590 = vld [vmem:[#allocation7 + $0x8] sm:$0xf]
        %v1591 = vld [vmem:[#allocation7 + $0xc] sm:$0xf]
        %1600 = vrot.lane.b32.xlu0 %v1097, 96
        %v1601 = vpop.permute.xlu0 %1600
        %1602 = vrot.lane.b32.xlu0 %v1098, 96
        %v1603 = vpop.permute.xlu0 %1602
        %1604 = vrot.lane.b32.xlu0 %v1099, 96
        %v1605 = vpop.permute.xlu0 %1604
        %1606 = vrot.lane.b32.xlu0 %v1100, 96
        %v1607 = vpop.permute.xlu0 %1606
        %1608 = vrot.lane.b32.xlu0 %v1101, 96
        %v1609 = vpop.permute.xlu0 %1608
        %1610 = vrot.lane.b32.xlu0 %v1102, 96
        %v1611 = vpop.permute.xlu0 %1610
        %1612 = vrot.lane.b32.xlu0 %v1103, 96
        %v1613 = vpop.permute.xlu0 %1612
        %1614 = vrot.lane.b32.xlu0 %v1104, 96
        %v1615 = vpop.permute.xlu0 %1614
        %1624 = vrot.lane.b32.xlu0 %v1153, 96
        %v1625 = vpop.permute.xlu0 %1624
        %1626 = vrot.lane.b32.xlu0 %v1154, 96
        %v1627 = vpop.permute.xlu0 %1626
        %1628 = vrot.lane.b32.xlu0 %v1155, 96
        %v1629 = vpop.permute.xlu0 %1628
        %1630 = vrot.lane.b32.xlu0 %v1156, 96
        %v1631 = vpop.permute.xlu0 %1630
        %1632 = vrot.lane.b32.xlu0 %v1157, 96
        %v1633 = vpop.permute.xlu0 %1632
        %1634 = vrot.lane.b32.xlu0 %v1158, 96
        %v1635 = vpop.permute.xlu0 %1634
        %1636 = vrot.lane.b32.xlu0 %v1159, 96
        %v1637 = vpop.permute.xlu0 %1636
        %1638 = vrot.lane.b32.xlu0 %v1160, 96
        %v1639 = vpop.permute.xlu0 %1638
        %v1641 = vsel %vm1185, %v1601, 0
        %v1644 = vsel %vm1185, %v1603, 0
        %v1647 = vsel %vm1185, %v1605, 0
        %v1650 = vsel %vm1185, %v1607, 0
        %v1653 = vsel %vm1185, %v1609, 0
        %v1656 = vsel %vm1185, %v1611, 0
        %v1659 = vsel %vm1185, %v1613, 0
        %v1662 = vsel %vm1185, %v1615, 0
        %v1665 = vsel %vm1185, %v1625, 0
        %v1668 = vsel %vm1185, %v1627, 0
        %v1671 = vsel %vm1185, %v1629, 0
        %v1674 = vsel %vm1185, %v1631, 0
        %v1677 = vsel %vm1185, %v1633, 0
        %v1680 = vsel %vm1185, %v1635, 0
        %v1683 = vsel %vm1185, %v1637, 0
        %v1686 = vsel %vm1185, %v1639, 0
        %1688 = vmatprep.subr.bf16.mxu0 0
        %1689 = vmatpush1.bf16.xpose.msra.mxu0 %v1665
        %1690 = vmatprep.subr.bf16.mxu0 0
        %1691 = vmatpush1.bf16.xpose.msra.mxu0 %v1668
        %1692 = vmatprep.subr.bf16.mxu0 0
        %1693 = vmatpush1.bf16.xpose.msra.mxu0 %v1671
        %1694 = vmatprep.subr.bf16.mxu0 0
        %1695 = vmatpush1.bf16.xpose.msra.mxu0 %v1674
        %1696 = vmatprep.subr.bf16.mxu0 0
        %1697 = vmatpush1.bf16.xpose.msra.mxu0 %v1677
        %1698 = vmatprep.subr.bf16.mxu0 0
        %1699 = vmatpush1.bf16.xpose.msra.mxu0 %v1680
        %1700 = vmatprep.subr.bf16.mxu0 0
        %1701 = vmatpush1.bf16.xpose.msra.mxu0 %v1683
        %1702 = vmatprep.subr.bf16.mxu0 0
        %1703 = vmatpush1.bf16.xpose.msra.mxu0 %v1686
        %1704 = vmatprep.subr.bf16.mxu0 0
        %1705 = vmatpush1.bf16.xpose.msra.mxu0 0
        %1706 = vmatprep.subr.bf16.mxu0 0
        %1707 = vmatpush1.bf16.xpose.msra.mxu0 0
        %1708 = vmatprep.subr.bf16.mxu0 0
        %1709 = vmatpush1.bf16.xpose.msra.mxu0 0
        %1710 = vmatprep.subr.bf16.mxu0 0
        %1711 = vmatpush1.bf16.xpose.msra.mxu0 0
        %1712 = vmatprep.subr.bf16.mxu0 0
        %1713 = vmatpush1.bf16.xpose.msra.mxu0 0
        %1714 = vmatprep.subr.bf16.mxu0 0
        %1715 = vmatpush1.bf16.xpose.msra.mxu0 0
        %1716 = vmatprep.subr.bf16.mxu0 0
        %1717 = vmatpush1.bf16.xpose.msra.mxu0 0
        %1718 = vmatprep.subr.bf16.mxu0 0
        %1719 = vmatpush1.bf16.xpose.msra.mxu0 0
        %1720 = vmatprep.mubr.bf16.mxu0 0
        %1721 = vmatmul.mubr.bf16.gmra.mrb[0].mxu0 %v1641
        %v1722 = vpop.f32.mrb[0].mxu0
        %v1723 = vadd.f32 %v1169, %v1722
        %v1724 = vpop.f32.mrb[0].mxu0
        %v1725 = vpop.f32.mrb[0].mxu0
        %v1726 = vadd.f32 %v1170, %v1725
        %v1727 = vpop.f32.mrb[0].mxu0
        %1728 = vmatprep.mubr.bf16.mxu0 0
        %1729 = vmatmul.mubr.bf16.gmra.mrb[0].mxu0 %v1644
        %v1730 = vpop.f32.mrb[0].mxu0
        %v1731 = vadd.f32 %v1171, %v1730
        %v1732 = vpop.f32.mrb[0].mxu0
        %v1733 = vpop.f32.mrb[0].mxu0
        %v1734 = vadd.f32 %v1172, %v1733
        %v1735 = vpop.f32.mrb[0].mxu0
        %1736 = vmatprep.mubr.bf16.mxu0 0
        %1737 = vmatmul.mubr.bf16.gmra.mrb[0].mxu0 %v1647
        %v1738 = vpop.f32.mrb[0].mxu0
        %v1739 = vadd.f32 %v1173, %v1738
        %v1740 = vpop.f32.mrb[0].mxu0
        %v1741 = vpop.f32.mrb[0].mxu0
        %v1742 = vadd.f32 %v1174, %v1741
        %v1743 = vpop.f32.mrb[0].mxu0
        %1744 = vmatprep.mubr.bf16.mxu0 0
        %1745 = vmatmul.mubr.bf16.gmra.mrb[0].mxu0 %v1650
        %v1746 = vpop.f32.mrb[0].mxu0
        %v1747 = vadd.f32 %v1175, %v1746
        %v1748 = vpop.f32.mrb[0].mxu0
        %v1749 = vpop.f32.mrb[0].mxu0
        %v1750 = vadd.f32 %v1176, %v1749
        %v1751 = vpop.f32.mrb[0].mxu0
        %1752 = vmatprep.mubr.bf16.mxu0 0
        %1753 = vmatmul.mubr.bf16.gmra.mrb[0].mxu0 %v1653
        %v1754 = vpop.f32.mrb[0].mxu0
        %v1755 = vadd.f32 %v1177, %v1754
        %v1756 = vpop.f32.mrb[0].mxu0
        %v1757 = vpop.f32.mrb[0].mxu0
        %v1758 = vadd.f32 %v1178, %v1757
        %v1759 = vpop.f32.mrb[0].mxu0
        %1760 = vmatprep.mubr.bf16.mxu0 0
        %1761 = vmatmul.mubr.bf16.gmra.mrb[0].mxu0 %v1656
        %v1762 = vpop.f32.mrb[0].mxu0
        %v1763 = vadd.f32 %v1179, %v1762
        %v1764 = vpop.f32.mrb[0].mxu0
        %v1765 = vpop.f32.mrb[0].mxu0
        %v1766 = vadd.f32 %v1180, %v1765
        %v1767 = vpop.f32.mrb[0].mxu0
        %1768 = vmatprep.mubr.bf16.mxu0 0
        %1769 = vmatmul.mubr.bf16.gmra.mrb[0].mxu0 %v1659
        %v1770 = vpop.f32.mrb[0].mxu0
        %v1771 = vadd.f32 %v1181, %v1770
        %v1772 = vpop.f32.mrb[0].mxu0
        %v1773 = vpop.f32.mrb[0].mxu0
        %v1774 = vadd.f32 %v1182, %v1773
        %v1775 = vpop.f32.mrb[0].mxu0
        %1776 = vmatprep.mubr.bf16.mxu0 0
        %1777 = vmatmul.mubr.bf16.gmra.mrb[0].mxu0 %v1662
        %v1778 = vpop.f32.mrb[0].mxu0
        %v1779 = vadd.f32 %v1183, %v1778
        %v1780 = vpop.f32.mrb[0].mxu0
        %v1781 = vpop.f32.mrb[0].mxu0
        %v1782 = vadd.f32 %v1184, %v1781
        %v1783 = vpop.f32.mrb[0].mxu0
        %1784 = vdwg.mxu0
        %1785 = vmax.xlane.f32.xlu0 %v1723
        %v1786 = vpop.xlane.xlu0 %1785
        %1787 = vmax.xlane.f32.xlu0 %v1726
        %v1788 = vpop.xlane.xlu0 %1787
        %1789 = vmax.xlane.f32.xlu0 %v1731
        %v1790 = vpop.xlane.xlu0 %1789
        %1791 = vmax.xlane.f32.xlu0 %v1734
        %v1792 = vpop.xlane.xlu0 %1791
        %1793 = vmax.xlane.f32.xlu0 %v1739
        %v1794 = vpop.xlane.xlu0 %1793
        %1795 = vmax.xlane.f32.xlu0 %v1742
        %v1796 = vpop.xlane.xlu0 %1795
        %1797 = vmax.xlane.f32.xlu0 %v1747
        %v1798 = vpop.xlane.xlu0 %1797
        %1799 = vmax.xlane.f32.xlu0 %v1750
        %v1800 = vpop.xlane.xlu0 %1799
        %1801 = vmax.xlane.f32.xlu0 %v1755
        %v1802 = vpop.xlane.xlu0 %1801
        %1803 = vmax.xlane.f32.xlu0 %v1758
        %v1804 = vpop.xlane.xlu0 %1803
        %1805 = vmax.xlane.f32.xlu0 %v1763
        %v1806 = vpop.xlane.xlu0 %1805
        %1807 = vmax.xlane.f32.xlu0 %v1766
        %v1808 = vpop.xlane.xlu0 %1807
        %1809 = vmax.xlane.f32.xlu0 %v1771
        %v1810 = vpop.xlane.xlu0 %1809
        %1811 = vmax.xlane.f32.xlu0 %v1774
        %v1812 = vpop.xlane.xlu0 %1811
        %1813 = vmax.xlane.f32.xlu0 %v1779
        %v1814 = vpop.xlane.xlu0 %1813
        %1815 = vmax.xlane.f32.xlu0 %v1782
        %v1816 = vpop.xlane.xlu0 %1815
        %v1817 = vsub.f32 %v1723, %v1786
        %v1818 = vsub.f32 %v1726, %v1788
        %v1819 = vsub.f32 %v1731, %v1790
        %v1820 = vsub.f32 %v1734, %v1792
        %v1821 = vsub.f32 %v1739, %v1794
        %v1822 = vsub.f32 %v1742, %v1796
        %v1823 = vsub.f32 %v1747, %v1798
        %v1824 = vsub.f32 %v1750, %v1800
        %v1825 = vsub.f32 %v1755, %v1802
        %v1826 = vsub.f32 %v1758, %v1804
        %v1827 = vsub.f32 %v1763, %v1806
        %v1828 = vsub.f32 %v1766, %v1808
        %v1829 = vsub.f32 %v1771, %v1810
        %v1830 = vsub.f32 %v1774, %v1812
        %v1831 = vsub.f32 %v1779, %v1814
        %v1832 = vsub.f32 %v1782, %v1816
        %v1833 = vmul.f32 %v1817, 1.442695
        %v1834 = vpow.pop %v1833
        %v1835 = vmul.f32 %v1818, 1.442695
        %v1836 = vpow.pop %v1835
        %v1837 = vmul.f32 %v1819, 1.442695
        %v1838 = vpow.pop %v1837
        %v1839 = vmul.f32 %v1820, 1.442695
        %v1840 = vpow.pop %v1839
        %v1841 = vmul.f32 %v1821, 1.442695
        %v1842 = vpow.pop %v1841
        %v1843 = vmul.f32 %v1822, 1.442695
        %v1844 = vpow.pop %v1843
        %v1845 = vmul.f32 %v1823, 1.442695
        %v1846 = vpow.pop %v1845
        %v1847 = vmul.f32 %v1824, 1.442695
        %v1848 = vpow.pop %v1847
        %v1849 = vmul.f32 %v1825, 1.442695
        %v1850 = vpow.pop %v1849
        %v1851 = vmul.f32 %v1826, 1.442695
        %v1852 = vpow.pop %v1851
        %v1853 = vmul.f32 %v1827, 1.442695
        %v1854 = vpow.pop %v1853
        %v1855 = vmul.f32 %v1828, 1.442695
        %v1856 = vpow.pop %v1855
        %v1857 = vmul.f32 %v1829, 1.442695
        %v1858 = vpow.pop %v1857
        %v1859 = vmul.f32 %v1830, 1.442695
        %v1860 = vpow.pop %v1859
        %v1861 = vmul.f32 %v1831, 1.442695
        %v1862 = vpow.pop %v1861
        %v1863 = vmul.f32 %v1832, 1.442695
        %v1864 = vpow.pop %v1863
        %1865 = vadd.xlane.f32.xlu0 %v1834
        %v1866 = vpop.xlane.xlu0 %1865
        %1867 = vadd.xlane.f32.xlu0 %v1836
        %v1868 = vpop.xlane.xlu0 %1867
        %1869 = vadd.xlane.f32.xlu0 %v1838
        %v1870 = vpop.xlane.xlu0 %1869
        %1871 = vadd.xlane.f32.xlu0 %v1840
        %v1872 = vpop.xlane.xlu0 %1871
        %1873 = vadd.xlane.f32.xlu0 %v1842
        %v1874 = vpop.xlane.xlu0 %1873
        %1875 = vadd.xlane.f32.xlu0 %v1844
        %v1876 = vpop.xlane.xlu0 %1875
        %1877 = vadd.xlane.f32.xlu0 %v1846
        %v1878 = vpop.xlane.xlu0 %1877
        %1879 = vadd.xlane.f32.xlu0 %v1848
        %v1880 = vpop.xlane.xlu0 %1879
        %1881 = vadd.xlane.f32.xlu0 %v1850
        %v1882 = vpop.xlane.xlu0 %1881
        %1883 = vadd.xlane.f32.xlu0 %v1852
        %v1884 = vpop.xlane.xlu0 %1883
        %1885 = vadd.xlane.f32.xlu0 %v1854
        %v1886 = vpop.xlane.xlu0 %1885
        %1887 = vadd.xlane.f32.xlu0 %v1856
        %v1888 = vpop.xlane.xlu0 %1887
        %1889 = vadd.xlane.f32.xlu0 %v1858
        %v1890 = vpop.xlane.xlu0 %1889
        %1891 = vadd.xlane.f32.xlu0 %v1860
        %v1892 = vpop.xlane.xlu0 %1891
        %1893 = vadd.xlane.f32.xlu0 %v1862
        %v1894 = vpop.xlane.xlu0 %1893
        %1895 = vadd.xlane.f32.xlu0 %v1864
        %v1896 = vpop.xlane.xlu0 %1895
        %v1897 = vpack.c.bf16 %v1836, %v1834
        %v1898 = vpack.c.bf16 %v1840, %v1838
        %v1899 = vpack.c.bf16 %v1844, %v1842
        %v1900 = vpack.c.bf16 %v1848, %v1846
        %v1901 = vpack.c.bf16 %v1852, %v1850
        %v1902 = vpack.c.bf16 %v1856, %v1854
        %v1903 = vpack.c.bf16 %v1860, %v1858
        %v1904 = vpack.c.bf16 %v1864, %v1862
        %1913 = vrot.lane.b32.xlu0 %v1161, 96
        %v1914 = vpop.permute.xlu0 %1913
        %1915 = vrot.lane.b32.xlu0 %v1162, 96
        %v1916 = vpop.permute.xlu0 %1915
        %1917 = vrot.lane.b32.xlu0 %v1163, 96
        %v1918 = vpop.permute.xlu0 %1917
        %1919 = vrot.lane.b32.xlu0 %v1164, 96
        %v1920 = vpop.permute.xlu0 %1919
        %1921 = vrot.lane.b32.xlu0 %v1165, 96
        %v1922 = vpop.permute.xlu0 %1921
        %1923 = vrot.lane.b32.xlu0 %v1166, 96
        %v1924 = vpop.permute.xlu0 %1923
        %1925 = vrot.lane.b32.xlu0 %v1167, 96
        %v1926 = vpop.permute.xlu0 %1925
        %1927 = vrot.lane.b32.xlu0 %v1168, 96
        %v1928 = vpop.permute.xlu0 %1927
        %1937 = vmatprep.subr.bf16.mxu0 0
        %1938 = vmatpush1.bf16.msra.mxu0 %v1914
        %1939 = vmatprep.subr.bf16.mxu0 0
        %1940 = vmatpush1.bf16.msra.mxu0 %v1916
        %1941 = vmatprep.subr.bf16.mxu0 0
        %1942 = vmatpush1.bf16.msra.mxu0 %v1918
        %1943 = vmatprep.subr.bf16.mxu0 0
        %1944 = vmatpush1.bf16.msra.mxu0 %v1920
        %1945 = vmatprep.subr.bf16.mxu0 0
        %1946 = vmatpush1.bf16.msra.mxu0 %v1922
        %1947 = vmatprep.subr.bf16.mxu0 0
        %1948 = vmatpush1.bf16.msra.mxu0 %v1924
        %1949 = vmatprep.subr.bf16.mxu0 0
        %1950 = vmatpush1.bf16.msra.mxu0 %v1926
        %1951 = vmatprep.subr.bf16.mxu0 0
        %1952 = vmatpush1.bf16.msra.mxu0 %v1928
        %1953 = vmatprep.subr.bf16.mxu0 0
        %1954 = vmatpush1.bf16.msra.mxu0 0
        %1955 = vmatprep.subr.bf16.mxu0 0
        %1956 = vmatpush1.bf16.msra.mxu0 0
        %1957 = vmatprep.subr.bf16.mxu0 0
        %1958 = vmatpush1.bf16.msra.mxu0 0
        %1959 = vmatprep.subr.bf16.mxu0 0
        %1960 = vmatpush1.bf16.msra.mxu0 0
        %1961 = vmatprep.subr.bf16.mxu0 0
        %1962 = vmatpush1.bf16.msra.mxu0 0
        %1963 = vmatprep.subr.bf16.mxu0 0
        %1964 = vmatpush1.bf16.msra.mxu0 0
        %1965 = vmatprep.subr.bf16.mxu0 0
        %1966 = vmatpush1.bf16.msra.mxu0 0
        %1967 = vmatprep.subr.bf16.mxu0 0
        %1968 = vmatpush1.bf16.msra.mxu0 0
        %1969 = vmatprep.mubr.bf16.mxu0 0
        %1970 = vmatmul.mubr.bf16.gmra.mrb[0].mxu0 %v1897
        %v1971 = vpop.f32.mrb[0].mxu0
        %v1972 = vadd.f32 0.0, %v1971
        %v1973 = vpop.f32.mrb[0].mxu0
        %v1974 = vpop.f32.mrb[0].mxu0
        %v1975 = vadd.f32 0.0, %v1974
        %v1976 = vpop.f32.mrb[0].mxu0
        %1977 = vmatprep.mubr.bf16.mxu0 0
        %1978 = vmatmul.mubr.bf16.gmra.mrb[0].mxu0 %v1898
        %v1979 = vpop.f32.mrb[0].mxu0
        %v1980 = vadd.f32 0.0, %v1979
        %v1981 = vpop.f32.mrb[0].mxu0
        %v1982 = vpop.f32.mrb[0].mxu0
        %v1983 = vadd.f32 0.0, %v1982
        %v1984 = vpop.f32.mrb[0].mxu0
        %1985 = vmatprep.mubr.bf16.mxu0 0
        %1986 = vmatmul.mubr.bf16.gmra.mrb[0].mxu0 %v1899
        %v1987 = vpop.f32.mrb[0].mxu0
        %v1988 = vadd.f32 0.0, %v1987
        %v1989 = vpop.f32.mrb[0].mxu0
        %v1990 = vpop.f32.mrb[0].mxu0
        %v1991 = vadd.f32 0.0, %v1990
        %v1992 = vpop.f32.mrb[0].mxu0
        %1993 = vmatprep.mubr.bf16.mxu0 0
        %1994 = vmatmul.mubr.bf16.gmra.mrb[0].mxu0 %v1900
        %v1995 = vpop.f32.mrb[0].mxu0
        %v1996 = vadd.f32 0.0, %v1995
        %v1997 = vpop.f32.mrb[0].mxu0
        %v1998 = vpop.f32.mrb[0].mxu0
        %v1999 = vadd.f32 0.0, %v1998
        %v2000 = vpop.f32.mrb[0].mxu0
        %2001 = vmatprep.mubr.bf16.mxu0 0
        %2002 = vmatmul.mubr.bf16.gmra.mrb[0].mxu0 %v1901
        %v2003 = vpop.f32.mrb[0].mxu0
        %v2004 = vadd.f32 0.0, %v2003
        %v2005 = vpop.f32.mrb[0].mxu0
        %v2006 = vpop.f32.mrb[0].mxu0
        %v2007 = vadd.f32 0.0, %v2006
        %v2008 = vpop.f32.mrb[0].mxu0
        %2009 = vmatprep.mubr.bf16.mxu0 0
        %2010 = vmatmul.mubr.bf16.gmra.mrb[0].mxu0 %v1902
        %v2011 = vpop.f32.mrb[0].mxu0
        %v2012 = vadd.f32 0.0, %v2011
        %v2013 = vpop.f32.mrb[0].mxu0
        %v2014 = vpop.f32.mrb[0].mxu0
        %v2015 = vadd.f32 0.0, %v2014
        %v2016 = vpop.f32.mrb[0].mxu0
        %2017 = vmatprep.mubr.bf16.mxu0 0
        %2018 = vmatmul.mubr.bf16.gmra.mrb[0].mxu0 %v1903
        %v2019 = vpop.f32.mrb[0].mxu0
        %v2020 = vadd.f32 0.0, %v2019
        %v2021 = vpop.f32.mrb[0].mxu0
        %v2022 = vpop.f32.mrb[0].mxu0
        %v2023 = vadd.f32 0.0, %v2022
        %v2024 = vpop.f32.mrb[0].mxu0
        %2025 = vmatprep.mubr.bf16.mxu0 0
        %2026 = vmatmul.mubr.bf16.gmra.mrb[0].mxu0 %v1904
        %v2027 = vpop.f32.mrb[0].mxu0
        %v2028 = vadd.f32 0.0, %v2027
        %v2029 = vpop.f32.mrb[0].mxu0
        %v2030 = vpop.f32.mrb[0].mxu0
        %v2031 = vadd.f32 0.0, %v2030
        %v2032 = vpop.f32.mrb[0].mxu0
        %2033 = vdwg.mxu0
        %v2034 = vrcp.pop %v1866
        %v2035 = vrcp.pop %v1868
        %v2036 = vrcp.pop %v1870
        %v2037 = vrcp.pop %v1872
        %v2038 = vrcp.pop %v1874
        %v2039 = vrcp.pop %v1876
        %v2040 = vrcp.pop %v1878
        %v2041 = vrcp.pop %v1880
        %v2042 = vrcp.pop %v1882
        %v2043 = vrcp.pop %v1884
        %v2044 = vrcp.pop %v1886
        %v2045 = vrcp.pop %v1888
        %v2046 = vrcp.pop %v1890
        %v2047 = vrcp.pop %v1892
        %v2048 = vrcp.pop %v1894
        %v2049 = vrcp.pop %v1896
        %v2050 = vmul.f32 %v1972, %v2034
        %v2051 = vmul.f32 %v1975, %v2035
        %v2052 = vmul.f32 %v1980, %v2036
        %v2053 = vmul.f32 %v1983, %v2037
        %v2054 = vmul.f32 %v1988, %v2038
        %v2055 = vmul.f32 %v1991, %v2039
        %v2056 = vmul.f32 %v1996, %v2040
        %v2057 = vmul.f32 %v1999, %v2041
        %v2058 = vmul.f32 %v2004, %v2042
        %v2059 = vmul.f32 %v2007, %v2043
        %v2060 = vmul.f32 %v2012, %v2044
        %v2061 = vmul.f32 %v2015, %v2045
        %v2062 = vmul.f32 %v2020, %v2046
        %v2063 = vmul.f32 %v2023, %v2047
        %v2064 = vmul.f32 %v2028, %v2048
        %v2065 = vmul.f32 %v2031, %v2049
        %v2066 = vpack.c.bf16 %v2051, %v2050
        %v2067 = vpack.c.bf16 %v2053, %v2052
        %v2068 = vpack.c.bf16 %v2055, %v2054
        %v2069 = vpack.c.bf16 %v2057, %v2056
        %v2070 = vpack.c.bf16 %v2059, %v2058
        %v2071 = vpack.c.bf16 %v2061, %v2060
        %v2072 = vpack.c.bf16 %v2063, %v2062
        %v2073 = vpack.c.bf16 %v2065, %v2064
        %v2074 = vld [vmem:[#allocation7 + $0x10] sm:$0xf]
        %v2075 = vld [vmem:[#allocation7 + $0x14] sm:$0xf]
        %v2076 = vld [vmem:[#allocation7 + $0x18] sm:$0xf]
        %v2077 = vld [vmem:[#allocation7 + $0x1c] sm:$0xf]
        %v2082 = vunpack.c.l.b16 %v2074
        %v2083 = vunpack.c.l.b16 %v2075
        %v2084 = vunpack.c.l.b16 %v2076
        %v2085 = vunpack.c.l.b16 %v2077
        %v2086 = vpack.c.b16 %v2083, %v2082
        %v2087 = vpack.c.b16 %v2085, %v2084
        %v2091 = vsel %vm1185, %v2066, 0
        %v2094 = vsel %vm1185, %v2067, 0
        %v2097 = vsel %vm1185, %v2068, 0
        %v2100 = vsel %vm1185, %v2069, 0
        %v2103 = vsel %vm1185, %v2070, 0
        %v2106 = vsel %vm1185, %v2071, 0
        %v2109 = vsel %vm1185, %v2072, 0
        %v2112 = vsel %vm1185, %v2073, 0
        %2114 = vmatprep.subr.bf16.mxu0 0
        %2115 = vmatpush1.bf16.msra.mxu0 %v2086
        %2116 = vmatprep.subr.bf16.mxu0 0
        %2117 = vmatpush1.bf16.msra.mxu0 %v2087
        %2118 = vmatprep.subr.bf16.mxu0 0
        %2119 = vmatpush1.bf16.msra.mxu0 0
        %2120 = vmatprep.subr.bf16.mxu0 0
        %2121 = vmatpush1.bf16.msra.mxu0 0
        %2122 = vmatprep.subr.bf16.mxu0 0
        %2123 = vmatpush1.bf16.msra.mxu0 0
        %2124 = vmatprep.subr.bf16.mxu0 0
        %2125 = vmatpush1.bf16.msra.mxu0 0
        %2126 = vmatprep.subr.bf16.mxu0 0
        %2127 = vmatpush1.bf16.msra.mxu0 0
        %2128 = vmatprep.subr.bf16.mxu0 0
        %2129 = vmatpush1.bf16.msra.mxu0 0
        %2130 = vmatprep.subr.bf16.mxu0 0
        %2131 = vmatpush1.bf16.msra.mxu0 0
        %2132 = vmatprep.subr.bf16.mxu0 0
        %2133 = vmatpush1.bf16.msra.mxu0 0
        %2134 = vmatprep.subr.bf16.mxu0 0
        %2135 = vmatpush1.bf16.msra.mxu0 0
        %2136 = vmatprep.subr.bf16.mxu0 0
        %2137 = vmatpush1.bf16.msra.mxu0 0
        %2138 = vmatprep.subr.bf16.mxu0 0
        %2139 = vmatpush1.bf16.msra.mxu0 0
        %2140 = vmatprep.subr.bf16.mxu0 0
        %2141 = vmatpush1.bf16.msra.mxu0 0
        %2142 = vmatprep.subr.bf16.mxu0 0
        %2143 = vmatpush1.bf16.msra.mxu0 0
        %2144 = vmatprep.subr.bf16.mxu0 0
        %2145 = vmatpush1.bf16.msra.mxu0 0
        %2146 = vmatprep.mubr.bf16.mxu0 0
        %2147 = vmatmul.mubr.bf16.gmra.mrb[0].mxu0 %v2091
        %v2148 = vpop.f32.mrb[0].mxu0
        %v2149 = vadd.f32 0.0, %v2148
        %v2150 = vpop.f32.mrb[0].mxu0
        %v2151 = vpop.f32.mrb[0].mxu0
        %v2152 = vadd.f32 0.0, %v2151
        %v2153 = vpop.f32.mrb[0].mxu0
        %2154 = vmatprep.mubr.bf16.mxu0 0
        %2155 = vmatmul.mubr.bf16.gmra.mrb[0].mxu0 %v2094
        %v2156 = vpop.f32.mrb[0].mxu0
        %v2157 = vadd.f32 0.0, %v2156
        %v2158 = vpop.f32.mrb[0].mxu0
        %v2159 = vpop.f32.mrb[0].mxu0
        %v2160 = vadd.f32 0.0, %v2159
        %v2161 = vpop.f32.mrb[0].mxu0
        %2162 = vmatprep.mubr.bf16.mxu0 0
        %2163 = vmatmul.mubr.bf16.gmra.mrb[0].mxu0 %v2097
        %v2164 = vpop.f32.mrb[0].mxu0
        %v2165 = vadd.f32 0.0, %v2164
        %v2166 = vpop.f32.mrb[0].mxu0
        %v2167 = vpop.f32.mrb[0].mxu0
        %v2168 = vadd.f32 0.0, %v2167
        %v2169 = vpop.f32.mrb[0].mxu0
        %2170 = vmatprep.mubr.bf16.mxu0 0
        %2171 = vmatmul.mubr.bf16.gmra.mrb[0].mxu0 %v2100
        %v2172 = vpop.f32.mrb[0].mxu0
        %v2173 = vadd.f32 0.0, %v2172
        %v2174 = vpop.f32.mrb[0].mxu0
        %v2175 = vpop.f32.mrb[0].mxu0
        %v2176 = vadd.f32 0.0, %v2175
        %v2177 = vpop.f32.mrb[0].mxu0
        %2178 = vmatprep.mubr.bf16.mxu0 0
        %2179 = vmatmul.mubr.bf16.gmra.mrb[0].mxu0 %v2103
        %v2180 = vpop.f32.mrb[0].mxu0
        %v2181 = vadd.f32 0.0, %v2180
        %v2182 = vpop.f32.mrb[0].mxu0
        %v2183 = vpop.f32.mrb[0].mxu0
        %v2184 = vadd.f32 0.0, %v2183
        %v2185 = vpop.f32.mrb[0].mxu0
        %2186 = vmatprep.mubr.bf16.mxu0 0
        %2187 = vmatmul.mubr.bf16.gmra.mrb[0].mxu0 %v2106
        %v2188 = vpop.f32.mrb[0].mxu0
        %v2189 = vadd.f32 0.0, %v2188
        %v2190 = vpop.f32.mrb[0].mxu0
        %v2191 = vpop.f32.mrb[0].mxu0
        %v2192 = vadd.f32 0.0, %v2191
        %v2193 = vpop.f32.mrb[0].mxu0
        %2194 = vmatprep.mubr.bf16.mxu0 0
        %2195 = vmatmul.mubr.bf16.gmra.mrb[0].mxu0 %v2109
        %v2196 = vpop.f32.mrb[0].mxu0
        %v2197 = vadd.f32 0.0, %v2196
        %v2198 = vpop.f32.mrb[0].mxu0
        %v2199 = vpop.f32.mrb[0].mxu0
        %v2200 = vadd.f32 0.0, %v2199
        %v2201 = vpop.f32.mrb[0].mxu0
        %2202 = vmatprep.mubr.bf16.mxu0 0
        %2203 = vmatmul.mubr.bf16.gmra.mrb[0].mxu0 %v2112
        %v2204 = vpop.f32.mrb[0].mxu0
        %v2205 = vadd.f32 0.0, %v2204
        %v2206 = vpop.f32.mrb[0].mxu0
        %v2207 = vpop.f32.mrb[0].mxu0
        %v2208 = vadd.f32 0.0, %v2207
        %v2209 = vpop.f32.mrb[0].mxu0
        %2210 = vdwg.mxu0
        %v2215 = vunpack.c.l.b16 %v1588
        %v2216 = vunpack.c.l.b16 %v1589
        %v2217 = vunpack.c.l.b16 %v1590
        %v2218 = vunpack.c.l.b16 %v1591
        %v2219 = vpack.c.b16 %v2216, %v2215
        %v2220 = vpack.c.b16 %v2218, %v2217
        %v2224 = vsel %vm1185, %v1580, 0
        %v2227 = vsel %vm1185, %v1581, 0
        %v2230 = vsel %vm1185, %v1582, 0
        %v2233 = vsel %vm1185, %v1583, 0
        %v2236 = vsel %vm1185, %v1584, 0
        %v2239 = vsel %vm1185, %v1585, 0
        %v2242 = vsel %vm1185, %v1586, 0
        %v2245 = vsel %vm1185, %v1587, 0
        %2247 = vmatprep.subr.bf16.mxu0 0
        %2248 = vmatpush1.bf16.msra.mxu0 %v2219
        %2249 = vmatprep.subr.bf16.mxu0 0
        %2250 = vmatpush1.bf16.msra.mxu0 %v2220
        %2251 = vmatprep.subr.bf16.mxu0 0
        %2252 = vmatpush1.bf16.msra.mxu0 0
        %2253 = vmatprep.subr.bf16.mxu0 0
        %2254 = vmatpush1.bf16.msra.mxu0 0
        %2255 = vmatprep.subr.bf16.mxu0 0
        %2256 = vmatpush1.bf16.msra.mxu0 0
        %2257 = vmatprep.subr.bf16.mxu0 0
        %2258 = vmatpush1.bf16.msra.mxu0 0
        %2259 = vmatprep.subr.bf16.mxu0 0
        %2260 = vmatpush1.bf16.msra.mxu0 0
        %2261 = vmatprep.subr.bf16.mxu0 0
        %2262 = vmatpush1.bf16.msra.mxu0 0
        %2263 = vmatprep.subr.bf16.mxu0 0
        %2264 = vmatpush1.bf16.msra.mxu0 0
        %2265 = vmatprep.subr.bf16.mxu0 0
        %2266 = vmatpush1.bf16.msra.mxu0 0
        %2267 = vmatprep.subr.bf16.mxu0 0
        %2268 = vmatpush1.bf16.msra.mxu0 0
        %2269 = vmatprep.subr.bf16.mxu0 0
        %2270 = vmatpush1.bf16.msra.mxu0 0
        %2271 = vmatprep.subr.bf16.mxu0 0
        %2272 = vmatpush1.bf16.msra.mxu0 0
        %2273 = vmatprep.subr.bf16.mxu0 0
        %2274 = vmatpush1.bf16.msra.mxu0 0
        %2275 = vmatprep.subr.bf16.mxu0 0
        %2276 = vmatpush1.bf16.msra.mxu0 0
        %2277 = vmatprep.subr.bf16.mxu0 0
        %2278 = vmatpush1.bf16.msra.mxu0 0
        %2279 = vmatprep.mubr.bf16.mxu0 0
        %2280 = vmatmul.mubr.bf16.gmra.mrb[0].mxu0 %v2224
        %v2281 = vpop.f32.mrb[0].mxu0
        %v2282 = vadd.f32 %v2149, %v2281
        %v2283 = vpop.f32.mrb[0].mxu0
        %v2284 = vpop.f32.mrb[0].mxu0
        %v2285 = vadd.f32 %v2152, %v2284
        %v2286 = vpop.f32.mrb[0].mxu0
        %2287 = vmatprep.mubr.bf16.mxu0 0
        %2288 = vmatmul.mubr.bf16.gmra.mrb[0].mxu0 %v2227
        %v2289 = vpop.f32.mrb[0].mxu0
        %v2290 = vadd.f32 %v2157, %v2289
        %v2291 = vpop.f32.mrb[0].mxu0
        %v2292 = vpop.f32.mrb[0].mxu0
        %v2293 = vadd.f32 %v2160, %v2292
        %v2294 = vpop.f32.mrb[0].mxu0
        %2295 = vmatprep.mubr.bf16.mxu0 0
        %2296 = vmatmul.mubr.bf16.gmra.mrb[0].mxu0 %v2230
        %v2297 = vpop.f32.mrb[0].mxu0
        %v2298 = vadd.f32 %v2165, %v2297
        %v2299 = vpop.f32.mrb[0].mxu0
        %v2300 = vpop.f32.mrb[0].mxu0
        %v2301 = vadd.f32 %v2168, %v2300
        %v2302 = vpop.f32.mrb[0].mxu0
        %2303 = vmatprep.mubr.bf16.mxu0 0
        %2304 = vmatmul.mubr.bf16.gmra.mrb[0].mxu0 %v2233
        %v2305 = vpop.f32.mrb[0].mxu0
        %v2306 = vadd.f32 %v2173, %v2305
        %v2307 = vpop.f32.mrb[0].mxu0
        %v2308 = vpop.f32.mrb[0].mxu0
        %v2309 = vadd.f32 %v2176, %v2308
        %v2310 = vpop.f32.mrb[0].mxu0
        %2311 = vmatprep.mubr.bf16.mxu0 0
        %2312 = vmatmul.mubr.bf16.gmra.mrb[0].mxu0 %v2236
        %v2313 = vpop.f32.mrb[0].mxu0
        %v2314 = vadd.f32 %v2181, %v2313
        %v2315 = vpop.f32.mrb[0].mxu0
        %v2316 = vpop.f32.mrb[0].mxu0
        %v2317 = vadd.f32 %v2184, %v2316
        %v2318 = vpop.f32.mrb[0].mxu0
        %2319 = vmatprep.mubr.bf16.mxu0 0
        %2320 = vmatmul.mubr.bf16.gmra.mrb[0].mxu0 %v2239
        %v2321 = vpop.f32.mrb[0].mxu0
        %v2322 = vadd.f32 %v2189, %v2321
        %v2323 = vpop.f32.mrb[0].mxu0
        %v2324 = vpop.f32.mrb[0].mxu0
        %v2325 = vadd.f32 %v2192, %v2324
        %v2326 = vpop.f32.mrb[0].mxu0
        %2327 = vmatprep.mubr.bf16.mxu0 0
        %2328 = vmatmul.mubr.bf16.gmra.mrb[0].mxu0 %v2242
        %v2329 = vpop.f32.mrb[0].mxu0
        %v2330 = vadd.f32 %v2197, %v2329
        %v2331 = vpop.f32.mrb[0].mxu0
        %v2332 = vpop.f32.mrb[0].mxu0
        %v2333 = vadd.f32 %v2200, %v2332
        %v2334 = vpop.f32.mrb[0].mxu0
        %2335 = vmatprep.mubr.bf16.mxu0 0
        %2336 = vmatmul.mubr.bf16.gmra.mrb[0].mxu0 %v2245
        %v2337 = vpop.f32.mrb[0].mxu0
        %v2338 = vadd.f32 %v2205, %v2337
        %v2339 = vpop.f32.mrb[0].mxu0
        %v2340 = vpop.f32.mrb[0].mxu0
        %v2341 = vadd.f32 %v2208, %v2340
        %v2342 = vpop.f32.mrb[0].mxu0
        %2343 = vdwg.mxu0
        %2344 = vrot.lane.b32.xlu0 %v1097, 64
        %v2345 = vpop.permute.xlu0 %2344
        %2346 = vrot.lane.b32.xlu0 %v1098, 64
        %v2347 = vpop.permute.xlu0 %2346
        %2348 = vrot.lane.b32.xlu0 %v1099, 64
        %v2349 = vpop.permute.xlu0 %2348
        %2350 = vrot.lane.b32.xlu0 %v1100, 64
        %v2351 = vpop.permute.xlu0 %2350
        %2352 = vrot.lane.b32.xlu0 %v1101, 64
        %v2353 = vpop.permute.xlu0 %2352
        %2354 = vrot.lane.b32.xlu0 %v1102, 64
        %v2355 = vpop.permute.xlu0 %2354
        %2356 = vrot.lane.b32.xlu0 %v1103, 64
        %v2357 = vpop.permute.xlu0 %2356
        %2358 = vrot.lane.b32.xlu0 %v1104, 64
        %v2359 = vpop.permute.xlu0 %2358
        %2360 = vrot.lane.b32.xlu0 %v1153, 64
        %v2361 = vpop.permute.xlu0 %2360
        %2362 = vrot.lane.b32.xlu0 %v1154, 64
        %v2363 = vpop.permute.xlu0 %2362
        %2364 = vrot.lane.b32.xlu0 %v1155, 64
        %v2365 = vpop.permute.xlu0 %2364
        %2366 = vrot.lane.b32.xlu0 %v1156, 64
        %v2367 = vpop.permute.xlu0 %2366
        %2368 = vrot.lane.b32.xlu0 %v1157, 64
        %v2369 = vpop.permute.xlu0 %2368
        %2370 = vrot.lane.b32.xlu0 %v1158, 64
        %v2371 = vpop.permute.xlu0 %2370
        %2372 = vrot.lane.b32.xlu0 %v1159, 64
        %v2373 = vpop.permute.xlu0 %2372
        %2374 = vrot.lane.b32.xlu0 %v1160, 64
        %v2375 = vpop.permute.xlu0 %2374
        %v2377 = vsel %vm1185, %v2345, 0
        %v2380 = vsel %vm1185, %v2347, 0
        %v2383 = vsel %vm1185, %v2349, 0
        %v2386 = vsel %vm1185, %v2351, 0
        %v2389 = vsel %vm1185, %v2353, 0
        %v2392 = vsel %vm1185, %v2355, 0
        %v2395 = vsel %vm1185, %v2357, 0
        %v2398 = vsel %vm1185, %v2359, 0
        %v2401 = vsel %vm1185, %v2361, 0
        %v2404 = vsel %vm1185, %v2363, 0
        %v2407 = vsel %vm1185, %v2365, 0
        %v2410 = vsel %vm1185, %v2367, 0
        %v2413 = vsel %vm1185, %v2369, 0
        %v2416 = vsel %vm1185, %v2371, 0
        %v2419 = vsel %vm1185, %v2373, 0
        %v2422 = vsel %vm1185, %v2375, 0
        %2424 = vmatprep.subr.bf16.mxu0 0
        %2425 = vmatpush1.bf16.xpose.msra.mxu0 %v2401
        %2426 = vmatprep.subr.bf16.mxu0 0
        %2427 = vmatpush1.bf16.xpose.msra.mxu0 %v2404
        %2428 = vmatprep.subr.bf16.mxu0 0
        %2429 = vmatpush1.bf16.xpose.msra.mxu0 %v2407
        %2430 = vmatprep.subr.bf16.mxu0 0
        %2431 = vmatpush1.bf16.xpose.msra.mxu0 %v2410
        %2432 = vmatprep.subr.bf16.mxu0 0
        %2433 = vmatpush1.bf16.xpose.msra.mxu0 %v2413
        %2434 = vmatprep.subr.bf16.mxu0 0
        %2435 = vmatpush1.bf16.xpose.msra.mxu0 %v2416
        %2436 = vmatprep.subr.bf16.mxu0 0
        %2437 = vmatpush1.bf16.xpose.msra.mxu0 %v2419
        %2438 = vmatprep.subr.bf16.mxu0 0
        %2439 = vmatpush1.bf16.xpose.msra.mxu0 %v2422
        %2440 = vmatprep.subr.bf16.mxu0 0
        %2441 = vmatpush1.bf16.xpose.msra.mxu0 0
        %2442 = vmatprep.subr.bf16.mxu0 0
        %2443 = vmatpush1.bf16.xpose.msra.mxu0 0
        %2444 = vmatprep.subr.bf16.mxu0 0
        %2445 = vmatpush1.bf16.xpose.msra.mxu0 0
        %2446 = vmatprep.subr.bf16.mxu0 0
        %2447 = vmatpush1.bf16.xpose.msra.mxu0 0
        %2448 = vmatprep.subr.bf16.mxu0 0
        %2449 = vmatpush1.bf16.xpose.msra.mxu0 0
        %2450 = vmatprep.subr.bf16.mxu0 0
        %2451 = vmatpush1.bf16.xpose.msra.mxu0 0
        %2452 = vmatprep.subr.bf16.mxu0 0
        %2453 = vmatpush1.bf16.xpose.msra.mxu0 0
        %2454 = vmatprep.subr.bf16.mxu0 0
        %2455 = vmatpush1.bf16.xpose.msra.mxu0 0
        %2456 = vmatprep.mubr.bf16.mxu0 0
        %2457 = vmatmul.mubr.bf16.gmra.mrb[0].mxu0 %v2377
        %v2458 = vpop.f32.mrb[0].mxu0
        %v2459 = vadd.f32 %v1169, %v2458
        %v2460 = vpop.f32.mrb[0].mxu0
        %v2461 = vpop.f32.mrb[0].mxu0
        %v2462 = vadd.f32 %v1170, %v2461
        %v2463 = vpop.f32.mrb[0].mxu0
        %2464 = vmatprep.mubr.bf16.mxu0 0
        %2465 = vmatmul.mubr.bf16.gmra.mrb[0].mxu0 %v2380
        %v2466 = vpop.f32.mrb[0].mxu0
        %v2467 = vadd.f32 %v1171, %v2466
        %v2468 = vpop.f32.mrb[0].mxu0
        %v2469 = vpop.f32.mrb[0].mxu0
        %v2470 = vadd.f32 %v1172, %v2469
        %v2471 = vpop.f32.mrb[0].mxu0
        %2472 = vmatprep.mubr.bf16.mxu0 0
        %2473 = vmatmul.mubr.bf16.gmra.mrb[0].mxu0 %v2383
        %v2474 = vpop.f32.mrb[0].mxu0
        %v2475 = vadd.f32 %v1173, %v2474
        %v2476 = vpop.f32.mrb[0].mxu0
        %v2477 = vpop.f32.mrb[0].mxu0
        %v2478 = vadd.f32 %v1174, %v2477
        %v2479 = vpop.f32.mrb[0].mxu0
        %2480 = vmatprep.mubr.bf16.mxu0 0
        %2481 = vmatmul.mubr.bf16.gmra.mrb[0].mxu0 %v2386
        %v2482 = vpop.f32.mrb[0].mxu0
        %v2483 = vadd.f32 %v1175, %v2482
        %v2484 = vpop.f32.mrb[0].mxu0
        %v2485 = vpop.f32.mrb[0].mxu0
        %v2486 = vadd.f32 %v1176, %v2485
        %v2487 = vpop.f32.mrb[0].mxu0
        %2488 = vmatprep.mubr.bf16.mxu0 0
        %2489 = vmatmul.mubr.bf16.gmra.mrb[0].mxu0 %v2389
        %v2490 = vpop.f32.mrb[0].mxu0
        %v2491 = vadd.f32 %v1177, %v2490
        %v2492 = vpop.f32.mrb[0].mxu0
        %v2493 = vpop.f32.mrb[0].mxu0
        %v2494 = vadd.f32 %v1178, %v2493
        %v2495 = vpop.f32.mrb[0].mxu0
        %2496 = vmatprep.mubr.bf16.mxu0 0
        %2497 = vmatmul.mubr.bf16.gmra.mrb[0].mxu0 %v2392
        %v2498 = vpop.f32.mrb[0].mxu0
        %v2499 = vadd.f32 %v1179, %v2498
        %v2500 = vpop.f32.mrb[0].mxu0
        %v2501 = vpop.f32.mrb[0].mxu0
        %v2502 = vadd.f32 %v1180, %v2501
        %v2503 = vpop.f32.mrb[0].mxu0
        %2504 = vmatprep.mubr.bf16.mxu0 0
        %2505 = vmatmul.mubr.bf16.gmra.mrb[0].mxu0 %v2395
        %v2506 = vpop.f32.mrb[0].mxu0
        %v2507 = vadd.f32 %v1181, %v2506
        %v2508 = vpop.f32.mrb[0].mxu0
        %v2509 = vpop.f32.mrb[0].mxu0
        %v2510 = vadd.f32 %v1182, %v2509
        %v2511 = vpop.f32.mrb[0].mxu0
        %2512 = vmatprep.mubr.bf16.mxu0 0
        %2513 = vmatmul.mubr.bf16.gmra.mrb[0].mxu0 %v2398
        %v2514 = vpop.f32.mrb[0].mxu0
        %v2515 = vadd.f32 %v1183, %v2514
        %v2516 = vpop.f32.mrb[0].mxu0
        %v2517 = vpop.f32.mrb[0].mxu0
        %v2518 = vadd.f32 %v1184, %v2517
        %v2519 = vpop.f32.mrb[0].mxu0
        %2520 = vdwg.mxu0
        %2521 = vmax.xlane.f32.xlu0 %v2459
        %v2522 = vpop.xlane.xlu0 %2521
        %2523 = vmax.xlane.f32.xlu0 %v2462
        %v2524 = vpop.xlane.xlu0 %2523
        %2525 = vmax.xlane.f32.xlu0 %v2467
        %v2526 = vpop.xlane.xlu0 %2525
        %2527 = vmax.xlane.f32.xlu0 %v2470
        %v2528 = vpop.xlane.xlu0 %2527
        %2529 = vmax.xlane.f32.xlu0 %v2475
        %v2530 = vpop.xlane.xlu0 %2529
        %2531 = vmax.xlane.f32.xlu0 %v2478
        %v2532 = vpop.xlane.xlu0 %2531
        %2533 = vmax.xlane.f32.xlu0 %v2483
        %v2534 = vpop.xlane.xlu0 %2533
        %2535 = vmax.xlane.f32.xlu0 %v2486
        %v2536 = vpop.xlane.xlu0 %2535
        %2537 = vmax.xlane.f32.xlu0 %v2491
        %v2538 = vpop.xlane.xlu0 %2537
        %2539 = vmax.xlane.f32.xlu0 %v2494
        %v2540 = vpop.xlane.xlu0 %2539
        %2541 = vmax.xlane.f32.xlu0 %v2499
        %v2542 = vpop.xlane.xlu0 %2541
        %2543 = vmax.xlane.f32.xlu0 %v2502
        %v2544 = vpop.xlane.xlu0 %2543
        %2545 = vmax.xlane.f32.xlu0 %v2507
        %v2546 = vpop.xlane.xlu0 %2545
        %2547 = vmax.xlane.f32.xlu0 %v2510
        %v2548 = vpop.xlane.xlu0 %2547
        %2549 = vmax.xlane.f32.xlu0 %v2515
        %v2550 = vpop.xlane.xlu0 %2549
        %2551 = vmax.xlane.f32.xlu0 %v2518
        %v2552 = vpop.xlane.xlu0 %2551
        %v2553 = vsub.f32 %v2459, %v2522
        %v2554 = vsub.f32 %v2462, %v2524
        %v2555 = vsub.f32 %v2467, %v2526
        %v2556 = vsub.f32 %v2470, %v2528
        %v2557 = vsub.f32 %v2475, %v2530
        %v2558 = vsub.f32 %v2478, %v2532
        %v2559 = vsub.f32 %v2483, %v2534
        %v2560 = vsub.f32 %v2486, %v2536
        %v2561 = vsub.f32 %v2491, %v2538
        %v2562 = vsub.f32 %v2494, %v2540
        %v2563 = vsub.f32 %v2499, %v2542
        %v2564 = vsub.f32 %v2502, %v2544
        %v2565 = vsub.f32 %v2507, %v2546
        %v2566 = vsub.f32 %v2510, %v2548
        %v2567 = vsub.f32 %v2515, %v2550
        %v2568 = vsub.f32 %v2518, %v2552
        %v2569 = vmul.f32 %v2553, 1.442695
        %v2570 = vpow.pop %v2569
        %v2571 = vmul.f32 %v2554, 1.442695
        %v2572 = vpow.pop %v2571
        %v2573 = vmul.f32 %v2555, 1.442695
        %v2574 = vpow.pop %v2573
        %v2575 = vmul.f32 %v2556, 1.442695
        %v2576 = vpow.pop %v2575
        %v2577 = vmul.f32 %v2557, 1.442695
        %v2578 = vpow.pop %v2577
        %v2579 = vmul.f32 %v2558, 1.442695
        %v2580 = vpow.pop %v2579
        %v2581 = vmul.f32 %v2559, 1.442695
        %v2582 = vpow.pop %v2581
        %v2583 = vmul.f32 %v2560, 1.442695
        %v2584 = vpow.pop %v2583
        %v2585 = vmul.f32 %v2561, 1.442695
        %v2586 = vpow.pop %v2585
        %v2587 = vmul.f32 %v2562, 1.442695
        %v2588 = vpow.pop %v2587
        %v2589 = vmul.f32 %v2563, 1.442695
        %v2590 = vpow.pop %v2589
        %v2591 = vmul.f32 %v2564, 1.442695
        %v2592 = vpow.pop %v2591
        %v2593 = vmul.f32 %v2565, 1.442695
        %v2594 = vpow.pop %v2593
        %v2595 = vmul.f32 %v2566, 1.442695
        %v2596 = vpow.pop %v2595
        %v2597 = vmul.f32 %v2567, 1.442695
        %v2598 = vpow.pop %v2597
        %v2599 = vmul.f32 %v2568, 1.442695
        %v2600 = vpow.pop %v2599
        %2601 = vadd.xlane.f32.xlu0 %v2570
        %v2602 = vpop.xlane.xlu0 %2601
        %2603 = vadd.xlane.f32.xlu0 %v2572
        %v2604 = vpop.xlane.xlu0 %2603
        %2605 = vadd.xlane.f32.xlu0 %v2574
        %v2606 = vpop.xlane.xlu0 %2605
        %2607 = vadd.xlane.f32.xlu0 %v2576
        %v2608 = vpop.xlane.xlu0 %2607
        %2609 = vadd.xlane.f32.xlu0 %v2578
        %v2610 = vpop.xlane.xlu0 %2609
        %2611 = vadd.xlane.f32.xlu0 %v2580
        %v2612 = vpop.xlane.xlu0 %2611
        %2613 = vadd.xlane.f32.xlu0 %v2582
        %v2614 = vpop.xlane.xlu0 %2613
        %2615 = vadd.xlane.f32.xlu0 %v2584
        %v2616 = vpop.xlane.xlu0 %2615
        %2617 = vadd.xlane.f32.xlu0 %v2586
        %v2618 = vpop.xlane.xlu0 %2617
        %2619 = vadd.xlane.f32.xlu0 %v2588
        %v2620 = vpop.xlane.xlu0 %2619
        %2621 = vadd.xlane.f32.xlu0 %v2590
        %v2622 = vpop.xlane.xlu0 %2621
        %2623 = vadd.xlane.f32.xlu0 %v2592
        %v2624 = vpop.xlane.xlu0 %2623
        %2625 = vadd.xlane.f32.xlu0 %v2594
        %v2626 = vpop.xlane.xlu0 %2625
        %2627 = vadd.xlane.f32.xlu0 %v2596
        %v2628 = vpop.xlane.xlu0 %2627
        %2629 = vadd.xlane.f32.xlu0 %v2598
        %v2630 = vpop.xlane.xlu0 %2629
        %2631 = vadd.xlane.f32.xlu0 %v2600
        %v2632 = vpop.xlane.xlu0 %2631
        %v2633 = vpack.c.bf16 %v2572, %v2570
        %v2634 = vpack.c.bf16 %v2576, %v2574
        %v2635 = vpack.c.bf16 %v2580, %v2578
        %v2636 = vpack.c.bf16 %v2584, %v2582
        %v2637 = vpack.c.bf16 %v2588, %v2586
        %v2638 = vpack.c.bf16 %v2592, %v2590
        %v2639 = vpack.c.bf16 %v2596, %v2594
        %v2640 = vpack.c.bf16 %v2600, %v2598
        %2641 = vrot.lane.b32.xlu0 %v1161, 64
        %v2642 = vpop.permute.xlu0 %2641
        %2643 = vrot.lane.b32.xlu0 %v1162, 64
        %v2644 = vpop.permute.xlu0 %2643
        %2645 = vrot.lane.b32.xlu0 %v1163, 64
        %v2646 = vpop.permute.xlu0 %2645
        %2647 = vrot.lane.b32.xlu0 %v1164, 64
        %v2648 = vpop.permute.xlu0 %2647
        %2649 = vrot.lane.b32.xlu0 %v1165, 64
        %v2650 = vpop.permute.xlu0 %2649
        %2651 = vrot.lane.b32.xlu0 %v1166, 64
        %v2652 = vpop.permute.xlu0 %2651
        %2653 = vrot.lane.b32.xlu0 %v1167, 64
        %v2654 = vpop.permute.xlu0 %2653
        %2655 = vrot.lane.b32.xlu0 %v1168, 64
        %v2656 = vpop.permute.xlu0 %2655
        %2665 = vmatprep.subr.bf16.mxu0 0
        %2666 = vmatpush1.bf16.msra.mxu0 %v2642
        %2667 = vmatprep.subr.bf16.mxu0 0
        %2668 = vmatpush1.bf16.msra.mxu0 %v2644
        %2669 = vmatprep.subr.bf16.mxu0 0
        %2670 = vmatpush1.bf16.msra.mxu0 %v2646
        %2671 = vmatprep.subr.bf16.mxu0 0
        %2672 = vmatpush1.bf16.msra.mxu0 %v2648
        %2673 = vmatprep.subr.bf16.mxu0 0
        %2674 = vmatpush1.bf16.msra.mxu0 %v2650
        %2675 = vmatprep.subr.bf16.mxu0 0
        %2676 = vmatpush1.bf16.msra.mxu0 %v2652
        %2677 = vmatprep.subr.bf16.mxu0 0
        %2678 = vmatpush1.bf16.msra.mxu0 %v2654
        %2679 = vmatprep.subr.bf16.mxu0 0
        %2680 = vmatpush1.bf16.msra.mxu0 %v2656
        %2681 = vmatprep.subr.bf16.mxu0 0
        %2682 = vmatpush1.bf16.msra.mxu0 0
        %2683 = vmatprep.subr.bf16.mxu0 0
        %2684 = vmatpush1.bf16.msra.mxu0 0
        %2685 = vmatprep.subr.bf16.mxu0 0
        %2686 = vmatpush1.bf16.msra.mxu0 0
        %2687 = vmatprep.subr.bf16.mxu0 0
        %2688 = vmatpush1.bf16.msra.mxu0 0
        %2689 = vmatprep.subr.bf16.mxu0 0
        %2690 = vmatpush1.bf16.msra.mxu0 0
        %2691 = vmatprep.subr.bf16.mxu0 0
        %2692 = vmatpush1.bf16.msra.mxu0 0
        %2693 = vmatprep.subr.bf16.mxu0 0
        %2694 = vmatpush1.bf16.msra.mxu0 0
        %2695 = vmatprep.subr.bf16.mxu0 0
        %2696 = vmatpush1.bf16.msra.mxu0 0
        %2697 = vmatprep.mubr.bf16.mxu0 0
        %2698 = vmatmul.mubr.bf16.gmra.mrb[0].mxu0 %v2633
        %v2699 = vpop.f32.mrb[0].mxu0
        %v2700 = vadd.f32 0.0, %v2699
        %v2701 = vpop.f32.mrb[0].mxu0
        %v2702 = vpop.f32.mrb[0].mxu0
        %v2703 = vadd.f32 0.0, %v2702
        %v2704 = vpop.f32.mrb[0].mxu0
        %2705 = vmatprep.mubr.bf16.mxu0 0
        %2706 = vmatmul.mubr.bf16.gmra.mrb[0].mxu0 %v2634
        %v2707 = vpop.f32.mrb[0].mxu0
        %v2708 = vadd.f32 0.0, %v2707
        %v2709 = vpop.f32.mrb[0].mxu0
        %v2710 = vpop.f32.mrb[0].mxu0
        %v2711 = vadd.f32 0.0, %v2710
        %v2712 = vpop.f32.mrb[0].mxu0
        %2713 = vmatprep.mubr.bf16.mxu0 0
        %2714 = vmatmul.mubr.bf16.gmra.mrb[0].mxu0 %v2635
        %v2715 = vpop.f32.mrb[0].mxu0
        %v2716 = vadd.f32 0.0, %v2715
        %v2717 = vpop.f32.mrb[0].mxu0
        %v2718 = vpop.f32.mrb[0].mxu0
        %v2719 = vadd.f32 0.0, %v2718
        %v2720 = vpop.f32.mrb[0].mxu0
        %2721 = vmatprep.mubr.bf16.mxu0 0
        %2722 = vmatmul.mubr.bf16.gmra.mrb[0].mxu0 %v2636
        %v2723 = vpop.f32.mrb[0].mxu0
        %v2724 = vadd.f32 0.0, %v2723
        %v2725 = vpop.f32.mrb[0].mxu0
        %v2726 = vpop.f32.mrb[0].mxu0
        %v2727 = vadd.f32 0.0, %v2726
        %v2728 = vpop.f32.mrb[0].mxu0
        %2729 = vmatprep.mubr.bf16.mxu0 0
        %2730 = vmatmul.mubr.bf16.gmra.mrb[0].mxu0 %v2637
        %v2731 = vpop.f32.mrb[0].mxu0
        %v2732 = vadd.f32 0.0, %v2731
        %v2733 = vpop.f32.mrb[0].mxu0
        %v2734 = vpop.f32.mrb[0].mxu0
        %v2735 = vadd.f32 0.0, %v2734
        %v2736 = vpop.f32.mrb[0].mxu0
        %2737 = vmatprep.mubr.bf16.mxu0 0
        %2738 = vmatmul.mubr.bf16.gmra.mrb[0].mxu0 %v2638
        %v2739 = vpop.f32.mrb[0].mxu0
        %v2740 = vadd.f32 0.0, %v2739
        %v2741 = vpop.f32.mrb[0].mxu0
        %v2742 = vpop.f32.mrb[0].mxu0
        %v2743 = vadd.f32 0.0, %v2742
        %v2744 = vpop.f32.mrb[0].mxu0
        %2745 = vmatprep.mubr.bf16.mxu0 0
        %2746 = vmatmul.mubr.bf16.gmra.mrb[0].mxu0 %v2639
        %v2747 = vpop.f32.mrb[0].mxu0
        %v2748 = vadd.f32 0.0, %v2747
        %v2749 = vpop.f32.mrb[0].mxu0
        %v2750 = vpop.f32.mrb[0].mxu0
        %v2751 = vadd.f32 0.0, %v2750
        %v2752 = vpop.f32.mrb[0].mxu0
        %2753 = vmatprep.mubr.bf16.mxu0 0
        %2754 = vmatmul.mubr.bf16.gmra.mrb[0].mxu0 %v2640
        %v2755 = vpop.f32.mrb[0].mxu0
        %v2756 = vadd.f32 0.0, %v2755
        %v2757 = vpop.f32.mrb[0].mxu0
        %v2758 = vpop.f32.mrb[0].mxu0
        %v2759 = vadd.f32 0.0, %v2758
        %v2760 = vpop.f32.mrb[0].mxu0
        %2761 = vdwg.mxu0
        %v2762 = vrcp.pop %v2602
        %v2763 = vrcp.pop %v2604
        %v2764 = vrcp.pop %v2606
        %v2765 = vrcp.pop %v2608
        %v2766 = vrcp.pop %v2610
        %v2767 = vrcp.pop %v2612
        %v2768 = vrcp.pop %v2614
        %v2769 = vrcp.pop %v2616
        %v2770 = vrcp.pop %v2618
        %v2771 = vrcp.pop %v2620
        %v2772 = vrcp.pop %v2622
        %v2773 = vrcp.pop %v2624
        %v2774 = vrcp.pop %v2626
        %v2775 = vrcp.pop %v2628
        %v2776 = vrcp.pop %v2630
        %v2777 = vrcp.pop %v2632
        %v2778 = vmul.f32 %v2700, %v2762
        %v2779 = vmul.f32 %v2703, %v2763
        %v2780 = vmul.f32 %v2708, %v2764
        %v2781 = vmul.f32 %v2711, %v2765
        %v2782 = vmul.f32 %v2716, %v2766
        %v2783 = vmul.f32 %v2719, %v2767
        %v2784 = vmul.f32 %v2724, %v2768
        %v2785 = vmul.f32 %v2727, %v2769
        %v2786 = vmul.f32 %v2732, %v2770
        %v2787 = vmul.f32 %v2735, %v2771
        %v2788 = vmul.f32 %v2740, %v2772
        %v2789 = vmul.f32 %v2743, %v2773
        %v2790 = vmul.f32 %v2748, %v2774
        %v2791 = vmul.f32 %v2751, %v2775
        %v2792 = vmul.f32 %v2756, %v2776
        %v2793 = vmul.f32 %v2759, %v2777
        %v2794 = vpack.c.bf16 %v2779, %v2778
        %v2795 = vpack.c.bf16 %v2781, %v2780
        %v2796 = vpack.c.bf16 %v2783, %v2782
        %v2797 = vpack.c.bf16 %v2785, %v2784
        %v2798 = vpack.c.bf16 %v2787, %v2786
        %v2799 = vpack.c.bf16 %v2789, %v2788
        %v2800 = vpack.c.bf16 %v2791, %v2790
        %v2801 = vpack.c.bf16 %v2793, %v2792
        %v2802 = vld [vmem:[#allocation7 + $0x20] sm:$0xf]
        %v2803 = vld [vmem:[#allocation7 + $0x24] sm:$0xf]
        %v2804 = vld [vmem:[#allocation7 + $0x28] sm:$0xf]
        %v2805 = vld [vmem:[#allocation7 + $0x2c] sm:$0xf]
        %v2810 = vunpack.c.l.b16 %v2802
        %v2811 = vunpack.c.l.b16 %v2803
        %v2812 = vunpack.c.l.b16 %v2804
        %v2813 = vunpack.c.l.b16 %v2805
        %v2814 = vpack.c.b16 %v2811, %v2810
        %v2815 = vpack.c.b16 %v2813, %v2812
        %v2819 = vsel %vm1185, %v2794, 0
        %v2822 = vsel %vm1185, %v2795, 0
        %v2825 = vsel %vm1185, %v2796, 0
        %v2828 = vsel %vm1185, %v2797, 0
        %v2831 = vsel %vm1185, %v2798, 0
        %v2834 = vsel %vm1185, %v2799, 0
        %v2837 = vsel %vm1185, %v2800, 0
        %v2840 = vsel %vm1185, %v2801, 0
        %2842 = vmatprep.subr.bf16.mxu0 0
        %2843 = vmatpush1.bf16.msra.mxu0 %v2814
        %2844 = vmatprep.subr.bf16.mxu0 0
        %2845 = vmatpush1.bf16.msra.mxu0 %v2815
        %2846 = vmatprep.subr.bf16.mxu0 0
        %2847 = vmatpush1.bf16.msra.mxu0 0
        %2848 = vmatprep.subr.bf16.mxu0 0
        %2849 = vmatpush1.bf16.msra.mxu0 0
        %2850 = vmatprep.subr.bf16.mxu0 0
        %2851 = vmatpush1.bf16.msra.mxu0 0
        %2852 = vmatprep.subr.bf16.mxu0 0
        %2853 = vmatpush1.bf16.msra.mxu0 0
        %2854 = vmatprep.subr.bf16.mxu0 0
        %2855 = vmatpush1.bf16.msra.mxu0 0
        %2856 = vmatprep.subr.bf16.mxu0 0
        %2857 = vmatpush1.bf16.msra.mxu0 0
        %2858 = vmatprep.subr.bf16.mxu0 0
        %2859 = vmatpush1.bf16.msra.mxu0 0
        %2860 = vmatprep.subr.bf16.mxu0 0
        %2861 = vmatpush1.bf16.msra.mxu0 0
        %2862 = vmatprep.subr.bf16.mxu0 0
        %2863 = vmatpush1.bf16.msra.mxu0 0
        %2864 = vmatprep.subr.bf16.mxu0 0
        %2865 = vmatpush1.bf16.msra.mxu0 0
        %2866 = vmatprep.subr.bf16.mxu0 0
        %2867 = vmatpush1.bf16.msra.mxu0 0
        %2868 = vmatprep.subr.bf16.mxu0 0
        %2869 = vmatpush1.bf16.msra.mxu0 0
        %2870 = vmatprep.subr.bf16.mxu0 0
        %2871 = vmatpush1.bf16.msra.mxu0 0
        %2872 = vmatprep.subr.bf16.mxu0 0
        %2873 = vmatpush1.bf16.msra.mxu0 0
        %2874 = vmatprep.mubr.bf16.mxu0 0
        %2875 = vmatmul.mubr.bf16.gmra.mrb[0].mxu0 %v2819
        %v2876 = vpop.f32.mrb[0].mxu0
        %v2877 = vadd.f32 0.0, %v2876
        %v2878 = vpop.f32.mrb[0].mxu0
        %v2879 = vpop.f32.mrb[0].mxu0
        %v2880 = vadd.f32 0.0, %v2879
        %v2881 = vpop.f32.mrb[0].mxu0
        %2882 = vmatprep.mubr.bf16.mxu0 0
        %2883 = vmatmul.mubr.bf16.gmra.mrb[0].mxu0 %v2822
        %v2884 = vpop.f32.mrb[0].mxu0
        %v2885 = vadd.f32 0.0, %v2884
        %v2886 = vpop.f32.mrb[0].mxu0
        %v2887 = vpop.f32.mrb[0].mxu0
        %v2888 = vadd.f32 0.0, %v2887
        %v2889 = vpop.f32.mrb[0].mxu0
        %2890 = vmatprep.mubr.bf16.mxu0 0
        %2891 = vmatmul.mubr.bf16.gmra.mrb[0].mxu0 %v2825
        %v2892 = vpop.f32.mrb[0].mxu0
        %v2893 = vadd.f32 0.0, %v2892
        %v2894 = vpop.f32.mrb[0].mxu0
        %v2895 = vpop.f32.mrb[0].mxu0
        %v2896 = vadd.f32 0.0, %v2895
        %v2897 = vpop.f32.mrb[0].mxu0
        %2898 = vmatprep.mubr.bf16.mxu0 0
        %2899 = vmatmul.mubr.bf16.gmra.mrb[0].mxu0 %v2828
        %v2900 = vpop.f32.mrb[0].mxu0
        %v2901 = vadd.f32 0.0, %v2900
        %v2902 = vpop.f32.mrb[0].mxu0
        %v2903 = vpop.f32.mrb[0].mxu0
        %v2904 = vadd.f32 0.0, %v2903
        %v2905 = vpop.f32.mrb[0].mxu0
        %2906 = vmatprep.mubr.bf16.mxu0 0
        %2907 = vmatmul.mubr.bf16.gmra.mrb[0].mxu0 %v2831
        %v2908 = vpop.f32.mrb[0].mxu0
        %v2909 = vadd.f32 0.0, %v2908
        %v2910 = vpop.f32.mrb[0].mxu0
        %v2911 = vpop.f32.mrb[0].mxu0
        %v2912 = vadd.f32 0.0, %v2911
        %v2913 = vpop.f32.mrb[0].mxu0
        %2914 = vmatprep.mubr.bf16.mxu0 0
        %2915 = vmatmul.mubr.bf16.gmra.mrb[0].mxu0 %v2834
        %v2916 = vpop.f32.mrb[0].mxu0
        %v2917 = vadd.f32 0.0, %v2916
        %v2918 = vpop.f32.mrb[0].mxu0
        %v2919 = vpop.f32.mrb[0].mxu0
        %v2920 = vadd.f32 0.0, %v2919
        %v2921 = vpop.f32.mrb[0].mxu0
        %2922 = vmatprep.mubr.bf16.mxu0 0
        %2923 = vmatmul.mubr.bf16.gmra.mrb[0].mxu0 %v2837
        %v2924 = vpop.f32.mrb[0].mxu0
        %v2925 = vadd.f32 0.0, %v2924
        %v2926 = vpop.f32.mrb[0].mxu0
        %v2927 = vpop.f32.mrb[0].mxu0
        %v2928 = vadd.f32 0.0, %v2927
        %v2929 = vpop.f32.mrb[0].mxu0
        %2930 = vmatprep.mubr.bf16.mxu0 0
        %2931 = vmatmul.mubr.bf16.gmra.mrb[0].mxu0 %v2840
        %v2932 = vpop.f32.mrb[0].mxu0
        %v2933 = vadd.f32 0.0, %v2932
        %v2934 = vpop.f32.mrb[0].mxu0
        %v2935 = vpop.f32.mrb[0].mxu0
        %v2936 = vadd.f32 0.0, %v2935
        %v2937 = vpop.f32.mrb[0].mxu0
        %2938 = vdwg.mxu0
        %v2939 = vadd.f32 %v2282, %v2877
        %v2940 = vadd.f32 %v2285, %v2880
        %v2941 = vadd.f32 %v2290, %v2885
        %v2942 = vadd.f32 %v2293, %v2888
        %v2943 = vadd.f32 %v2298, %v2893
        %v2944 = vadd.f32 %v2301, %v2896
        %v2945 = vadd.f32 %v2306, %v2901
        %v2946 = vadd.f32 %v2309, %v2904
        %v2947 = vadd.f32 %v2314, %v2909
        %v2948 = vadd.f32 %v2317, %v2912
        %v2949 = vadd.f32 %v2322, %v2917
        %v2950 = vadd.f32 %v2325, %v2920
        %v2951 = vadd.f32 %v2330, %v2925
        %v2952 = vadd.f32 %v2333, %v2928
        %v2953 = vadd.f32 %v2338, %v2933
        %v2954 = vadd.f32 %v2341, %v2936
        %2955 = vrot.lane.b32.xlu0 %v1097, 32
        %v2956 = vpop.permute.xlu0 %2955
        %2957 = vrot.lane.b32.xlu0 %v1098, 32
        %v2958 = vpop.permute.xlu0 %2957
        %2959 = vrot.lane.b32.xlu0 %v1099, 32
        %v2960 = vpop.permute.xlu0 %2959
        %2961 = vrot.lane.b32.xlu0 %v1100, 32
        %v2962 = vpop.permute.xlu0 %2961
        %2963 = vrot.lane.b32.xlu0 %v1101, 32
        %v2964 = vpop.permute.xlu0 %2963
        %2965 = vrot.lane.b32.xlu0 %v1102, 32
        %v2966 = vpop.permute.xlu0 %2965
        %2967 = vrot.lane.b32.xlu0 %v1103, 32
        %v2968 = vpop.permute.xlu0 %2967
        %2969 = vrot.lane.b32.xlu0 %v1104, 32
        %v2970 = vpop.permute.xlu0 %2969
        %2971 = vrot.lane.b32.xlu0 %v1153, 32
        %v2972 = vpop.permute.xlu0 %2971
        %2973 = vrot.lane.b32.xlu0 %v1154, 32
        %v2974 = vpop.permute.xlu0 %2973
        %2975 = vrot.lane.b32.xlu0 %v1155, 32
        %v2976 = vpop.permute.xlu0 %2975
        %2977 = vrot.lane.b32.xlu0 %v1156, 32
        %v2978 = vpop.permute.xlu0 %2977
        %2979 = vrot.lane.b32.xlu0 %v1157, 32
        %v2980 = vpop.permute.xlu0 %2979
        %2981 = vrot.lane.b32.xlu0 %v1158, 32
        %v2982 = vpop.permute.xlu0 %2981
        %2983 = vrot.lane.b32.xlu0 %v1159, 32
        %v2984 = vpop.permute.xlu0 %2983
        %2985 = vrot.lane.b32.xlu0 %v1160, 32
        %v2986 = vpop.permute.xlu0 %2985
        %v2988 = vsel %vm1185, %v2956, 0
        %v2991 = vsel %vm1185, %v2958, 0
        %v2994 = vsel %vm1185, %v2960, 0
        %v2997 = vsel %vm1185, %v2962, 0
        %v3000 = vsel %vm1185, %v2964, 0
        %v3003 = vsel %vm1185, %v2966, 0
        %v3006 = vsel %vm1185, %v2968, 0
        %v3009 = vsel %vm1185, %v2970, 0
        %v3012 = vsel %vm1185, %v2972, 0
        %v3015 = vsel %vm1185, %v2974, 0
        %v3018 = vsel %vm1185, %v2976, 0
        %v3021 = vsel %vm1185, %v2978, 0
        %v3024 = vsel %vm1185, %v2980, 0
        %v3027 = vsel %vm1185, %v2982, 0
        %v3030 = vsel %vm1185, %v2984, 0
        %v3033 = vsel %vm1185, %v2986, 0
        %3035 = vmatprep.subr.bf16.mxu0 0
        %3036 = vmatpush1.bf16.xpose.msra.mxu0 %v3012
        %3037 = vmatprep.subr.bf16.mxu0 0
        %3038 = vmatpush1.bf16.xpose.msra.mxu0 %v3015
        %3039 = vmatprep.subr.bf16.mxu0 0
        %3040 = vmatpush1.bf16.xpose.msra.mxu0 %v3018
        %3041 = vmatprep.subr.bf16.mxu0 0
        %3042 = vmatpush1.bf16.xpose.msra.mxu0 %v3021
        %3043 = vmatprep.subr.bf16.mxu0 0
        %3044 = vmatpush1.bf16.xpose.msra.mxu0 %v3024
        %3045 = vmatprep.subr.bf16.mxu0 0
        %3046 = vmatpush1.bf16.xpose.msra.mxu0 %v3027
        %3047 = vmatprep.subr.bf16.mxu0 0
        %3048 = vmatpush1.bf16.xpose.msra.mxu0 %v3030
        %3049 = vmatprep.subr.bf16.mxu0 0
        %3050 = vmatpush1.bf16.xpose.msra.mxu0 %v3033
        %3051 = vmatprep.subr.bf16.mxu0 0
        %3052 = vmatpush1.bf16.xpose.msra.mxu0 0
        %3053 = vmatprep.subr.bf16.mxu0 0
        %3054 = vmatpush1.bf16.xpose.msra.mxu0 0
        %3055 = vmatprep.subr.bf16.mxu0 0
        %3056 = vmatpush1.bf16.xpose.msra.mxu0 0
        %3057 = vmatprep.subr.bf16.mxu0 0
        %3058 = vmatpush1.bf16.xpose.msra.mxu0 0
        %3059 = vmatprep.subr.bf16.mxu0 0
        %3060 = vmatpush1.bf16.xpose.msra.mxu0 0
        %3061 = vmatprep.subr.bf16.mxu0 0
        %3062 = vmatpush1.bf16.xpose.msra.mxu0 0
        %3063 = vmatprep.subr.bf16.mxu0 0
        %3064 = vmatpush1.bf16.xpose.msra.mxu0 0
        %3065 = vmatprep.subr.bf16.mxu0 0
        %3066 = vmatpush1.bf16.xpose.msra.mxu0 0
        %3067 = vmatprep.mubr.bf16.mxu0 0
        %3068 = vmatmul.mubr.bf16.gmra.mrb[0].mxu0 %v2988
        %v3069 = vpop.f32.mrb[0].mxu0
        %v3070 = vadd.f32 %v1169, %v3069
        %v3071 = vpop.f32.mrb[0].mxu0
        %v3072 = vpop.f32.mrb[0].mxu0
        %v3073 = vadd.f32 %v1170, %v3072
        %v3074 = vpop.f32.mrb[0].mxu0
        %3075 = vmatprep.mubr.bf16.mxu0 0
        %3076 = vmatmul.mubr.bf16.gmra.mrb[0].mxu0 %v2991
        %v3077 = vpop.f32.mrb[0].mxu0
        %v3078 = vadd.f32 %v1171, %v3077
        %v3079 = vpop.f32.mrb[0].mxu0
        %v3080 = vpop.f32.mrb[0].mxu0
        %v3081 = vadd.f32 %v1172, %v3080
        %v3082 = vpop.f32.mrb[0].mxu0
        %3083 = vmatprep.mubr.bf16.mxu0 0
        %3084 = vmatmul.mubr.bf16.gmra.mrb[0].mxu0 %v2994
        %v3085 = vpop.f32.mrb[0].mxu0
        %v3086 = vadd.f32 %v1173, %v3085
        %v3087 = vpop.f32.mrb[0].mxu0
        %v3088 = vpop.f32.mrb[0].mxu0
        %v3089 = vadd.f32 %v1174, %v3088
        %v3090 = vpop.f32.mrb[0].mxu0
        %3091 = vmatprep.mubr.bf16.mxu0 0
        %3092 = vmatmul.mubr.bf16.gmra.mrb[0].mxu0 %v2997
        %v3093 = vpop.f32.mrb[0].mxu0
        %v3094 = vadd.f32 %v1175, %v3093
        %v3095 = vpop.f32.mrb[0].mxu0
        %v3096 = vpop.f32.mrb[0].mxu0
        %v3097 = vadd.f32 %v1176, %v3096
        %v3098 = vpop.f32.mrb[0].mxu0
        %3099 = vmatprep.mubr.bf16.mxu0 0
        %3100 = vmatmul.mubr.bf16.gmra.mrb[0].mxu0 %v3000
        %v3101 = vpop.f32.mrb[0].mxu0
        %v3102 = vadd.f32 %v1177, %v3101
        %v3103 = vpop.f32.mrb[0].mxu0
        %v3104 = vpop.f32.mrb[0].mxu0
        %v3105 = vadd.f32 %v1178, %v3104
        %v3106 = vpop.f32.mrb[0].mxu0
        %3107 = vmatprep.mubr.bf16.mxu0 0
        %3108 = vmatmul.mubr.bf16.gmra.mrb[0].mxu0 %v3003
        %v3109 = vpop.f32.mrb[0].mxu0
        %v3110 = vadd.f32 %v1179, %v3109
        %v3111 = vpop.f32.mrb[0].mxu0
        %v3112 = vpop.f32.mrb[0].mxu0
        %v3113 = vadd.f32 %v1180, %v3112
        %v3114 = vpop.f32.mrb[0].mxu0
        %3115 = vmatprep.mubr.bf16.mxu0 0
        %3116 = vmatmul.mubr.bf16.gmra.mrb[0].mxu0 %v3006
        %v3117 = vpop.f32.mrb[0].mxu0
        %v3118 = vadd.f32 %v1181, %v3117
        %v3119 = vpop.f32.mrb[0].mxu0
        %v3120 = vpop.f32.mrb[0].mxu0
        %v3121 = vadd.f32 %v1182, %v3120
        %v3122 = vpop.f32.mrb[0].mxu0
        %3123 = vmatprep.mubr.bf16.mxu0 0
        %3124 = vmatmul.mubr.bf16.gmra.mrb[0].mxu0 %v3009
        %v3125 = vpop.f32.mrb[0].mxu0
        %v3126 = vadd.f32 %v1183, %v3125
        %v3127 = vpop.f32.mrb[0].mxu0
        %v3128 = vpop.f32.mrb[0].mxu0
        %v3129 = vadd.f32 %v1184, %v3128
        %v3130 = vpop.f32.mrb[0].mxu0
        %3131 = vdwg.mxu0
        %3132 = vmax.xlane.f32.xlu0 %v3070
        %v3133 = vpop.xlane.xlu0 %3132
        %3134 = vmax.xlane.f32.xlu0 %v3073
        %v3135 = vpop.xlane.xlu0 %3134
        %3136 = vmax.xlane.f32.xlu0 %v3078
        %v3137 = vpop.xlane.xlu0 %3136
        %3138 = vmax.xlane.f32.xlu0 %v3081
        %v3139 = vpop.xlane.xlu0 %3138
        %3140 = vmax.xlane.f32.xlu0 %v3086
        %v3141 = vpop.xlane.xlu0 %3140
        %3142 = vmax.xlane.f32.xlu0 %v3089
        %v3143 = vpop.xlane.xlu0 %3142
        %3144 = vmax.xlane.f32.xlu0 %v3094
        %v3145 = vpop.xlane.xlu0 %3144
        %3146 = vmax.xlane.f32.xlu0 %v3097
        %v3147 = vpop.xlane.xlu0 %3146
        %3148 = vmax.xlane.f32.xlu0 %v3102
        %v3149 = vpop.xlane.xlu0 %3148
        %3150 = vmax.xlane.f32.xlu0 %v3105
        %v3151 = vpop.xlane.xlu0 %3150
        %3152 = vmax.xlane.f32.xlu0 %v3110
        %v3153 = vpop.xlane.xlu0 %3152
        %3154 = vmax.xlane.f32.xlu0 %v3113
        %v3155 = vpop.xlane.xlu0 %3154
        %3156 = vmax.xlane.f32.xlu0 %v3118
        %v3157 = vpop.xlane.xlu0 %3156
        %3158 = vmax.xlane.f32.xlu0 %v3121
        %v3159 = vpop.xlane.xlu0 %3158
        %3160 = vmax.xlane.f32.xlu0 %v3126
        %v3161 = vpop.xlane.xlu0 %3160
        %3162 = vmax.xlane.f32.xlu0 %v3129
        %v3163 = vpop.xlane.xlu0 %3162
        %v3164 = vsub.f32 %v3070, %v3133
        %v3165 = vsub.f32 %v3073, %v3135
        %v3166 = vsub.f32 %v3078, %v3137
        %v3167 = vsub.f32 %v3081, %v3139
        %v3168 = vsub.f32 %v3086, %v3141
        %v3169 = vsub.f32 %v3089, %v3143
        %v3170 = vsub.f32 %v3094, %v3145
        %v3171 = vsub.f32 %v3097, %v3147
        %v3172 = vsub.f32 %v3102, %v3149
        %v3173 = vsub.f32 %v3105, %v3151
        %v3174 = vsub.f32 %v3110, %v3153
        %v3175 = vsub.f32 %v3113, %v3155
        %v3176 = vsub.f32 %v3118, %v3157
        %v3177 = vsub.f32 %v3121, %v3159
        %v3178 = vsub.f32 %v3126, %v3161
        %v3179 = vsub.f32 %v3129, %v3163
        %v3180 = vmul.f32 %v3164, 1.442695
        %v3181 = vpow.pop %v3180
        %v3182 = vmul.f32 %v3165, 1.442695
        %v3183 = vpow.pop %v3182
        %v3184 = vmul.f32 %v3166, 1.442695
        %v3185 = vpow.pop %v3184
        %v3186 = vmul.f32 %v3167, 1.442695
        %v3187 = vpow.pop %v3186
        %v3188 = vmul.f32 %v3168, 1.442695
        %v3189 = vpow.pop %v3188
        %v3190 = vmul.f32 %v3169, 1.442695
        %v3191 = vpow.pop %v3190
        %v3192 = vmul.f32 %v3170, 1.442695
        %v3193 = vpow.pop %v3192
        %v3194 = vmul.f32 %v3171, 1.442695
        %v3195 = vpow.pop %v3194
        %v3196 = vmul.f32 %v3172, 1.442695
        %v3197 = vpow.pop %v3196
        %v3198 = vmul.f32 %v3173, 1.442695
        %v3199 = vpow.pop %v3198
        %v3200 = vmul.f32 %v3174, 1.442695
        %v3201 = vpow.pop %v3200
        %v3202 = vmul.f32 %v3175, 1.442695
        %v3203 = vpow.pop %v3202
        %v3204 = vmul.f32 %v3176, 1.442695
        %v3205 = vpow.pop %v3204
        %v3206 = vmul.f32 %v3177, 1.442695
        %v3207 = vpow.pop %v3206
        %v3208 = vmul.f32 %v3178, 1.442695
        %v3209 = vpow.pop %v3208
        %v3210 = vmul.f32 %v3179, 1.442695
        %v3211 = vpow.pop %v3210
        %3212 = vadd.xlane.f32.xlu0 %v3181
        %v3213 = vpop.xlane.xlu0 %3212
        %3214 = vadd.xlane.f32.xlu0 %v3183
        %v3215 = vpop.xlane.xlu0 %3214
        %3216 = vadd.xlane.f32.xlu0 %v3185
        %v3217 = vpop.xlane.xlu0 %3216
        %3218 = vadd.xlane.f32.xlu0 %v3187
        %v3219 = vpop.xlane.xlu0 %3218
        %3220 = vadd.xlane.f32.xlu0 %v3189
        %v3221 = vpop.xlane.xlu0 %3220
        %3222 = vadd.xlane.f32.xlu0 %v3191
        %v3223 = vpop.xlane.xlu0 %3222
        %3224 = vadd.xlane.f32.xlu0 %v3193
        %v3225 = vpop.xlane.xlu0 %3224
        %3226 = vadd.xlane.f32.xlu0 %v3195
        %v3227 = vpop.xlane.xlu0 %3226
        %3228 = vadd.xlane.f32.xlu0 %v3197
        %v3229 = vpop.xlane.xlu0 %3228
        %3230 = vadd.xlane.f32.xlu0 %v3199
        %v3231 = vpop.xlane.xlu0 %3230
        %3232 = vadd.xlane.f32.xlu0 %v3201
        %v3233 = vpop.xlane.xlu0 %3232
        %3234 = vadd.xlane.f32.xlu0 %v3203
        %v3235 = vpop.xlane.xlu0 %3234
        %3236 = vadd.xlane.f32.xlu0 %v3205
        %v3237 = vpop.xlane.xlu0 %3236
        %3238 = vadd.xlane.f32.xlu0 %v3207
        %v3239 = vpop.xlane.xlu0 %3238
        %3240 = vadd.xlane.f32.xlu0 %v3209
        %v3241 = vpop.xlane.xlu0 %3240
        %3242 = vadd.xlane.f32.xlu0 %v3211
        %v3243 = vpop.xlane.xlu0 %3242
        %v3244 = vpack.c.bf16 %v3183, %v3181
        %v3245 = vpack.c.bf16 %v3187, %v3185
        %v3246 = vpack.c.bf16 %v3191, %v3189
        %v3247 = vpack.c.bf16 %v3195, %v3193
        %v3248 = vpack.c.bf16 %v3199, %v3197
        %v3249 = vpack.c.bf16 %v3203, %v3201
        %v3250 = vpack.c.bf16 %v3207, %v3205
        %v3251 = vpack.c.bf16 %v3211, %v3209
        %3252 = vrot.lane.b32.xlu0 %v1161, 32
        %v3253 = vpop.permute.xlu0 %3252
        %3254 = vrot.lane.b32.xlu0 %v1162, 32
        %v3255 = vpop.permute.xlu0 %3254
        %3256 = vrot.lane.b32.xlu0 %v1163, 32
        %v3257 = vpop.permute.xlu0 %3256
        %3258 = vrot.lane.b32.xlu0 %v1164, 32
        %v3259 = vpop.permute.xlu0 %3258
        %3260 = vrot.lane.b32.xlu0 %v1165, 32
        %v3261 = vpop.permute.xlu0 %3260
        %3262 = vrot.lane.b32.xlu0 %v1166, 32
        %v3263 = vpop.permute.xlu0 %3262
        %3264 = vrot.lane.b32.xlu0 %v1167, 32
        %v3265 = vpop.permute.xlu0 %3264
        %3266 = vrot.lane.b32.xlu0 %v1168, 32
        %v3267 = vpop.permute.xlu0 %3266
        %3276 = vmatprep.subr.bf16.mxu0 0
        %3277 = vmatpush1.bf16.msra.mxu0 %v3253
        %3278 = vmatprep.subr.bf16.mxu0 0
        %3279 = vmatpush1.bf16.msra.mxu0 %v3255
        %3280 = vmatprep.subr.bf16.mxu0 0
        %3281 = vmatpush1.bf16.msra.mxu0 %v3257
        %3282 = vmatprep.subr.bf16.mxu0 0
        %3283 = vmatpush1.bf16.msra.mxu0 %v3259
        %3284 = vmatprep.subr.bf16.mxu0 0
        %3285 = vmatpush1.bf16.msra.mxu0 %v3261
        %3286 = vmatprep.subr.bf16.mxu0 0
        %3287 = vmatpush1.bf16.msra.mxu0 %v3263
        %3288 = vmatprep.subr.bf16.mxu0 0
        %3289 = vmatpush1.bf16.msra.mxu0 %v3265
        %3290 = vmatprep.subr.bf16.mxu0 0
        %3291 = vmatpush1.bf16.msra.mxu0 %v3267
        %3292 = vmatprep.subr.bf16.mxu0 0
        %3293 = vmatpush1.bf16.msra.mxu0 0
        %3294 = vmatprep.subr.bf16.mxu0 0
        %3295 = vmatpush1.bf16.msra.mxu0 0
        %3296 = vmatprep.subr.bf16.mxu0 0
        %3297 = vmatpush1.bf16.msra.mxu0 0
        %3298 = vmatprep.subr.bf16.mxu0 0
        %3299 = vmatpush1.bf16.msra.mxu0 0
        %3300 = vmatprep.subr.bf16.mxu0 0
        %3301 = vmatpush1.bf16.msra.mxu0 0
        %3302 = vmatprep.subr.bf16.mxu0 0
        %3303 = vmatpush1.bf16.msra.mxu0 0
        %3304 = vmatprep.subr.bf16.mxu0 0
        %3305 = vmatpush1.bf16.msra.mxu0 0
        %3306 = vmatprep.subr.bf16.mxu0 0
        %3307 = vmatpush1.bf16.msra.mxu0 0
        %3308 = vmatprep.mubr.bf16.mxu0 0
        %3309 = vmatmul.mubr.bf16.gmra.mrb[0].mxu0 %v3244
        %v3310 = vpop.f32.mrb[0].mxu0
        %v3311 = vadd.f32 0.0, %v3310
        %v3312 = vpop.f32.mrb[0].mxu0
        %v3313 = vpop.f32.mrb[0].mxu0
        %v3314 = vadd.f32 0.0, %v3313
        %v3315 = vpop.f32.mrb[0].mxu0
        %3316 = vmatprep.mubr.bf16.mxu0 0
        %3317 = vmatmul.mubr.bf16.gmra.mrb[0].mxu0 %v3245
        %v3318 = vpop.f32.mrb[0].mxu0
        %v3319 = vadd.f32 0.0, %v3318
        %v3320 = vpop.f32.mrb[0].mxu0
        %v3321 = vpop.f32.mrb[0].mxu0
        %v3322 = vadd.f32 0.0, %v3321
        %v3323 = vpop.f32.mrb[0].mxu0
        %3324 = vmatprep.mubr.bf16.mxu0 0
        %3325 = vmatmul.mubr.bf16.gmra.mrb[0].mxu0 %v3246
        %v3326 = vpop.f32.mrb[0].mxu0
        %v3327 = vadd.f32 0.0, %v3326
        %v3328 = vpop.f32.mrb[0].mxu0
        %v3329 = vpop.f32.mrb[0].mxu0
        %v3330 = vadd.f32 0.0, %v3329
        %v3331 = vpop.f32.mrb[0].mxu0
        %3332 = vmatprep.mubr.bf16.mxu0 0
        %3333 = vmatmul.mubr.bf16.gmra.mrb[0].mxu0 %v3247
        %v3334 = vpop.f32.mrb[0].mxu0
        %v3335 = vadd.f32 0.0, %v3334
        %v3336 = vpop.f32.mrb[0].mxu0
        %v3337 = vpop.f32.mrb[0].mxu0
        %v3338 = vadd.f32 0.0, %v3337
        %v3339 = vpop.f32.mrb[0].mxu0
        %3340 = vmatprep.mubr.bf16.mxu0 0
        %3341 = vmatmul.mubr.bf16.gmra.mrb[0].mxu0 %v3248
        %v3342 = vpop.f32.mrb[0].mxu0
        %v3343 = vadd.f32 0.0, %v3342
        %v3344 = vpop.f32.mrb[0].mxu0
        %v3345 = vpop.f32.mrb[0].mxu0
        %v3346 = vadd.f32 0.0, %v3345
        %v3347 = vpop.f32.mrb[0].mxu0
        %3348 = vmatprep.mubr.bf16.mxu0 0
        %3349 = vmatmul.mubr.bf16.gmra.mrb[0].mxu0 %v3249
        %v3350 = vpop.f32.mrb[0].mxu0
        %v3351 = vadd.f32 0.0, %v3350
        %v3352 = vpop.f32.mrb[0].mxu0
        %v3353 = vpop.f32.mrb[0].mxu0
        %v3354 = vadd.f32 0.0, %v3353
        %v3355 = vpop.f32.mrb[0].mxu0
        %3356 = vmatprep.mubr.bf16.mxu0 0
        %3357 = vmatmul.mubr.bf16.gmra.mrb[0].mxu0 %v3250
        %v3358 = vpop.f32.mrb[0].mxu0
        %v3359 = vadd.f32 0.0, %v3358
        %v3360 = vpop.f32.mrb[0].mxu0
        %v3361 = vpop.f32.mrb[0].mxu0
        %v3362 = vadd.f32 0.0, %v3361
        %v3363 = vpop.f32.mrb[0].mxu0
        %3364 = vmatprep.mubr.bf16.mxu0 0
        %3365 = vmatmul.mubr.bf16.gmra.mrb[0].mxu0 %v3251
        %v3366 = vpop.f32.mrb[0].mxu0
        %v3367 = vadd.f32 0.0, %v3366
        %v3368 = vpop.f32.mrb[0].mxu0
        %v3369 = vpop.f32.mrb[0].mxu0
        %v3370 = vadd.f32 0.0, %v3369
        %v3371 = vpop.f32.mrb[0].mxu0
        %3372 = vdwg.mxu0
        %v3373 = vrcp.pop %v3213
        %v3374 = vrcp.pop %v3215
        %v3375 = vrcp.pop %v3217
        %v3376 = vrcp.pop %v3219
        %v3377 = vrcp.pop %v3221
        %v3378 = vrcp.pop %v3223
        %v3379 = vrcp.pop %v3225
        %v3380 = vrcp.pop %v3227
        %v3381 = vrcp.pop %v3229
        %v3382 = vrcp.pop %v3231
        %v3383 = vrcp.pop %v3233
        %v3384 = vrcp.pop %v3235
        %v3385 = vrcp.pop %v3237
        %v3386 = vrcp.pop %v3239
        %v3387 = vrcp.pop %v3241
        %v3388 = vrcp.pop %v3243
        %v3389 = vmul.f32 %v3311, %v3373
        %v3390 = vmul.f32 %v3314, %v3374
        %v3391 = vmul.f32 %v3319, %v3375
        %v3392 = vmul.f32 %v3322, %v3376
        %v3393 = vmul.f32 %v3327, %v3377
        %v3394 = vmul.f32 %v3330, %v3378
        %v3395 = vmul.f32 %v3335, %v3379
        %v3396 = vmul.f32 %v3338, %v3380
        %v3397 = vmul.f32 %v3343, %v3381
        %v3398 = vmul.f32 %v3346, %v3382
        %v3399 = vmul.f32 %v3351, %v3383
        %v3400 = vmul.f32 %v3354, %v3384
        %v3401 = vmul.f32 %v3359, %v3385
        %v3402 = vmul.f32 %v3362, %v3386
        %v3403 = vmul.f32 %v3367, %v3387
        %v3404 = vmul.f32 %v3370, %v3388
        %v3405 = vpack.c.bf16 %v3390, %v3389
        %v3406 = vpack.c.bf16 %v3392, %v3391
        %v3407 = vpack.c.bf16 %v3394, %v3393
        %v3408 = vpack.c.bf16 %v3396, %v3395
        %v3409 = vpack.c.bf16 %v3398, %v3397
        %v3410 = vpack.c.bf16 %v3400, %v3399
        %v3411 = vpack.c.bf16 %v3402, %v3401
        %v3412 = vpack.c.bf16 %v3404, %v3403
        %v3413 = vld [vmem:[#allocation7 + $0x30] sm:$0xf]
        %v3414 = vld [vmem:[#allocation7 + $0x34] sm:$0xf]
        %v3415 = vld [vmem:[#allocation7 + $0x38] sm:$0xf]
        %v3416 = vld [vmem:[#allocation7 + $0x3c] sm:$0xf]
        %v3421 = vunpack.c.l.b16 %v3413
        %v3422 = vunpack.c.l.b16 %v3414
        %v3423 = vunpack.c.l.b16 %v3415
        %v3424 = vunpack.c.l.b16 %v3416
        %v3425 = vpack.c.b16 %v3422, %v3421
        %v3426 = vpack.c.b16 %v3424, %v3423
        %v3430 = vsel %vm1185, %v3405, 0
        %v3433 = vsel %vm1185, %v3406, 0
        %v3436 = vsel %vm1185, %v3407, 0
        %v3439 = vsel %vm1185, %v3408, 0
        %v3442 = vsel %vm1185, %v3409, 0
        %v3445 = vsel %vm1185, %v3410, 0
        %v3448 = vsel %vm1185, %v3411, 0
        %v3451 = vsel %vm1185, %v3412, 0
        %3453 = vmatprep.subr.bf16.mxu0 0
        %3454 = vmatpush1.bf16.msra.mxu0 %v3425
        %3455 = vmatprep.subr.bf16.mxu0 0
        %3456 = vmatpush1.bf16.msra.mxu0 %v3426
        %3457 = vmatprep.subr.bf16.mxu0 0
        %3458 = vmatpush1.bf16.msra.mxu0 0
        %3459 = vmatprep.subr.bf16.mxu0 0
        %3460 = vmatpush1.bf16.msra.mxu0 0
        %3461 = vmatprep.subr.bf16.mxu0 0
        %3462 = vmatpush1.bf16.msra.mxu0 0
        %3463 = vmatprep.subr.bf16.mxu0 0
        %3464 = vmatpush1.bf16.msra.mxu0 0
        %3465 = vmatprep.subr.bf16.mxu0 0
        %3466 = vmatpush1.bf16.msra.mxu0 0
        %3467 = vmatprep.subr.bf16.mxu0 0
        %3468 = vmatpush1.bf16.msra.mxu0 0
        %3469 = vmatprep.subr.bf16.mxu0 0
        %3470 = vmatpush1.bf16.msra.mxu0 0
        %3471 = vmatprep.subr.bf16.mxu0 0
        %3472 = vmatpush1.bf16.msra.mxu0 0
        %3473 = vmatprep.subr.bf16.mxu0 0
        %3474 = vmatpush1.bf16.msra.mxu0 0
        %3475 = vmatprep.subr.bf16.mxu0 0
        %3476 = vmatpush1.bf16.msra.mxu0 0
        %3477 = vmatprep.subr.bf16.mxu0 0
        %3478 = vmatpush1.bf16.msra.mxu0 0
        %3479 = vmatprep.subr.bf16.mxu0 0
        %3480 = vmatpush1.bf16.msra.mxu0 0
        %3481 = vmatprep.subr.bf16.mxu0 0
        %3482 = vmatpush1.bf16.msra.mxu0 0
        %3483 = vmatprep.subr.bf16.mxu0 0
        %3484 = vmatpush1.bf16.msra.mxu0 0
        %3485 = vmatprep.mubr.bf16.mxu0 0
        %3486 = vmatmul.mubr.bf16.gmra.mrb[0].mxu0 %v3430
        %v3487 = vpop.f32.mrb[0].mxu0
        %v3488 = vadd.f32 0.0, %v3487
        %v3489 = vpop.f32.mrb[0].mxu0
        %v3490 = vpop.f32.mrb[0].mxu0
        %v3491 = vadd.f32 0.0, %v3490
        %v3492 = vpop.f32.mrb[0].mxu0
        %3493 = vmatprep.mubr.bf16.mxu0 0
        %3494 = vmatmul.mubr.bf16.gmra.mrb[0].mxu0 %v3433
        %v3495 = vpop.f32.mrb[0].mxu0
        %v3496 = vadd.f32 0.0, %v3495
        %v3497 = vpop.f32.mrb[0].mxu0
        %v3498 = vpop.f32.mrb[0].mxu0
        %v3499 = vadd.f32 0.0, %v3498
        %v3500 = vpop.f32.mrb[0].mxu0
        %3501 = vmatprep.mubr.bf16.mxu0 0
        %3502 = vmatmul.mubr.bf16.gmra.mrb[0].mxu0 %v3436
        %v3503 = vpop.f32.mrb[0].mxu0
        %v3504 = vadd.f32 0.0, %v3503
        %v3505 = vpop.f32.mrb[0].mxu0
        %v3506 = vpop.f32.mrb[0].mxu0
        %v3507 = vadd.f32 0.0, %v3506
        %v3508 = vpop.f32.mrb[0].mxu0
        %3509 = vmatprep.mubr.bf16.mxu0 0
        %3510 = vmatmul.mubr.bf16.gmra.mrb[0].mxu0 %v3439
        %v3511 = vpop.f32.mrb[0].mxu0
        %v3512 = vadd.f32 0.0, %v3511
        %v3513 = vpop.f32.mrb[0].mxu0
        %v3514 = vpop.f32.mrb[0].mxu0
        %v3515 = vadd.f32 0.0, %v3514
        %v3516 = vpop.f32.mrb[0].mxu0
        %3517 = vmatprep.mubr.bf16.mxu0 0
        %3518 = vmatmul.mubr.bf16.gmra.mrb[0].mxu0 %v3442
        %v3519 = vpop.f32.mrb[0].mxu0
        %v3520 = vadd.f32 0.0, %v3519
        %v3521 = vpop.f32.mrb[0].mxu0
        %v3522 = vpop.f32.mrb[0].mxu0
        %v3523 = vadd.f32 0.0, %v3522
        %v3524 = vpop.f32.mrb[0].mxu0
        %3525 = vmatprep.mubr.bf16.mxu0 0
        %3526 = vmatmul.mubr.bf16.gmra.mrb[0].mxu0 %v3445
        %v3527 = vpop.f32.mrb[0].mxu0
        %v3528 = vadd.f32 0.0, %v3527
        %v3529 = vpop.f32.mrb[0].mxu0
        %v3530 = vpop.f32.mrb[0].mxu0
        %v3531 = vadd.f32 0.0, %v3530
        %v3532 = vpop.f32.mrb[0].mxu0
        %3533 = vmatprep.mubr.bf16.mxu0 0
        %3534 = vmatmul.mubr.bf16.gmra.mrb[0].mxu0 %v3448
        %v3535 = vpop.f32.mrb[0].mxu0
        %v3536 = vadd.f32 0.0, %v3535
        %v3537 = vpop.f32.mrb[0].mxu0
        %v3538 = vpop.f32.mrb[0].mxu0
        %v3539 = vadd.f32 0.0, %v3538
        %v3540 = vpop.f32.mrb[0].mxu0
        %3541 = vmatprep.mubr.bf16.mxu0 0
        %3542 = vmatmul.mubr.bf16.gmra.mrb[0].mxu0 %v3451
        %v3543 = vpop.f32.mrb[0].mxu0
        %v3544 = vadd.f32 0.0, %v3543
        %v3545 = vpop.f32.mrb[0].mxu0
        %v3546 = vpop.f32.mrb[0].mxu0
        %v3547 = vadd.f32 0.0, %v3546
        %v3548 = vpop.f32.mrb[0].mxu0
        %3549 = vdwg.mxu0
        %v3550 = vadd.f32 %v2939, %v3488
        %v3551 = vadd.f32 %v2940, %v3491
        %v3552 = vadd.f32 %v2941, %v3496
        %v3553 = vadd.f32 %v2942, %v3499
        %v3554 = vadd.f32 %v2943, %v3504
        %v3555 = vadd.f32 %v2944, %v3507
        %v3556 = vadd.f32 %v2945, %v3512
        %v3557 = vadd.f32 %v2946, %v3515
        %v3558 = vadd.f32 %v2947, %v3520
        %v3559 = vadd.f32 %v2948, %v3523
        %v3560 = vadd.f32 %v2949, %v3528
        %v3561 = vadd.f32 %v2950, %v3531
        %v3562 = vadd.f32 %v2951, %v3536
        %v3563 = vadd.f32 %v2952, %v3539
        %v3564 = vadd.f32 %v2953, %v3544
        %v3565 = vadd.f32 %v2954, %v3547
        %v3566 = vld [vmem:[%s3] sm:$0x1]
        %v3568 = vlaneseq
        %v3569 = vshrl.u32 %v3568, 7
        %v3570 = vsub.s32 0, %v3569
        %v3571 = vrot.slane %v3566, %v3570
        %v3573 = vadd.f32 %v3550, %v3571
        %v3574 = vadd.f32 %v3551, %v3571
        %v3575 = vadd.f32 %v3552, %v3571
        %v3576 = vadd.f32 %v3553, %v3571
        %v3577 = vadd.f32 %v3554, %v3571
        %v3578 = vadd.f32 %v3555, %v3571
        %v3579 = vadd.f32 %v3556, %v3571
        %v3580 = vadd.f32 %v3557, %v3571
        %v3581 = vadd.f32 %v3558, %v3571
        %v3582 = vadd.f32 %v3559, %v3571
        %v3583 = vadd.f32 %v3560, %v3571
        %v3584 = vadd.f32 %v3561, %v3571
        %v3585 = vadd.f32 %v3562, %v3571
        %v3586 = vadd.f32 %v3563, %v3571
        %v3587 = vadd.f32 %v3564, %v3571
        %v3588 = vadd.f32 %v3565, %v3571
        %3589 = vst [vmem:[%s370] sm:$0xff] %v3573
        %3590 = vst [vmem:[%s370 + $0x8] sm:$0xff] %v3574
        %3591 = vst [vmem:[%s370 + $0x10] sm:$0xff] %v3575
        %3592 = vst [vmem:[%s370 + $0x18] sm:$0xff] %v3576
        %3593 = vst [vmem:[%s370 + $0x20] sm:$0xff] %v3577
        %3594 = vst [vmem:[%s370 + $0x28] sm:$0xff] %v3578
        %3595 = vst [vmem:[%s370 + $0x30] sm:$0xff] %v3579
        %3596 = vst [vmem:[%s370 + $0x38] sm:$0xff] %v3580
        %3597 = vst [vmem:[%s370 + $0x40] sm:$0xff] %v3581
        %3598 = vst [vmem:[%s370 + $0x48] sm:$0xff] %v3582
        %3599 = vst [vmem:[%s370 + $0x50] sm:$0xff] %v3583
        %3600 = vst [vmem:[%s370 + $0x58] sm:$0xff] %v3584
        %3601 = vst [vmem:[%s370 + $0x60] sm:$0xff] %v3585
        %3602 = vst [vmem:[%s370 + $0x68] sm:$0xff] %v3586
        %3603 = vst [vmem:[%s370 + $0x70] sm:$0xff] %v3587
        %3604 = vst [vmem:[%s370 + $0x78] sm:$0xff] %v3588
        %s3605 = sand.u32 %s187, 1
        %s3606 = scalar_lea.sflag [#allocation4], %s3605
        %s3607 = sand.u32 %s187, 1
        %s3608 = smul.addr %s3607, 128
        %s3609 = scalar_lea.vmem [#allocation13], %s3608
        // Predicated region
        $region73: #{tpu_custom_call.1} parent=47 // pred_check
          %p3610 = pneg %p197
        $region74: #{tpu_custom_call.1} parent=47 // pred_check_branch
          %3612 = sbr.rel (%p3610) target = $region76
        $region75: #{tpu_custom_call.1} parent=47 // pred_region
          %s3613 = smul.u32 4, %s27
          %s3615 = ssub.s32 2048, 2048
          %3616 = vsyncadd %s3606, %s3615
          %s3617 = smul.addr %s3613, 4
          %s3618 = smul.addr %s3617, 128
          %s3619 = scalar_lea.hbm %s7, %s3618
          %s3620 = sshll.u32 %s3609, 4
          %s3621 = int_to_ptr.vmem [resolvable:$true] %s3620
          %3626 = dma.vmem_to_hbm [thread:$0]  %s3621, 2048, %s3619, %s3606, 128, 128, 8
        $region76: #{tpu_custom_call.1} parent=47 // pred_fallthru
          _
      $region48: #{tpu_custom_call.1} parent=5 // pred_fallthru
        _
      %p3627 = scmp.le.s32.totalorder 2, %s22
      // Predicated region
      $region77: #{tpu_custom_call.1} parent=5 // pred_check
        %p3628 = pneg %p3627
      $region78: #{tpu_custom_call.1} parent=5 // pred_check_branch
        %3630 = sbr.rel (%p3628) target = $region80
      $region79: #{tpu_custom_call.1} parent=5 // pred_region
        %s3631 = ssub.s32 %s22, 2
        // Predicated region
        $region81: #{tpu_custom_call.1} parent=79 // pred_check
          %p3632 = pneg %p203
        $region82: #{tpu_custom_call.1} parent=79 // pred_check_branch
          %3634 = sbr.rel (%p3632) target = $region84
        $region83: #{tpu_custom_call.1} parent=79 // pred_region
          %s3635 = sand.u32 %s188, 1
          %s3636 = scalar_lea.sflag [#allocation4], %s3635
          %s3637 = sand.u32 %s188, 1
          %s3638 = smul.addr %s3637, 128
          %s3639 = scalar_lea.vmem [#allocation13], %s3638
          %3640 = dma.done %s3636, 2048
        $region84: #{tpu_custom_call.1} parent=79 // pred_fallthru
          _
      $region80: #{tpu_custom_call.1} parent=5 // pred_fallthru
        _
    $region6: #{tpu_custom_call.1} parent=1 // loop_footer
      %s26 = sadd.s32 1, %s22
    $region7: #{tpu_custom_call.1} parent=1 // loop_footer_branch
      %21 = sbr.rel target = $region3
    $region8: #{tpu_custom_call.1} parent=1 // loop_exit
      _
    %3641 = vsyncpa [#allocation3], 1
    %s3642 = scalar_lea.sflag [#allocation3], 1
    %3643 = vsyncpa %s3642, 1
    %3644 = vsyncpa [#allocation6], 1
    %3645 = vsyncpa [#allocation9], 1
    %3646 = vsyncpa [#allocation12], 1
    %3647 = vsyncpa [#allocation4], 1
    %s3648 = scalar_lea.sflag [#allocation4], 1
    %3649 = vsyncpa %s3648, 1

</llo_original>
